<compile_context>
chip_gen: v5e
topology: v5e:2x2
jax: 0.10.0
libtpu: 0.0.40
codegen_flags: <defaults>
</compile_context>

<pallas_src>
import jax
import jax.numpy as jnp
from jax.experimental import pallas as pl
from jax.experimental.pallas import tpu as pltpu

LANE = 128


def _round_up(v, m):
    return (v + m - 1) // m * m


# ------------------------------ kernel helpers ------------------------------ #

def _conv3x3_acc(get_patch, w_ref, m, k):
    """3x3 conv as 9 MXU matmuls with K = k (one per (dy,dx) tap).

    get_patch(dy, dx) -> (Hh, Ww, k) bf16 slice of the zero-padded source.
    w_ref[3*dy+dx]    -> (k, cout_p) bf16 (BN scale pre-folded).
    Returns (m, cout_p) f32, m = Hh*Ww.  Accumulator is seeded by the first dot
    (no zero-fill / extra VALU add); no K-concat temporaries.
    """
    acc = None
    for dy in range(3):
        for dx in range(3):
            patch = get_patch(dy, dx).reshape(m, k)
            d = jnp.dot(patch, w_ref[3 * dy + dx],
                        preferred_element_type=jnp.float32)
            acc = d if acc is None else acc + d
    return acc


def _store_h1(h1_ref, h1_hwc, H, W):
    """Write conv1 output into the haloed bf16 VMEM scratch.

    Only the interior is stored; the 1-px zero halo is refreshed as four thin
    strips (O(H+W) elements) instead of rebuilding the full ring.  Re-zeroed
    every grid step so results stay correct even if the parallel batch axis is
    sharded across TensorCores (scratch is per-core).
    """
    c = h1_ref.shape[-1]
    zrow = jnp.zeros((1, W + 2, c), h1_ref.dtype)
    zcol = jnp.zeros((H, 1, c), h1_ref.dtype)
    h1_ref[0:1, :, :] = zrow
    h1_ref[H + 1:H + 2, :, :] = zrow
    h1_ref[1:H + 1, 0:1, :] = zcol
    h1_ref[1:H + 1, W + 1:W + 2, :] = zcol
    h1_ref[1:H + 1, 1:W + 1, :] = h1_hwc.astype(h1_ref.dtype)


# -------------------------------- kernels ----------------------------------- #

def _basic_block_s1_kernel(x_ref, w1_ref, b1_ref, w2_ref, b2_ref, o_ref, h1_ref):
    """stride=1 block: x_ref (1, H+2, W+2, Cp) bf16, identity shortcut."""
    _, H, W, cout_p = o_ref.shape
    cin_p = x_ref.shape[-1]
    m = H * W

    # conv1 (3x3, stride 1, pad 1); BN scale folded into w1 -> bias + ReLU only.
    acc1 = _conv3x3_acc(lambda dy, dx: x_ref[0, dy:dy + H, dx:dx + W, :],
                        w1_ref, m, cin_p)
    h1 = jnp.maximum(acc1 + b1_ref[...], 0.0)
    _store_h1(h1_ref, h1.reshape(H, W, cout_p), H, W)

    # conv2 (3x3, stride 1, pad 1) + bias + identity + ReLU.
    acc2 = _conv3x3_acc(lambda dy, dx: h1_ref[dy:dy + H, dx:dx + W, :],
                        w2_ref, m, cout_p)
    identity = x_ref[0, 1:H + 1, 1:W + 1, :].reshape(m, cin_p).astype(jnp.float32)
    out = jnp.maximum(acc2 + b2_ref[...] + identity, 0.0)
    o_ref[0] = out.reshape(H, W, cout_p).astype(o_ref.dtype)


def _basic_block_s2_kernel(xph_ref, w1_ref, b1_ref, w2_ref, b2_ref,
                           wd_ref, bd_ref, o_ref, h1_ref):
    """stride=2 block with fused 1x1 downsample.

    xph_ref (1, 4, Ho+1, Wo+1, Cp) bf16: polyphase split of the padded input,
      xph[2p+q][a, b] == x_pad[2a+p, 2b+q].
    """
    _, Ho, Wo, cout_p = o_ref.shape
    cin_p = xph_ref.shape[-1]
    m = Ho * Wo

    # conv1 (3x3, stride 2, pad 1) via polyphase reads:
    #   x_pad[2i+dy, 2j+dx] == xph[2*(dy%2)+(dx%2)][i + dy//2, j + dx//2]
    def phase_patch(dy, dx):
        ph = 2 * (dy % 2) + (dx % 2)
        i0, j0 = dy // 2, dx // 2
        return xph_ref[0, ph, i0:i0 + Ho, j0:j0 + Wo, :]

    acc1 = _conv3x3_acc(phase_patch, w1_ref, m, cin_p)
    h1 = jnp.maximum(acc1 + b1_ref[...], 0.0)
    _store_h1(h1_ref, h1.reshape(Ho, Wo, cout_p), Ho, Wo)

    # downsample branch: 1x1 conv (stride 2) + folded BN_d; x[2i, 2j] == phase (1,1).
    xc = xph_ref[0, 3, 0:Ho, 0:Wo, :].reshape(m, cin_p)
    identity = jnp.dot(xc, wd_ref[...],
                       preferred_element_type=jnp.float32) + bd_ref[...]

    # conv2 (3x3, stride 1, pad 1) + bias + downsample identity + ReLU.
    acc2 = _conv3x3_acc(lambda dy, dx: h1_ref[dy:dy + Ho, dx:dx + Wo, :],
                        w2_ref, m, cout_p)
    out = jnp.maximum(acc2 + b2_ref[...] + identity, 0.0)
    o_ref[0] = out.reshape(Ho, Wo, cout_p).astype(o_ref.dtype)


# -------------------------------- wrappers ----------------------------------- #

def _pack_conv3x3(w_hwio, scale, cin_p, cout_p):
    """HWIO (3,3,ci,co) -> (9, cin_p, cout_p) bf16 with BN scale folded into cout."""
    kh, kw, ci, co = w_hwio.shape
    w = w_hwio * scale[0]                                   # fold BN scale (inference)
    w = jnp.pad(w, ((0, 0), (0, 0), (0, cin_p - ci), (0, cout_p - co)))
    return w.reshape(kh * kw, cin_p, cout_p).astype(jnp.bfloat16)


def _pad_cout(v, cout_p):
    # NOTE: padded lanes MUST stay zero (zero weights + zero bias + relu(0)=0
    # keeps the padded output lanes exactly zero).
    return jnp.pad(v, ((0, 0), (0, cout_p - v.shape[-1])))


def basic_block_forward(x_nchw, params, stride):
    """Forward pass of BasicBlock.  Input/output are NCHW (PyTorch convention)."""
    assert stride in (1, 2), "TODO(synk): general stride not implemented"
    N, cin, H, W = x_nchw.shape
    cout = params["w1"].shape[-1]
    cin_p = _round_up(cin, LANE)
    cout_p = _round_up(cout, LANE)

    # Cast to bf16 FIRST (halves the bytes moved by the relayout passes), then
    # NCHW -> NHWC, 1-px spatial halo + channel pad to the 128-lane width.
    x = jnp.transpose(x_nchw.astype(jnp.bfloat16), (0, 2, 3, 1))
    x_pad = jnp.pad(x, ((0, 0), (1, 1), (1, 1), (0, cin_p - cin)))

    w1p = _pack_conv3x3(params["w1"], params["s1"], cin_p, cout_p)
    w2p = _pack_conv3x3(params["w2"], params["s2"], cout_p, cout_p)
    b1 = _pad_cout(params["b1"], cout_p)
    b2 = _pad_cout(params["b2"], cout_p)

    bias_spec = pl.BlockSpec((1, cout_p), lambda n: (0, 0))
    w1_spec = pl.BlockSpec((9, cin_p, cout_p), lambda n: (0, 0, 0))
    w2_spec = pl.BlockSpec((9, cout_p, cout_p), lambda n: (0, 0, 0))
    cparams = pltpu.CompilerParams(
        dimension_semantics=("parallel",),
        vmem_limit_bytes=48 * 1024 * 1024)

    if stride == 1:
        assert cin == cout, "identity shortcut requires in_channels == out_channels"
        out_p = pl.pallas_call(
            _basic_block_s1_kernel,
            out_shape=jax.ShapeDtypeStruct((N, H, W, cout_p), jnp.bfloat16),
            grid=(N,),
            in_specs=[
                pl.BlockSpec((1, H + 2, W + 2, cin_p), lambda n: (n, 0, 0, 0)),
                w1_spec, bias_spec,
                w2_spec, bias_spec,
            ],
            out_specs=pl.BlockSpec((1, H, W, cout_p), lambda n: (n, 0, 0, 0)),
            scratch_shapes=[pltpu.VMEM((H + 2, W + 2, cout_p), jnp.bfloat16)],
            compiler_params=cparams,
        )(x_pad, w1p, b1, w2p, b2)
    else:
        assert H % 2 == 0 and W % 2 == 0
        Ho, Wo = H // 2, W // 2
        # Polyphase (space-to-depth) split: strided conv + 1x1 downsample become
        # stride-1 reads inside the kernel: xph[:, 2p+q, a, b] == x_pad[:, 2a+p, 2b+q].
        xph = jnp.stack(
            [x_pad[:, p::2, q::2, :] for p in (0, 1) for q in (0, 1)],
            axis=1)                                  # (N, 4, Ho+1, Wo+1, cin_p) bf16
        wd = jnp.pad(params["wd"] * params["sd"][0],
                     ((0, cin_p - cin), (0, cout_p - cout))).astype(jnp.bfloat16)
        bd = _pad_cout(params["bd"], cout_p)
        out_p = pl.pallas_call(
            _basic_block_s2_kernel,
            out_shape=jax.ShapeDtypeStruct((N, Ho, Wo, cout_p), jnp.bfloat16),
            grid=(N,),
            in_specs=[
                pl.BlockSpec((1, 4, Ho + 1, Wo + 1, cin_p),
                             lambda n: (n, 0, 0, 0, 0)),
                w1_spec, bias_spec,
                w2_spec, bias_spec,
                pl.BlockSpec((cin_p, cout_p), lambda n: (0, 0)), bias_spec,
            ],
            out_specs=pl.BlockSpec((1, Ho, Wo, cout_p), lambda n: (n, 0, 0, 0)),
            scratch_shapes=[pltpu.VMEM((Ho + 2, Wo + 2, cout_p), jnp.bfloat16)],
            compiler_params=cparams,
        )(xph, w1p, b1, w2p, b2, wd, bd)

    # Drop lane padding and return NCHW.  Chained blocks should instead stay in
    # padded-NHWC bf16 so this relayout pass disappears.
    out = out_p[..., :cout]
    return jnp.transpose(out, (0, 3, 1, 2))   # NHWC -> NCHW (bf16)


# ----------------------- params & pure-JAX reference ----------------------- #

def _make_bn(key, c):
    kg, kb, km, kv = jax.random.split(key, 4)
    gamma = jax.random.uniform(kg, (c,), jnp.float32, 0.5, 1.5)
    beta = 0.1 * jax.random.normal(kb, (c,), jnp.float32)
    mean = 0.1 * jax.random.normal(km, (c,), jnp.float32)
    var = jax.random.uniform(kv, (c,), jnp.float32, 0.5, 1.5)
    scale = gamma * jax.lax.rsqrt(var + 1e-5)
    bias = beta - mean * scale
    return scale[None, :], bias[None, :]


def init_params(key, cin, cout, stride):
    keys = jax.random.split(key, 6)
    p = {}
    p["w1"] = 0.1 * jax.random.normal(keys[0], (3, 3, cin, cout), jnp.float32)   # HWIO
    p["s1"], p["b1"] = _make_bn(keys[1], cout)
    p["w2"] = 0.1 * jax.random.normal(keys[2], (3, 3, cout, cout), jnp.float32)  # HWIO
    p["s2"], p["b2"] = _make_bn(keys[3], cout)
    if stride != 1:
        p["wd"] = 0.1 * jax.random.normal(keys[4], (cin, cout), jnp.float32)     # IO (1x1)
        p["sd"], p["bd"] = _make_bn(keys[5], cout)
    return p


def ref_forward(x_nchw, params, stride):
    def conv(x, w_hwio, s):
        pad = w_hwio.shape[0] // 2
        return jax.lax.conv_general_dilated(
            x, w_hwio, window_strides=(s, s),
            padding=((pad, pad), (pad, pad)),
            dimension_numbers=("NCHW", "HWIO", "NCHW"))

    def bn(x, scale, bias):
        return x * scale[0][None, :, None, None] + bias[0][None, :, None, None]

    out = jax.nn.relu(bn(conv(x_nchw, params["w1"], stride), params["s1"], params["b1"]))
    out = bn(conv(out, params["w2"], 1), params["s2"], params["b2"])
    if stride != 1:
        wd = params["wd"][None, None]  # (1,1,Cin,Cout)
        identity = bn(conv(x_nchw, wd, stride), params["sd"], params["bd"])
    else:
        identity = x_nchw
    return jax.nn.relu(out + identity)


# --------------------------------- main ------------------------------------ #

if __name__ == "__main__":
    key = jax.random.PRNGKey(0)
    kx, kp2, kp1 = jax.random.split(key, 3)

    x = jax.random.normal(kx, (2, 4, 16, 16), jnp.float32)  # NCHW

    # bf16 operands/activations with f32 accumulation -> compare against the
    # f32 reference with a loosened tolerance.
    TOL = dict(atol=5e-2, rtol=5e-2)

    # Case 1: stride=2 with fused downsample branch (in=4 -> out=8).
    params_s2 = init_params(kp2, 4, 8, stride=2)
    out_s2 = jax.block_until_ready(basic_block_forward(x, params_s2, stride=2))
    ref_s2 = ref_forward(x, params_s2, stride=2)
    assert out_s2.shape == (2, 8, 8, 8), out_s2.shape
    assert jnp.allclose(out_s2.astype(jnp.float32), ref_s2, **TOL), "stride=2 mismatch"

    # Case 2: stride=1, identity shortcut (in=out=4).
    params_s1 = init_params(kp1, 4, 4, stride=1)
    out_s1 = jax.block_until_ready(basic_block_forward(x, params_s1, stride=1))
    ref_s1 = ref_forward(x, params_s1, stride=1)
    assert out_s1.shape == (2, 4, 16, 16), out_s1.shape
    assert jnp.allclose(out_s1.astype(jnp.float32), ref_s1, **TOL), "stride=1 mismatch"

    print("KERNEL_OK")
</pallas_src>

<mosaic_0001>
module attributes {stable_mosaic.version = 11 : i64} {
  func.func @_basic_block_s2_kernel(%arg0: i32, %arg1: memref<1x4x9x9x128xbf16, #tpu.memory_space<vmem>>, %arg2: memref<9x128x128xbf16, #tpu.memory_space<vmem>>, %arg3: memref<1x128xf32, #tpu.memory_space<vmem>>, %arg4: memref<9x128x128xbf16, #tpu.memory_space<vmem>>, %arg5: memref<1x128xf32, #tpu.memory_space<vmem>>, %arg6: memref<128x128xbf16, #tpu.memory_space<vmem>>, %arg7: memref<1x128xf32, #tpu.memory_space<vmem>>, %arg8: memref<1x8x8x128xbf16, #tpu.memory_space<vmem>>, %arg9: memref<10x10x128xbf16, #tpu.memory_space<vmem>>) attributes {dimension_semantics = [#tpu.dimension_semantics<parallel>], iteration_bounds = array<i64: 2>, scalar_prefetch = 0 : i64, scratch_operands = 1 : i64, tpu.core_type = #tpu.core_type<tc>, window_params = [{transform_indices = @transform_0, window_bounds = array<i64: 1, 4, 9, 9, 128>}, {pipeline_mode = #tpu.pipeline_mode<synchronous>, transform_indices = @transform_1, window_bounds = array<i64: 9, 128, 128>}, {pipeline_mode = #tpu.pipeline_mode<synchronous>, transform_indices = @transform_2, window_bounds = array<i64: 1, 128>}, {pipeline_mode = #tpu.pipeline_mode<synchronous>, transform_indices = @transform_3, window_bounds = array<i64: 9, 128, 128>}, {pipeline_mode = #tpu.pipeline_mode<synchronous>, transform_indices = @transform_4, window_bounds = array<i64: 1, 128>}, {pipeline_mode = #tpu.pipeline_mode<synchronous>, transform_indices = @transform_5, window_bounds = array<i64: 128, 128>}, {pipeline_mode = #tpu.pipeline_mode<synchronous>, transform_indices = @transform_6, window_bounds = array<i64: 1, 128>}, {transform_indices = @transform_7, window_bounds = array<i64: 1, 8, 8, 128>}]} {
    %c0 = arith.constant 0 : index
    %c0_0 = arith.constant 0 : index
    %c0_1 = arith.constant 0 : index
    %c0_2 = arith.constant 0 : index
    %c0_3 = arith.constant 0 : index
    %0 = vector.load %arg1[%c0, %c0_0, %c0_1, %c0_2, %c0_3] : memref<1x4x9x9x128xbf16, #tpu.memory_space<vmem>>, vector<1x1x8x8x128xbf16>
    %1 = vector.shape_cast %0 : vector<1x1x8x8x128xbf16> to vector<8x8x128xbf16>
    %2 = vector.shape_cast %1 : vector<8x8x128xbf16> to vector<64x128xbf16>
    %c0_4 = arith.constant 0 : index
    %c0_5 = arith.constant 0 : index
    %c0_6 = arith.constant 0 : index
    %3 = vector.load %arg2[%c0_4, %c0_5, %c0_6] : memref<9x128x128xbf16, #tpu.memory_space<vmem>>, vector<1x128x128xbf16>
    %4 = vector.shape_cast %3 : vector<1x128x128xbf16> to vector<128x128xbf16>
    %cst = arith.constant dense<0.000000e+00> : vector<64x128xf32>
    %5 = tpu.matmul %2, %4, %cst {dimension_numbers = #tpu.dot_dimension_numbers<[1], [0], [0], [1], [0, 0, 1, 1], [], []>} : vector<64x128xbf16>, vector<128x128xbf16>, vector<64x128xf32> -> vector<64x128xf32>
    %c0_7 = arith.constant 0 : index
    %c1 = arith.constant 1 : index
    %c0_8 = arith.constant 0 : index
    %c0_9 = arith.constant 0 : index
    %c0_10 = arith.constant 0 : index
    %6 = vector.load %arg1[%c0_7, %c1, %c0_8, %c0_9, %c0_10] : memref<1x4x9x9x128xbf16, #tpu.memory_space<vmem>>, vector<1x1x8x8x128xbf16>
    %7 = vector.shape_cast %6 : vector<1x1x8x8x128xbf16> to vector<8x8x128xbf16>
    %8 = vector.shape_cast %7 : vector<8x8x128xbf16> to vector<64x128xbf16>
    %c1_11 = arith.constant 1 : index
    %c0_12 = arith.constant 0 : index
    %c0_13 = arith.constant 0 : index
    %9 = vector.load %arg2[%c1_11, %c0_12, %c0_13] : memref<9x128x128xbf16, #tpu.memory_space<vmem>>, vector<1x128x128xbf16>
    %10 = vector.shape_cast %9 : vector<1x128x128xbf16> to vector<128x128xbf16>
    %cst_14 = arith.constant dense<0.000000e+00> : vector<64x128xf32>
    %11 = tpu.matmul %8, %10, %cst_14 {dimension_numbers = #tpu.dot_dimension_numbers<[1], [0], [0], [1], [0, 0, 1, 1], [], []>} : vector<64x128xbf16>, vector<128x128xbf16>, vector<64x128xf32> -> vector<64x128xf32>
    %12 = arith.addf %5, %11 : vector<64x128xf32>
    %c0_15 = arith.constant 0 : index
    %c0_16 = arith.constant 0 : index
    %c0_17 = arith.constant 0 : index
    %c1_18 = arith.constant 1 : index
    %c0_19 = arith.constant 0 : index
    %13 = vector.load %arg1[%c0_15, %c0_16, %c0_17, %c1_18, %c0_19] : memref<1x4x9x9x128xbf16, #tpu.memory_space<vmem>>, vector<1x1x8x8x128xbf16>
    %14 = vector.shape_cast %13 : vector<1x1x8x8x128xbf16> to vector<8x8x128xbf16>
    %15 = vector.shape_cast %14 : vector<8x8x128xbf16> to vector<64x128xbf16>
    %c2 = arith.constant 2 : index
    %c0_20 = arith.constant 0 : index
    %c0_21 = arith.constant 0 : index
    %16 = vector.load %arg2[%c2, %c0_20, %c0_21] : memref<9x128x128xbf16, #tpu.memory_space<vmem>>, vector<1x128x128xbf16>
    %17 = vector.shape_cast %16 : vector<1x128x128xbf16> to vector<128x128xbf16>
    %cst_22 = arith.constant dense<0.000000e+00> : vector<64x128xf32>
    %18 = tpu.matmul %15, %17, %cst_22 {dimension_numbers = #tpu.dot_dimension_numbers<[1], [0], [0], [1], [0, 0, 1, 1], [], []>} : vector<64x128xbf16>, vector<128x128xbf16>, vector<64x128xf32> -> vector<64x128xf32>
    %19 = arith.addf %12, %18 : vector<64x128xf32>
    %c0_23 = arith.constant 0 : index
    %c2_24 = arith.constant 2 : index
    %c0_25 = arith.constant 0 : index
    %c0_26 = arith.constant 0 : index
    %c0_27 = arith.constant 0 : index
    %20 = vector.load %arg1[%c0_23, %c2_24, %c0_25, %c0_26, %c0_27] : memref<1x4x9x9x128xbf16, #tpu.memory_space<vmem>>, vector<1x1x8x8x128xbf16>
    %21 = vector.shape_cast %20 : vector<1x1x8x8x128xbf16> to vector<8x8x128xbf16>
    %22 = vector.shape_cast %21 : vector<8x8x128xbf16> to vector<64x128xbf16>
    %c3 = arith.constant 3 : index
    %c0_28 = arith.constant 0 : index
    %c0_29 = arith.constant 0 : index
    %23 = vector.load %arg2[%c3, %c0_28, %c0_29] : memref<9x128x128xbf16, #tpu.memory_space<vmem>>, vector<1x128x128xbf16>
    %24 = vector.shape_cast %23 : vector<1x128x128xbf16> to vector<128x128xbf16>
    %cst_30 = arith.constant dense<0.000000e+00> : vector<64x128xf32>
    %25 = tpu.matmul %22, %24, %cst_30 {dimension_numbers = #tpu.dot_dimension_numbers<[1], [0], [0], [1], [0, 0, 1, 1], [], []>} : vector<64x128xbf16>, vector<128x128xbf16>, vector<64x128xf32> -> vector<64x128xf32>
    %26 = arith.addf %19, %25 : vector<64x128xf32>
    %c0_31 = arith.constant 0 : index
    %c3_32 = arith.constant 3 : index
    %c0_33 = arith.constant 0 : index
    %c0_34 = arith.constant 0 : index
    %c0_35 = arith.constant 0 : index
    %27 = vector.load %arg1[%c0_31, %c3_32, %c0_33, %c0_34, %c0_35] : memref<1x4x9x9x128xbf16, #tpu.memory_space<vmem>>, vector<1x1x8x8x128xbf16>
    %28 = vector.shape_cast %27 : vector<1x1x8x8x128xbf16> to vector<8x8x128xbf16>
    %29 = vector.shape_cast %28 : vector<8x8x128xbf16> to vector<64x128xbf16>
    %c4 = arith.constant 4 : index
    %c0_36 = arith.constant 0 : index
    %c0_37 = arith.constant 0 : index
    %30 = vector.load %arg2[%c4, %c0_36, %c0_37] : memref<9x128x128xbf16, #tpu.memory_space<vmem>>, vector<1x128x128xbf16>
    %31 = vector.shape_cast %30 : vector<1x128x128xbf16> to vector<128x128xbf16>
    %cst_38 = arith.constant dense<0.000000e+00> : vector<64x128xf32>
    %32 = tpu.matmul %29, %31, %cst_38 {dimension_numbers = #tpu.dot_dimension_numbers<[1], [0], [0], [1], [0, 0, 1, 1], [], []>} : vector<64x128xbf16>, vector<128x128xbf16>, vector<64x128xf32> -> vector<64x128xf32>
    %33 = arith.addf %26, %32 : vector<64x128xf32>
    %c0_39 = arith.constant 0 : index
    %c2_40 = arith.constant 2 : index
    %c0_41 = arith.constant 0 : index
    %c1_42 = arith.constant 1 : index
    %c0_43 = arith.constant 0 : index
    %34 = vector.load %arg1[%c0_39, %c2_40, %c0_41, %c1_42, %c0_43] : memref<1x4x9x9x128xbf16, #tpu.memory_space<vmem>>, vector<1x1x8x8x128xbf16>
    %35 = vector.shape_cast %34 : vector<1x1x8x8x128xbf16> to vector<8x8x128xbf16>
    %36 = vector.shape_cast %35 : vector<8x8x128xbf16> to vector<64x128xbf16>
    %c5 = arith.constant 5 : index
    %c0_44 = arith.constant 0 : index
    %c0_45 = arith.constant 0 : index
    %37 = vector.load %arg2[%c5, %c0_44, %c0_45] : memref<9x128x128xbf16, #tpu.memory_space<vmem>>, vector<1x128x128xbf16>
    %38 = vector.shape_cast %37 : vector<1x128x128xbf16> to vector<128x128xbf16>
    %cst_46 = arith.constant dense<0.000000e+00> : vector<64x128xf32>
    %39 = tpu.matmul %36, %38, %cst_46 {dimension_numbers = #tpu.dot_dimension_numbers<[1], [0], [0], [1], [0, 0, 1, 1], [], []>} : vector<64x128xbf16>, vector<128x128xbf16>, vector<64x128xf32> -> vector<64x128xf32>
    %40 = arith.addf %33, %39 : vector<64x128xf32>
    %c0_47 = arith.constant 0 : index
    %c0_48 = arith.constant 0 : index
    %c1_49 = arith.constant 1 : index
    %c0_50 = arith.constant 0 : index
    %c0_51 = arith.constant 0 : index
    %41 = vector.load %arg1[%c0_47, %c0_48, %c1_49, %c0_50, %c0_51] : memref<1x4x9x9x128xbf16, #tpu.memory_space<vmem>>, vector<1x1x8x8x128xbf16>
    %42 = vector.shape_cast %41 : vector<1x1x8x8x128xbf16> to vector<8x8x128xbf16>
    %43 = vector.shape_cast %42 : vector<8x8x128xbf16> to vector<64x128xbf16>
    %c6 = arith.constant 6 : index
    %c0_52 = arith.constant 0 : index
    %c0_53 = arith.constant 0 : index
    %44 = vector.load %arg2[%c6, %c0_52, %c0_53] : memref<9x128x128xbf16, #tpu.memory_space<vmem>>, vector<1x128x128xbf16>
    %45 = vector.shape_cast %44 : vector<1x128x128xbf16> to vector<128x128xbf16>
    %cst_54 = arith.constant dense<0.000000e+00> : vector<64x128xf32>
    %46 = tpu.matmul %43, %45, %cst_54 {dimension_numbers = #tpu.dot_dimension_numbers<[1], [0], [0], [1], [0, 0, 1, 1], [], []>} : vector<64x128xbf16>, vector<128x128xbf16>, vector<64x128xf32> -> vector<64x128xf32>
    %47 = arith.addf %40, %46 : vector<64x128xf32>
    %c0_55 = arith.constant 0 : index
    %c1_56 = arith.constant 1 : index
    %c1_57 = arith.constant 1 : index
    %c0_58 = arith.constant 0 : index
    %c0_59 = arith.constant 0 : index
    %48 = vector.load %arg1[%c0_55, %c1_56, %c1_57, %c0_58, %c0_59] : memref<1x4x9x9x128xbf16, #tpu.memory_space<vmem>>, vector<1x1x8x8x128xbf16>
    %49 = vector.shape_cast %48 : vector<1x1x8x8x128xbf16> to vector<8x8x128xbf16>
    %50 = vector.shape_cast %49 : vector<8x8x128xbf16> to vector<64x128xbf16>
    %c7 = arith.constant 7 : index
    %c0_60 = arith.constant 0 : index
    %c0_61 = arith.constant 0 : index
    %51 = vector.load %arg2[%c7, %c0_60, %c0_61] : memref<9x128x128xbf16, #tpu.memory_space<vmem>>, vector<1x128x128xbf16>
    %52 = vector.shape_cast %51 : vector<1x128x128xbf16> to vector<128x128xbf16>
    %cst_62 = arith.constant dense<0.000000e+00> : vector<64x128xf32>
    %53 = tpu.matmul %50, %52, %cst_62 {dimension_numbers = #tpu.dot_dimension_numbers<[1], [0], [0], [1], [0, 0, 1, 1], [], []>} : vector<64x128xbf16>, vector<128x128xbf16>, vector<64x128xf32> -> vector<64x128xf32>
    %54 = arith.addf %47, %53 : vector<64x128xf32>
    %c0_63 = arith.constant 0 : index
    %c0_64 = arith.constant 0 : index
    %c1_65 = arith.constant 1 : index
    %c1_66 = arith.constant 1 : index
    %c0_67 = arith.constant 0 : index
    %55 = vector.load %arg1[%c0_63, %c0_64, %c1_65, %c1_66, %c0_67] : memref<1x4x9x9x128xbf16, #tpu.memory_space<vmem>>, vector<1x1x8x8x128xbf16>
    %56 = vector.shape_cast %55 : vector<1x1x8x8x128xbf16> to vector<8x8x128xbf16>
    %57 = vector.shape_cast %56 : vector<8x8x128xbf16> to vector<64x128xbf16>
    %c8 = arith.constant 8 : index
    %c0_68 = arith.constant 0 : index
    %c0_69 = arith.constant 0 : index
    %58 = vector.load %arg2[%c8, %c0_68, %c0_69] : memref<9x128x128xbf16, #tpu.memory_space<vmem>>, vector<1x128x128xbf16>
    %59 = vector.shape_cast %58 : vector<1x128x128xbf16> to vector<128x128xbf16>
    %cst_70 = arith.constant dense<0.000000e+00> : vector<64x128xf32>
    %60 = tpu.matmul %57, %59, %cst_70 {dimension_numbers = #tpu.dot_dimension_numbers<[1], [0], [0], [1], [0, 0, 1, 1], [], []>} : vector<64x128xbf16>, vector<128x128xbf16>, vector<64x128xf32> -> vector<64x128xf32>
    %61 = arith.addf %54, %60 : vector<64x128xf32>
    %c0_71 = arith.constant 0 : index
    %c0_72 = arith.constant 0 : index
    %62 = vector.load %arg3[%c0_71, %c0_72] : memref<1x128xf32, #tpu.memory_space<vmem>>, vector<1x128xf32>
    %63 = vector.broadcast %62 : vector<1x128xf32> to vector<64x128xf32>
    %64 = arith.addf %61, %63 : vector<64x128xf32>
    %cst_73 = arith.constant 0.000000e+00 : f32
    %65 = vector.broadcast %cst_73 : f32 to vector<64x128xf32>
    %66 = arith.maximumf %64, %65 : vector<64x128xf32>
    %67 = vector.shape_cast %66 : vector<64x128xf32> to vector<8x8x128xf32>
    %cst_74 = arith.constant 0.000000e+00 : bf16
    %68 = vector.broadcast %cst_74 : bf16 to vector<1x10x128xbf16>
    %cst_75 = arith.constant 0.000000e+00 : bf16
    %69 = vector.broadcast %cst_75 : bf16 to vector<8x1x128xbf16>
    %c0_76 = arith.constant 0 : index
    %c0_77 = arith.constant 0 : index
    %c0_78 = arith.constant 0 : index
    %70 = vector.load %arg9[%c0_76, %c0_77, %c0_78] : memref<10x10x128xbf16, #tpu.memory_space<vmem>>, vector<1x10x128xbf16>
    tpu.vector_store %arg9[%c0_76, %c0_77, %c0_78], %68 {strides = array<i32>} : memref<10x10x128xbf16, #tpu.memory_space<vmem>>, vector<1x10x128xbf16>,
    %c9 = arith.constant 9 : index
    %c0_79 = arith.constant 0 : index
    %c0_80 = arith.constant 0 : index
    %71 = vector.load %arg9[%c9, %c0_79, %c0_80] : memref<10x10x128xbf16, #tpu.memory_space<vmem>>, vector<1x10x128xbf16>
    tpu.vector_store %arg9[%c9, %c0_79, %c0_80], %68 {strides = array<i32>} : memref<10x10x128xbf16, #tpu.memory_space<vmem>>, vector<1x10x128xbf16>,
    %c1_81 = arith.constant 1 : index
    %c0_82 = arith.constant 0 : index
    %c0_83 = arith.constant 0 : index
    %72 = vector.load %arg9[%c1_81, %c0_82, %c0_83] : memref<10x10x128xbf16, #tpu.memory_space<vmem>>, vector<8x1x128xbf16>
    tpu.vector_store %arg9[%c1_81, %c0_82, %c0_83], %69 {strides = array<i32>} : memref<10x10x128xbf16, #tpu.memory_space<vmem>>, vector<8x1x128xbf16>,
    %c1_84 = arith.constant 1 : index
    %c9_85 = arith.constant 9 : index
    %c0_86 = arith.constant 0 : index
    %73 = vector.load %arg9[%c1_84, %c9_85, %c0_86] : memref<10x10x128xbf16, #tpu.memory_space<vmem>>, vector<8x1x128xbf16>
    tpu.vector_store %arg9[%c1_84, %c9_85, %c0_86], %69 {strides = array<i32>} : memref<10x10x128xbf16, #tpu.memory_space<vmem>>, vector<8x1x128xbf16>,
    %74 = arith.truncf %67 : vector<8x8x128xf32> to vector<8x8x128xbf16>
    %c1_87 = arith.constant 1 : index
    %c1_88 = arith.constant 1 : index
    %c0_89 = arith.constant 0 : index
    %75 = vector.load %arg9[%c1_87, %c1_88, %c0_89] : memref<10x10x128xbf16, #tpu.memory_space<vmem>>, vector<8x8x128xbf16>
    tpu.vector_store %arg9[%c1_87, %c1_88, %c0_89], %74 {strides = array<i32>} : memref<10x10x128xbf16, #tpu.memory_space<vmem>>, vector<8x8x128xbf16>,
    %c0_90 = arith.constant 0 : index
    %c3_91 = arith.constant 3 : index
    %c0_92 = arith.constant 0 : index
    %c0_93 = arith.constant 0 : index
    %c0_94 = arith.constant 0 : index
    %76 = vector.load %arg1[%c0_90, %c3_91, %c0_92, %c0_93, %c0_94] : memref<1x4x9x9x128xbf16, #tpu.memory_space<vmem>>, vector<1x1x8x8x128xbf16>
    %77 = vector.shape_cast %76 : vector<1x1x8x8x128xbf16> to vector<8x8x128xbf16>
    %78 = vector.shape_cast %77 : vector<8x8x128xbf16> to vector<64x128xbf16>
    %c0_95 = arith.constant 0 : index
    %c0_96 = arith.constant 0 : index
    %79 = vector.load %arg6[%c0_95, %c0_96] : memref<128x128xbf16, #tpu.memory_space<vmem>>, vector<128x128xbf16>
    %cst_97 = arith.constant dense<0.000000e+00> : vector<64x128xf32>
    %80 = tpu.matmul %78, %79, %cst_97 {dimension_numbers = #tpu.dot_dimension_numbers<[1], [0], [0], [1], [0, 0, 1, 1], [], []>} : vector<64x128xbf16>, vector<128x128xbf16>, vector<64x128xf32> -> vector<64x128xf32>
    %c0_98 = arith.constant 0 : index
    %c0_99 = arith.constant 0 : index
    %81 = vector.load %arg7[%c0_98, %c0_99] : memref<1x128xf32, #tpu.memory_space<vmem>>, vector<1x128xf32>
    %82 = vector.broadcast %81 : vector<1x128xf32> to vector<64x128xf32>
    %83 = arith.addf %80, %82 : vector<64x128xf32>
    %c0_100 = arith.constant 0 : index
    %c0_101 = arith.constant 0 : index
    %c0_102 = arith.constant 0 : index
    %84 = vector.load %arg9[%c0_100, %c0_101, %c0_102] : memref<10x10x128xbf16, #tpu.memory_space<vmem>>, vector<8x8x128xbf16>
    %85 = vector.shape_cast %84 : vector<8x8x128xbf16> to vector<64x128xbf16>
    %c0_103 = arith.constant 0 : index
    %c0_104 = arith.constant 0 : index
    %c0_105 = arith.constant 0 : index
    %86 = vector.load %arg4[%c0_103, %c0_104, %c0_105] : memref<9x128x128xbf16, #tpu.memory_space<vmem>>, vector<1x128x128xbf16>
    %87 = vector.shape_cast %86 : vector<1x128x128xbf16> to vector<128x128xbf16>
    %cst_106 = arith.constant dense<0.000000e+00> : vector<64x128xf32>
    %88 = tpu.matmul %85, %87, %cst_106 {dimension_numbers = #tpu.dot_dimension_numbers<[1], [0], [0], [1], [0, 0, 1, 1], [], []>} : vector<64x128xbf16>, vector<128x128xbf16>, vector<64x128xf32> -> vector<64x128xf32>
    %c0_107 = arith.constant 0 : index
    %c1_108 = arith.constant 1 : index
    %c0_109 = arith.constant 0 : index
    %89 = vector.load %arg9[%c0_107, %c1_108, %c0_109] : memref<10x10x128xbf16, #tpu.memory_space<vmem>>, vector<8x8x128xbf16>
    %90 = vector.shape_cast %89 : vector<8x8x128xbf16> to vector<64x128xbf16>
    %c1_110 = arith.constant 1 : index
    %c0_111 = arith.constant 0 : index
    %c0_112 = arith.constant 0 : index
    %91 = vector.load %arg4[%c1_110, %c0_111, %c0_112] : memref<9x128x128xbf16, #tpu.memory_space<vmem>>, vector<1x128x128xbf16>
    %92 = vector.shape_cast %91 : vector<1x128x128xbf16> to vector<128x128xbf16>
    %cst_113 = arith.constant dense<0.000000e+00> : vector<64x128xf32>
    %93 = tpu.matmul %90, %92, %cst_113 {dimension_numbers = #tpu.dot_dimension_numbers<[1], [0], [0], [1], [0, 0, 1, 1], [], []>} : vector<64x128xbf16>, vector<128x128xbf16>, vector<64x128xf32> -> vector<64x128xf32>
    %94 = arith.addf %88, %93 : vector<64x128xf32>
    %c0_114 = arith.constant 0 : index
    %c2_115 = arith.constant 2 : index
    %c0_116 = arith.constant 0 : index
    %95 = vector.load %arg9[%c0_114, %c2_115, %c0_116] : memref<10x10x128xbf16, #tpu.memory_space<vmem>>, vector<8x8x128xbf16>
    %96 = vector.shape_cast %95 : vector<8x8x128xbf16> to vector<64x128xbf16>
    %c2_117 = arith.constant 2 : index
    %c0_118 = arith.constant 0 : index
    %c0_119 = arith.constant 0 : index
    %97 = vector.load %arg4[%c2_117, %c0_118, %c0_119] : memref<9x128x128xbf16, #tpu.memory_space<vmem>>, vector<1x128x128xbf16>
    %98 = vector.shape_cast %97 : vector<1x128x128xbf16> to vector<128x128xbf16>
    %cst_120 = arith.constant dense<0.000000e+00> : vector<64x128xf32>
    %99 = tpu.matmul %96, %98, %cst_120 {dimension_numbers = #tpu.dot_dimension_numbers<[1], [0], [0], [1], [0, 0, 1, 1], [], []>} : vector<64x128xbf16>, vector<128x128xbf16>, vector<64x128xf32> -> vector<64x128xf32>
    %100 = arith.addf %94, %99 : vector<64x128xf32>
    %c1_121 = arith.constant 1 : index
    %c0_122 = arith.constant 0 : index
    %c0_123 = arith.constant 0 : index
    %101 = vector.load %arg9[%c1_121, %c0_122, %c0_123] : memref<10x10x128xbf16, #tpu.memory_space<vmem>>, vector<8x8x128xbf16>
    %102 = vector.shape_cast %101 : vector<8x8x128xbf16> to vector<64x128xbf16>
    %c3_124 = arith.constant 3 : index
    %c0_125 = arith.constant 0 : index
    %c0_126 = arith.constant 0 : index
    %103 = vector.load %arg4[%c3_124, %c0_125, %c0_126] : memref<9x128x128xbf16, #tpu.memory_space<vmem>>, vector<1x128x128xbf16>
    %104 = vector.shape_cast %103 : vector<1x128x128xbf16> to vector<128x128xbf16>
    %cst_127 = arith.constant dense<0.000000e+00> : vector<64x128xf32>
    %105 = tpu.matmul %102, %104, %cst_127 {dimension_numbers = #tpu.dot_dimension_numbers<[1], [0], [0], [1], [0, 0, 1, 1], [], []>} : vector<64x128xbf16>, vector<128x128xbf16>, vector<64x128xf32> -> vector<64x128xf32>
    %106 = arith.addf %100, %105 : vector<64x128xf32>
    %c1_128 = arith.constant 1 : index
    %c1_129 = arith.constant 1 : index
    %c0_130 = arith.constant 0 : index
    %107 = vector.load %arg9[%c1_128, %c1_129, %c0_130] : memref<10x10x128xbf16, #tpu.memory_space<vmem>>, vector<8x8x128xbf16>
    %108 = vector.shape_cast %107 : vector<8x8x128xbf16> to vector<64x128xbf16>
    %c4_131 = arith.constant 4 : index
    %c0_132 = arith.constant 0 : index
    %c0_133 = arith.constant 0 : index
    %109 = vector.load %arg4[%c4_131, %c0_132, %c0_133] : memref<9x128x128xbf16, #tpu.memory_space<vmem>>, vector<1x128x128xbf16>
    %110 = vector.shape_cast %109 : vector<1x128x128xbf16> to vector<128x128xbf16>
    %cst_134 = arith.constant dense<0.000000e+00> : vector<64x128xf32>
    %111 = tpu.matmul %108, %110, %cst_134 {dimension_numbers = #tpu.dot_dimension_numbers<[1], [0], [0], [1], [0, 0, 1, 1], [], []>} : vector<64x128xbf16>, vector<128x128xbf16>, vector<64x128xf32> -> vector<64x128xf32>
    %112 = arith.addf %106, %111 : vector<64x128xf32>
    %c1_135 = arith.constant 1 : index
    %c2_136 = arith.constant 2 : index
    %c0_137 = arith.constant 0 : index
    %113 = vector.load %arg9[%c1_135, %c2_136, %c0_137] : memref<10x10x128xbf16, #tpu.memory_space<vmem>>, vector<8x8x128xbf16>
    %114 = vector.shape_cast %113 : vector<8x8x128xbf16> to vector<64x128xbf16>
    %c5_138 = arith.constant 5 : index
    %c0_139 = arith.constant 0 : index
    %c0_140 = arith.constant 0 : index
    %115 = vector.load %arg4[%c5_138, %c0_139, %c0_140] : memref<9x128x128xbf16, #tpu.memory_space<vmem>>, vector<1x128x128xbf16>
    %116 = vector.shape_cast %115 : vector<1x128x128xbf16> to vector<128x128xbf16>
    %cst_141 = arith.constant dense<0.000000e+00> : vector<64x128xf32>
    %117 = tpu.matmul %114, %116, %cst_141 {dimension_numbers = #tpu.dot_dimension_numbers<[1], [0], [0], [1], [0, 0, 1, 1], [], []>} : vector<64x128xbf16>, vector<128x128xbf16>, vector<64x128xf32> -> vector<64x128xf32>
    %118 = arith.addf %112, %117 : vector<64x128xf32>
    %c2_142 = arith.constant 2 : index
    %c0_143 = arith.constant 0 : index
    %c0_144 = arith.constant 0 : index
    %119 = vector.load %arg9[%c2_142, %c0_143, %c0_144] : memref<10x10x128xbf16, #tpu.memory_space<vmem>>, vector<8x8x128xbf16>
    %120 = vector.shape_cast %119 : vector<8x8x128xbf16> to vector<64x128xbf16>
    %c6_145 = arith.constant 6 : index
    %c0_146 = arith.constant 0 : index
    %c0_147 = arith.constant 0 : index
    %121 = vector.load %arg4[%c6_145, %c0_146, %c0_147] : memref<9x128x128xbf16, #tpu.memory_space<vmem>>, vector<1x128x128xbf16>
    %122 = vector.shape_cast %121 : vector<1x128x128xbf16> to vector<128x128xbf16>
    %cst_148 = arith.constant dense<0.000000e+00> : vector<64x128xf32>
    %123 = tpu.matmul %120, %122, %cst_148 {dimension_numbers = #tpu.dot_dimension_numbers<[1], [0], [0], [1], [0, 0, 1, 1], [], []>} : vector<64x128xbf16>, vector<128x128xbf16>, vector<64x128xf32> -> vector<64x128xf32>
    %124 = arith.addf %118, %123 : vector<64x128xf32>
    %c2_149 = arith.constant 2 : index
    %c1_150 = arith.constant 1 : index
    %c0_151 = arith.constant 0 : index
    %125 = vector.load %arg9[%c2_149, %c1_150, %c0_151] : memref<10x10x128xbf16, #tpu.memory_space<vmem>>, vector<8x8x128xbf16>
    %126 = vector.shape_cast %125 : vector<8x8x128xbf16> to vector<64x128xbf16>
    %c7_152 = arith.constant 7 : index
    %c0_153 = arith.constant 0 : index
    %c0_154 = arith.constant 0 : index
    %127 = vector.load %arg4[%c7_152, %c0_153, %c0_154] : memref<9x128x128xbf16, #tpu.memory_space<vmem>>, vector<1x128x128xbf16>
    %128 = vector.shape_cast %127 : vector<1x128x128xbf16> to vector<128x128xbf16>
    %cst_155 = arith.constant dense<0.000000e+00> : vector<64x128xf32>
    %129 = tpu.matmul %126, %128, %cst_155 {dimension_numbers = #tpu.dot_dimension_numbers<[1], [0], [0], [1], [0, 0, 1, 1], [], []>} : vector<64x128xbf16>, vector<128x128xbf16>, vector<64x128xf32> -> vector<64x128xf32>
    %130 = arith.addf %124, %129 : vector<64x128xf32>
    %c2_156 = arith.constant 2 : index
    %c2_157 = arith.constant 2 : index
    %c0_158 = arith.constant 0 : index
    %131 = vector.load %arg9[%c2_156, %c2_157, %c0_158] : memref<10x10x128xbf16, #tpu.memory_space<vmem>>, vector<8x8x128xbf16>
    %132 = vector.shape_cast %131 : vector<8x8x128xbf16> to vector<64x128xbf16>
    %c8_159 = arith.constant 8 : index
    %c0_160 = arith.constant 0 : index
    %c0_161 = arith.constant 0 : index
    %133 = vector.load %arg4[%c8_159, %c0_160, %c0_161] : memref<9x128x128xbf16, #tpu.memory_space<vmem>>, vector<1x128x128xbf16>
    %134 = vector.shape_cast %133 : vector<1x128x128xbf16> to vector<128x128xbf16>
    %cst_162 = arith.constant dense<0.000000e+00> : vector<64x128xf32>
    %135 = tpu.matmul %132, %134, %cst_162 {dimension_numbers = #tpu.dot_dimension_numbers<[1], [0], [0], [1], [0, 0, 1, 1], [], []>} : vector<64x128xbf16>, vector<128x128xbf16>, vector<64x128xf32> -> vector<64x128xf32>
    %136 = arith.addf %130, %135 : vector<64x128xf32>
    %c0_163 = arith.constant 0 : index
    %c0_164 = arith.constant 0 : index
    %137 = vector.load %arg5[%c0_163, %c0_164] : memref<1x128xf32, #tpu.memory_space<vmem>>, vector<1x128xf32>
    %138 = vector.broadcast %137 : vector<1x128xf32> to vector<64x128xf32>
    %139 = arith.addf %136, %138 : vector<64x128xf32>
    %140 = arith.addf %139, %83 : vector<64x128xf32>
    %cst_165 = arith.constant 0.000000e+00 : f32
    %141 = vector.broadcast %cst_165 : f32 to vector<64x128xf32>
    %142 = arith.maximumf %140, %141 : vector<64x128xf32>
    %143 = vector.shape_cast %142 : vector<64x128xf32> to vector<8x8x128xf32>
    %144 = arith.truncf %143 : vector<8x8x128xf32> to vector<8x8x128xbf16>
    %c0_166 = arith.constant 0 : index
    %c0_167 = arith.constant 0 : index
    %c0_168 = arith.constant 0 : index
    %c0_169 = arith.constant 0 : index
    %145 = vector.load %arg8[%c0_166, %c0_167, %c0_168, %c0_169] : memref<1x8x8x128xbf16, #tpu.memory_space<vmem>>, vector<1x8x8x128xbf16>
    %146 = vector.shape_cast %145 : vector<1x8x8x128xbf16> to vector<8x8x128xbf16>
    %147 = vector.shape_cast %144 : vector<8x8x128xbf16> to vector<1x8x8x128xbf16>
    tpu.vector_store %arg8[%c0_166, %c0_167, %c0_168, %c0_169], %147 {strides = array<i32>} : memref<1x8x8x128xbf16, #tpu.memory_space<vmem>>, vector<1x8x8x128xbf16>,
    return
  }
  func.func @transform_0(%arg0: i32) -> (i32, i32, i32, i32, i32) {
    %c0_i32 = arith.constant 0 : i32
    %c0_i32_0 = arith.constant 0 : i32
    %c0_i32_1 = arith.constant 0 : i32
    %c0_i32_2 = arith.constant 0 : i32
    %c0_i32_3 = arith.constant 0 : i32
    return %arg0, %c0_i32, %c0_i32_0, %c0_i32_1, %c0_i32_2 : i32, i32, i32, i32, i32
  }
  func.func @transform_1(%arg0: i32) -> (i32, i32, i32) {
    %c0_i32 = arith.constant 0 : i32
    %c0_i32_0 = arith.constant 0 : i32
    %c0_i32_1 = arith.constant 0 : i32
    %c0_i32_2 = arith.constant 0 : i32
    return %c0_i32, %c0_i32_0, %c0_i32_1 : i32, i32, i32
  }
  func.func @transform_2(%arg0: i32) -> (i32, i32) {
    %c0_i32 = arith.constant 0 : i32
    %c0_i32_0 = arith.constant 0 : i32
    %c0_i32_1 = arith.constant 0 : i32
    return %c0_i32, %c0_i32_0 : i32, i32
  }
  func.func @transform_3(%arg0: i32) -> (i32, i32, i32) {
    %c0_i32 = arith.constant 0 : i32
    %c0_i32_0 = arith.constant 0 : i32
    %c0_i32_1 = arith.constant 0 : i32
    %c0_i32_2 = arith.constant 0 : i32
    return %c0_i32, %c0_i32_0, %c0_i32_1 : i32, i32, i32
  }
  func.func @transform_4(%arg0: i32) -> (i32, i32) {
    %c0_i32 = arith.constant 0 : i32
    %c0_i32_0 = arith.constant 0 : i32
    %c0_i32_1 = arith.constant 0 : i32
    return %c0_i32, %c0_i32_0 : i32, i32
  }
  func.func @transform_5(%arg0: i32) -> (i32, i32) {
    %c0_i32 = arith.constant 0 : i32
    %c0_i32_0 = arith.constant 0 : i32
    %c0_i32_1 = arith.constant 0 : i32
    return %c0_i32, %c0_i32_0 : i32, i32
  }
  func.func @transform_6(%arg0: i32) -> (i32, i32) {
    %c0_i32 = arith.constant 0 : i32
    %c0_i32_0 = arith.constant 0 : i32
    %c0_i32_1 = arith.constant 0 : i32
    return %c0_i32, %c0_i32_0 : i32, i32
  }
  func.func @transform_7(%arg0: i32) -> (i32, i32, i32, i32) {
    %c0_i32 = arith.constant 0 : i32
    %c0_i32_0 = arith.constant 0 : i32
    %c0_i32_1 = arith.constant 0 : i32
    %c0_i32_2 = arith.constant 0 : i32
    return %arg0, %c0_i32, %c0_i32_0, %c0_i32_1 : i32, i32, i32, i32
  }
}

</mosaic_0001>

<llo_original>
// kernel: tpu_custom_call.1
$region0: #{tpu_custom_call.1}
  #allocation0 [shape = 'u32[]', space=smem, size = 0x4, offset = 0x4, fixed_abs, tag = 'smem constant byte address 0x4 - core index']
  #allocation1 [shape = 'u32[72,128]{1,0:T(1,128)}', space=vmem, size = 0x9000, scoped, tag = 'internal scratch']
  #allocation2 [shape = 'bf16[10,10,128]{2,1,0:T(8,128)(2,1)}', space=vmem, size = 0xa000, scoped, tag = 'scratch operand']
  %s0 = inlined_call_operand.vmem [shape: bf16[2,4,9,9,128], index: 0, kind: input, shape index: {}]
  %s1 = inlined_call_operand.vmem [shape: bf16[9,128,128], index: 1, kind: input, shape index: {}]
  %s2 = inlined_call_operand.vmem [shape: f32[1,128], index: 2, kind: input, shape index: {}]
  %s3 = inlined_call_operand.hbm [shape: bf16[9,128,128], index: 3, kind: input, shape index: {}]
  %s4 = inlined_call_operand.vmem [shape: f32[1,128], index: 4, kind: input, shape index: {}]
  %s5 = inlined_call_operand.vmem [shape: bf16[128,128], index: 5, kind: input, shape index: {}]
  %s6 = inlined_call_operand.vmem [shape: f32[1,128], index: 6, kind: input, shape index: {}]
  %s7 = inlined_call_operand.hbm [shape: bf16[2,8,8,128], index: 7, kind: output, shape index: {}]
  %s8 = sld [smem:[#allocation0]]
  $region65: #{tpu_custom_call.1} parent=0
    _
  %s10 = ssub.s32 1, %s8
  %s11 = scalar_select 0, %s10, %s8
  $region1: #{tpu_custom_call.1} parent=0
    #allocation3 [shape = 'u8[294912]{0}', space=vmem, size = 0x48000, scoped, tag = 'input window, operand 3, single buffered']
    #allocation4 [shape = 's32[2]{0}', space=sflag, size = 0x8, scoped, tag = 'scoped memory for tpu_custom_call.1']
    #allocation5 [shape = 's32[2]{0}', space=sflag, size = 0x8, scoped, tag = 'scoped memory for tpu_custom_call.1']
    #allocation6 [shape = 'u8[32768]{0}', space=vmem, size = 0x8000, scoped, tag = 'output window, operand 0']
    %12 = vsyncpa [#allocation4], 0
    %13 = vsyncpa [#allocation5], 0
    %s14 = scalar_lea.sflag [#allocation5], 1
    %15 = vsyncpa %s14, 0
    loop: start=0, step=1, limit=4
    $region2: #{tpu_custom_call.1} parent=1 // loop_pre_header
      _
    $region3: #{tpu_custom_call.1} parent=1 // loop_header
      %s17 = sphi 0, %s21
      %p18 = scmp.ge.s32.totalorder %s17, 4
      %s27 = sphi 0, %s29
      %s30 = sphi 0, %s27
      %s31 = sphi 0, %s30
      %s47 = sphi 0, %s31
      %s51 = sphi 0, %s51
      %s53 = sphi 0, %s51
      %s54 = sphi 0, %s53
      %s68 = sphi 0, %s54
      %s72 = sphi 0, %s72
      %s74 = sphi 0, %s72
      %s75 = sphi 0, %s74
      %s89 = sphi 0, %s75
      %s93 = sphi 0, %s93
      %s95 = sphi 0, %s93
      %s96 = sphi 0, %s95
      %s110 = sphi 0, %s96
      %s114 = sphi 0, %s114
      %s116 = sphi 0, %s114
      %s117 = sphi 0, %s116
      %s131 = sphi 0, %s117
      %s135 = sphi 0, %s135
      %s137 = sphi 0, %s135
      %s138 = sphi 0, %s137
      %s152 = sphi 0, %s138
      %s156 = sphi 0, %s156
      %s158 = sphi 0, %s156
      %s159 = sphi 0, %s158
      %s173 = sphi 0, %s159
      %s179 = sphi 0, %s181
      %s182 = sphi 0, %s179
      %s183 = sphi 0, %s182
      %s199 = sphi 0, %s183
    $region4: #{tpu_custom_call.1} parent=1 // loop_header_branch
      %20 = sbr.rel (%p18) target = $region8
    $region5: #{tpu_custom_call.1} parent=1 // loop_body
      %s22 = ssub.s32 %s17, 1
      %s23 = ssub.s32 %s17, 2
      %s24 = sadd.s32 %s17, 1
      %s25 = ssub.s32 %s17, %s24
      %p26 = scmp.eq.s32.totalorder %s25, 0
      %s28 = sadd.s32 %s27, 1
      %s29 = scalar_select %p26, %s27, %s28
      %p32 = pneg %p26
      %p33 = scmp.eq.s32.totalorder %s17, 1
      %p34 = por %p32, %p33
      %p35 = scmp.ne.s32.totalorder %s27, %s30
      %p36 = scmp.eq.s32.totalorder %s17, 0
      %p37 = por %p35, %p36
      %p38 = scmp.ne.s32.totalorder %s27, %s30
      %p39 = scmp.eq.s32.totalorder %s22, 1
      %p40 = por %p38, %p39
      %p41 = scmp.ne.s32.totalorder %s30, %s31
      %p42 = scmp.eq.s32.totalorder %s22, 0
      %p43 = por %p41, %p42
      %p44 = scmp.ne.s32.totalorder %s30, %s31
      %p45 = scmp.eq.s32.totalorder %s23, 1
      %p46 = por %p44, %p45
      %p48 = scmp.ne.s32.totalorder %s31, %s47
      %p49 = scmp.eq.s32.totalorder %s23, 0
      %p50 = por %p48, %p49
      %s52 = sadd.s32 %s51, 1
      %p55 = scmp.eq.s32.totalorder %s17, 1
      %p56 = scmp.ne.s32.totalorder %s51, %s53
      %p57 = scmp.eq.s32.totalorder %s17, 0
      %p58 = por %p56, %p57
      %p59 = scmp.ne.s32.totalorder %s51, %s53
      %p60 = scmp.eq.s32.totalorder %s22, 1
      %p61 = por %p59, %p60
      %p62 = scmp.ne.s32.totalorder %s53, %s54
      %p63 = scmp.eq.s32.totalorder %s22, 0
      %p64 = por %p62, %p63
      %p65 = scmp.ne.s32.totalorder %s53, %s54
      %p66 = scmp.eq.s32.totalorder %s23, 1
      %p67 = por %p65, %p66
      %p69 = scmp.ne.s32.totalorder %s54, %s68
      %p70 = scmp.eq.s32.totalorder %s23, 0
      %p71 = por %p69, %p70
      %s73 = sadd.s32 %s72, 1
      %p76 = scmp.eq.s32.totalorder %s17, 1
      %p77 = scmp.ne.s32.totalorder %s72, %s74
      %p78 = scmp.eq.s32.totalorder %s17, 0
      %p79 = por %p77, %p78
      %p80 = scmp.ne.s32.totalorder %s72, %s74
      %p81 = scmp.eq.s32.totalorder %s22, 1
      %p82 = por %p80, %p81
      %p83 = scmp.ne.s32.totalorder %s74, %s75
      %p84 = scmp.eq.s32.totalorder %s22, 0
      %p85 = por %p83, %p84
      %p86 = scmp.ne.s32.totalorder %s74, %s75
      %p87 = scmp.eq.s32.totalorder %s23, 1
      %p88 = por %p86, %p87
      %p90 = scmp.ne.s32.totalorder %s75, %s89
      %p91 = scmp.eq.s32.totalorder %s23, 0
      %p92 = por %p90, %p91
      %s94 = sadd.s32 %s93, 1
      %p97 = scmp.eq.s32.totalorder %s17, 1
      %p98 = scmp.ne.s32.totalorder %s93, %s95
      %p99 = scmp.eq.s32.totalorder %s17, 0
      %p100 = por %p98, %p99
      %p101 = scmp.ne.s32.totalorder %s93, %s95
      %p102 = scmp.eq.s32.totalorder %s22, 1
      %p103 = por %p101, %p102
      %p104 = scmp.ne.s32.totalorder %s95, %s96
      %p105 = scmp.eq.s32.totalorder %s22, 0
      %p106 = por %p104, %p105
      %p107 = scmp.ne.s32.totalorder %s95, %s96
      %p108 = scmp.eq.s32.totalorder %s23, 1
      %p109 = por %p107, %p108
      %p111 = scmp.ne.s32.totalorder %s96, %s110
      %p112 = scmp.eq.s32.totalorder %s23, 0
      %p113 = por %p111, %p112
      %s115 = sadd.s32 %s114, 1
      %p118 = scmp.eq.s32.totalorder %s17, 1
      %p119 = scmp.ne.s32.totalorder %s114, %s116
      %p120 = scmp.eq.s32.totalorder %s17, 0
      %p121 = por %p119, %p120
      %p122 = scmp.ne.s32.totalorder %s114, %s116
      %p123 = scmp.eq.s32.totalorder %s22, 1
      %p124 = por %p122, %p123
      %p125 = scmp.ne.s32.totalorder %s116, %s117
      %p126 = scmp.eq.s32.totalorder %s22, 0
      %p127 = por %p125, %p126
      %p128 = scmp.ne.s32.totalorder %s116, %s117
      %p129 = scmp.eq.s32.totalorder %s23, 1
      %p130 = por %p128, %p129
      %p132 = scmp.ne.s32.totalorder %s117, %s131
      %p133 = scmp.eq.s32.totalorder %s23, 0
      %p134 = por %p132, %p133
      %s136 = sadd.s32 %s135, 1
      %p139 = scmp.eq.s32.totalorder %s17, 1
      %p140 = scmp.ne.s32.totalorder %s135, %s137
      %p141 = scmp.eq.s32.totalorder %s17, 0
      %p142 = por %p140, %p141
      %p143 = scmp.ne.s32.totalorder %s135, %s137
      %p144 = scmp.eq.s32.totalorder %s22, 1
      %p145 = por %p143, %p144
      %p146 = scmp.ne.s32.totalorder %s137, %s138
      %p147 = scmp.eq.s32.totalorder %s22, 0
      %p148 = por %p146, %p147
      %p149 = scmp.ne.s32.totalorder %s137, %s138
      %p150 = scmp.eq.s32.totalorder %s23, 1
      %p151 = por %p149, %p150
      %p153 = scmp.ne.s32.totalorder %s138, %s152
      %p154 = scmp.eq.s32.totalorder %s23, 0
      %p155 = por %p153, %p154
      %s157 = sadd.s32 %s156, 1
      %p160 = scmp.eq.s32.totalorder %s17, 1
      %p161 = scmp.ne.s32.totalorder %s156, %s158
      %p162 = scmp.eq.s32.totalorder %s17, 0
      %p163 = por %p161, %p162
      %p164 = scmp.ne.s32.totalorder %s156, %s158
      %p165 = scmp.eq.s32.totalorder %s22, 1
      %p166 = por %p164, %p165
      %p167 = scmp.ne.s32.totalorder %s158, %s159
      %p168 = scmp.eq.s32.totalorder %s22, 0
      %p169 = por %p167, %p168
      %p170 = scmp.ne.s32.totalorder %s158, %s159
      %p171 = scmp.eq.s32.totalorder %s23, 1
      %p172 = por %p170, %p171
      %p174 = scmp.ne.s32.totalorder %s159, %s173
      %p175 = scmp.eq.s32.totalorder %s23, 0
      %p176 = por %p174, %p175
      %s177 = ssub.s32 %s17, %s24
      %p178 = scmp.eq.s32.totalorder %s177, 0
      %s180 = sadd.s32 %s179, 1
      %s181 = scalar_select %p178, %s179, %s180
      %p184 = pneg %p178
      %p185 = scmp.eq.s32.totalorder %s17, 1
      %p186 = por %p184, %p185
      %p187 = scmp.ne.s32.totalorder %s179, %s182
      %p188 = scmp.eq.s32.totalorder %s17, 0
      %p189 = por %p187, %p188
      %p190 = scmp.ne.s32.totalorder %s179, %s182
      %p191 = scmp.eq.s32.totalorder %s22, 1
      %p192 = por %p190, %p191
      %p193 = scmp.ne.s32.totalorder %s182, %s183
      %p194 = scmp.eq.s32.totalorder %s22, 0
      %p195 = por %p193, %p194
      %p196 = scmp.ne.s32.totalorder %s182, %s183
      %p197 = scmp.eq.s32.totalorder %s23, 1
      %p198 = por %p196, %p197
      %p200 = scmp.ne.s32.totalorder %s183, %s199
      %p201 = scmp.eq.s32.totalorder %s23, 0
      %p202 = por %p200, %p201
      %p203 = scmp.le.s32.totalorder 1, %s17
      %p204 = scmp.lt.s32.totalorder %s17, 3
      %p205 = pnand %p203, %p204
      %p206 = pneg %p205
      // Predicated region
      $region9: #{tpu_custom_call.1} parent=5 // pred_check
        _
      $region10: #{tpu_custom_call.1} parent=5 // pred_check_branch
        %208 = sbr.rel (%p205) target = $region12
      $region11: #{tpu_custom_call.1} parent=5 // pred_region
        %s209 = ssub.s32 %s17, 1
        // Predicated region
        $region13: #{tpu_custom_call.1} parent=11 // pred_check
          %p210 = pneg %p64
        $region14: #{tpu_custom_call.1} parent=11 // pred_check_branch
          %212 = sbr.rel (%p210) target = $region16
        $region15: #{tpu_custom_call.1} parent=11 // pred_region
          _
        $region16: #{tpu_custom_call.1} parent=11 // pred_fallthru
          _
        // Predicated region
        $region17: #{tpu_custom_call.1} parent=11 // pred_check
          %p213 = pneg %p85
        $region18: #{tpu_custom_call.1} parent=11 // pred_check_branch
          %215 = sbr.rel (%p213) target = $region20
        $region19: #{tpu_custom_call.1} parent=11 // pred_region
          _
        $region20: #{tpu_custom_call.1} parent=11 // pred_fallthru
          _
        // Predicated region
        $region21: #{tpu_custom_call.1} parent=11 // pred_check
          %p216 = pneg %p106
        $region22: #{tpu_custom_call.1} parent=11 // pred_check_branch
          %218 = sbr.rel (%p216) target = $region24
        $region23: #{tpu_custom_call.1} parent=11 // pred_region
          %220 = vsyncadd [#allocation4], 0
          %s221 = sshll.u32 %s3, 4
          %s222 = int_to_ptr.hbm [resolvable:$true] %s221
          %s223 = sshll.u32 [#allocation3], 4
          %s224 = int_to_ptr.vmem [resolvable:$true] %s223
          %229 = dma.hbm_to_vmem [thread:$0]  %s222, 9216, %s224, [#allocation4], 64, 64, 4
        $region24: #{tpu_custom_call.1} parent=11 // pred_fallthru
          _
        // Predicated region
        $region25: #{tpu_custom_call.1} parent=11 // pred_check
          %p230 = pneg %p127
        $region26: #{tpu_custom_call.1} parent=11 // pred_check_branch
          %232 = sbr.rel (%p230) target = $region28
        $region27: #{tpu_custom_call.1} parent=11 // pred_region
          _
        $region28: #{tpu_custom_call.1} parent=11 // pred_fallthru
          _
        // Predicated region
        $region29: #{tpu_custom_call.1} parent=11 // pred_check
          %p233 = pneg %p148
        $region30: #{tpu_custom_call.1} parent=11 // pred_check_branch
          %235 = sbr.rel (%p233) target = $region32
        $region31: #{tpu_custom_call.1} parent=11 // pred_region
          _
        $region32: #{tpu_custom_call.1} parent=11 // pred_fallthru
          _
        // Predicated region
        $region33: #{tpu_custom_call.1} parent=11 // pred_check
          %p236 = pneg %p169
        $region34: #{tpu_custom_call.1} parent=11 // pred_check_branch
          %238 = sbr.rel (%p236) target = $region36
        $region35: #{tpu_custom_call.1} parent=11 // pred_region
          _
        $region36: #{tpu_custom_call.1} parent=11 // pred_fallthru
          _
      $region12: #{tpu_custom_call.1} parent=5 // pred_fallthru
        _
      %p239 = scmp.lt.s32.totalorder %s17, 2
      // Predicated region
      $region37: #{tpu_custom_call.1} parent=5 // pred_check
        %p240 = pneg %p239
      $region38: #{tpu_custom_call.1} parent=5 // pred_check_branch
        %242 = sbr.rel (%p240) target = $region40
      $region39: #{tpu_custom_call.1} parent=5 // pred_region
        // Predicated region
        $region41: #{tpu_custom_call.1} parent=39 // pred_check
          %p243 = pneg %p37
        $region42: #{tpu_custom_call.1} parent=39 // pred_check_branch
          %245 = sbr.rel (%p243) target = $region44
        $region43: #{tpu_custom_call.1} parent=39 // pred_region
          %p246 = scmp.lt.s32.totalorder %s17, 1
          %s247 = scalar_select %p246, %s17, 1
          %s248 = smul.addr %s247, 72
          %s249 = smul.addr %s248, 4
          %s250 = scalar_lea.vmem %s0, %s249
        $region44: #{tpu_custom_call.1} parent=39 // pred_fallthru
          _
      $region40: #{tpu_custom_call.1} parent=5 // pred_fallthru
        _
      %p251 = scmp.le.s32.totalorder 1, %s17
      %p252 = scmp.lt.s32.totalorder %s17, 3
      %p253 = pnand %p251, %p252
      %p254 = pneg %p253
      // Predicated region
      $region45: #{tpu_custom_call.1} parent=5 // pred_check
        _
      $region46: #{tpu_custom_call.1} parent=5 // pred_check_branch
        %256 = sbr.rel (%p253) target = $region48
      $region47: #{tpu_custom_call.1} parent=5 // pred_region
        %s257 = ssub.s32 %s17, 1
        // Predicated region
        $region49: #{tpu_custom_call.1} parent=47 // pred_check
          %p258 = pneg %p106
        $region50: #{tpu_custom_call.1} parent=47 // pred_check_branch
          %260 = sbr.rel (%p258) target = $region52
        $region51: #{tpu_custom_call.1} parent=47 // pred_region
          %262 = dma.done [#allocation4], 9216
        $region52: #{tpu_custom_call.1} parent=47 // pred_fallthru
          _
        %p263 = scmp.lt.s32.totalorder %s22, 1
        %s264 = scalar_select %p263, %s22, 1
        %s265 = smul.addr %s264, 72
        %s266 = smul.addr %s265, 4
        %s267 = scalar_lea.vmem %s0, %s266
        %p268 = pneg %p43
        %p269 = pneg %p40
        %p270 = pneg %p64
        %p271 = pneg %p61
        %p272 = pneg %p85
        %p273 = pneg %p82
        %p274 = pneg %p106
        %p275 = pneg %p103
        %p276 = pneg %p127
        %p277 = pneg %p124
        %p278 = pneg %p148
        %p279 = pneg %p145
        %p280 = pneg %p169
        %p281 = pneg %p166
        %p282 = pneg %p195
        %p283 = pneg %p192
        %s284 = sand.u32 %s182, 1
        %s285 = scalar_lea.sflag [#allocation5], %s284
        %s286 = sand.u32 %s182, 1
        %s287 = smul.addr %s286, 32
        %s288 = scalar_lea.vmem [#allocation6], %s287
        %p289 = scmp.lt.s32.totalorder %s22, 1
        %s290 = scalar_select %p289, %s22, 1
        %s291 = smul.addr %s290, 72
        %s292 = smul.addr %s291, 4
        %s293 = scalar_lea.vmem %s0, %s292
        %v295 = vld [vmem:[%s293] sm:$0xf]
        %v296 = vld [vmem:[%s293 + $0x8] sm:$0xf]
        %v297 = vld [vmem:[%s293 + $0x10] sm:$0xf]
        %v298 = vld [vmem:[%s293 + $0x18] sm:$0xf]
        %v299 = vld [vmem:[%s293 + $0x20] sm:$0xf]
        %v300 = vld [vmem:[%s293 + $0x28] sm:$0xf]
        %v301 = vld [vmem:[%s293 + $0x30] sm:$0xf]
        %v302 = vld [vmem:[%s293 + $0x38] sm:$0xf]
        %v303 = vld [vmem:[%s1] sm:$0xf]
        %v304 = vld [vmem:[%s1 + $0x4] sm:$0xf]
        %v305 = vld [vmem:[%s1 + $0x8] sm:$0xf]
        %v306 = vld [vmem:[%s1 + $0xc] sm:$0xf]
        %v307 = vld [vmem:[%s1 + $0x10] sm:$0xf]
        %v308 = vld [vmem:[%s1 + $0x14] sm:$0xf]
        %v309 = vld [vmem:[%s1 + $0x18] sm:$0xf]
        %v310 = vld [vmem:[%s1 + $0x1c] sm:$0xf]
        %v311 = vld [vmem:[%s1 + $0x20] sm:$0xf]
        %v312 = vld [vmem:[%s1 + $0x24] sm:$0xf]
        %v313 = vld [vmem:[%s1 + $0x28] sm:$0xf]
        %v314 = vld [vmem:[%s1 + $0x2c] sm:$0xf]
        %v315 = vld [vmem:[%s1 + $0x30] sm:$0xf]
        %v316 = vld [vmem:[%s1 + $0x34] sm:$0xf]
        %v317 = vld [vmem:[%s1 + $0x38] sm:$0xf]
        %v318 = vld [vmem:[%s1 + $0x3c] sm:$0xf]
        %s319 = scalar_lea.vmem %s293, 72
        %v320 = vld [vmem:[%s319] sm:$0xf]
        %v321 = vld [vmem:[%s319 + $0x8] sm:$0xf]
        %v322 = vld [vmem:[%s319 + $0x10] sm:$0xf]
        %v323 = vld [vmem:[%s319 + $0x18] sm:$0xf]
        %v324 = vld [vmem:[%s319 + $0x20] sm:$0xf]
        %v325 = vld [vmem:[%s319 + $0x28] sm:$0xf]
        %v326 = vld [vmem:[%s319 + $0x30] sm:$0xf]
        %v327 = vld [vmem:[%s319 + $0x38] sm:$0xf]
        %s328 = scalar_lea.vmem %s1, 64
        %v329 = vld [vmem:[%s328] sm:$0xf]
        %v330 = vld [vmem:[%s328 + $0x4] sm:$0xf]
        %v331 = vld [vmem:[%s328 + $0x8] sm:$0xf]
        %v332 = vld [vmem:[%s328 + $0xc] sm:$0xf]
        %v333 = vld [vmem:[%s328 + $0x10] sm:$0xf]
        %v334 = vld [vmem:[%s328 + $0x14] sm:$0xf]
        %v335 = vld [vmem:[%s328 + $0x18] sm:$0xf]
        %v336 = vld [vmem:[%s328 + $0x1c] sm:$0xf]
        %v337 = vld [vmem:[%s328 + $0x20] sm:$0xf]
        %v338 = vld [vmem:[%s328 + $0x24] sm:$0xf]
        %v339 = vld [vmem:[%s328 + $0x28] sm:$0xf]
        %v340 = vld [vmem:[%s328 + $0x2c] sm:$0xf]
        %v341 = vld [vmem:[%s328 + $0x30] sm:$0xf]
        %v342 = vld [vmem:[%s328 + $0x34] sm:$0xf]
        %v343 = vld [vmem:[%s328 + $0x38] sm:$0xf]
        %v344 = vld [vmem:[%s328 + $0x3c] sm:$0xf]
        %v353 = vunpack.c.l.b16 %v320
        %v354 = vunpack.c.l.b16 %v321
        %v355 = vunpack.c.l.b16 %v322
        %v356 = vunpack.c.l.b16 %v323
        %v357 = vunpack.c.l.b16 %v324
        %v358 = vunpack.c.l.b16 %v325
        %v359 = vunpack.c.l.b16 %v326
        %v360 = vunpack.c.l.b16 %v327
        %v361 = vpack.c.b16 %v354, %v353
        %v362 = vpack.c.b16 %v356, %v355
        %v363 = vpack.c.b16 %v358, %v357
        %v364 = vpack.c.b16 %v360, %v359
        %v385 = vunpack.c.l.b16 %v329
        %v386 = vunpack.c.l.b16 %v330
        %v387 = vunpack.c.l.b16 %v331
        %v388 = vunpack.c.l.b16 %v332
        %v389 = vunpack.c.l.b16 %v333
        %v390 = vunpack.c.l.b16 %v334
        %v391 = vunpack.c.l.b16 %v335
        %v392 = vunpack.c.l.b16 %v336
        %v393 = vunpack.c.l.b16 %v337
        %v394 = vunpack.c.l.b16 %v338
        %v395 = vunpack.c.l.b16 %v339
        %v396 = vunpack.c.l.b16 %v340
        %v397 = vunpack.c.l.b16 %v341
        %v398 = vunpack.c.l.b16 %v342
        %v399 = vunpack.c.l.b16 %v343
        %v400 = vunpack.c.l.b16 %v344
        %v401 = vpack.c.b16 %v386, %v385
        %v402 = vpack.c.b16 %v388, %v387
        %v403 = vpack.c.b16 %v390, %v389
        %v404 = vpack.c.b16 %v392, %v391
        %v405 = vpack.c.b16 %v394, %v393
        %v406 = vpack.c.b16 %v396, %v395
        %v407 = vpack.c.b16 %v398, %v397
        %v408 = vpack.c.b16 %v400, %v399
        %417 = vmatpush.bf16.msra.mxu0 %v408
        %418 = vmatpush.bf16.msra.mxu0 %v407
        %419 = vmatpush.bf16.msra.mxu0 %v406
        %420 = vmatpush.bf16.msra.mxu0 %v405
        %421 = vmatpush.bf16.msra.mxu0 %v404
        %422 = vmatpush.bf16.msra.mxu0 %v403
        %423 = vmatpush.bf16.msra.mxu0 %v402
        %424 = vmatpush.bf16.msra.mxu0 %v401
        %425 = vmatmul.bf16.gmra.mxu0 %v361
        %v426 = vpop.f32.mrf.mxu0
        %v427 = vadd.f32 0.0, %v426
        %v428 = vpop.f32.mrf.mxu0
        %v429 = vadd.f32 0.0, %v428
        %430 = vmatmul.bf16.gmra.mxu0 %v362
        %v431 = vpop.f32.mrf.mxu0
        %v432 = vadd.f32 0.0, %v431
        %v433 = vpop.f32.mrf.mxu0
        %v434 = vadd.f32 0.0, %v433
        %435 = vmatmul.bf16.gmra.mxu0 %v363
        %v436 = vpop.f32.mrf.mxu0
        %v437 = vadd.f32 0.0, %v436
        %v438 = vpop.f32.mrf.mxu0
        %v439 = vadd.f32 0.0, %v438
        %440 = vmatmul.bf16.gmra.mxu0 %v364
        %v441 = vpop.f32.mrf.mxu0
        %v442 = vadd.f32 0.0, %v441
        %v443 = vpop.f32.mrf.mxu0
        %v444 = vadd.f32 0.0, %v443
        %445 = vdwg.mxu0
        %v454 = vunpack.c.l.b16 %v295
        %v455 = vunpack.c.l.b16 %v296
        %v456 = vunpack.c.l.b16 %v297
        %v457 = vunpack.c.l.b16 %v298
        %v458 = vunpack.c.l.b16 %v299
        %v459 = vunpack.c.l.b16 %v300
        %v460 = vunpack.c.l.b16 %v301
        %v461 = vunpack.c.l.b16 %v302
        %v462 = vpack.c.b16 %v455, %v454
        %v463 = vpack.c.b16 %v457, %v456
        %v464 = vpack.c.b16 %v459, %v458
        %v465 = vpack.c.b16 %v461, %v460
        %v486 = vunpack.c.l.b16 %v303
        %v487 = vunpack.c.l.b16 %v304
        %v488 = vunpack.c.l.b16 %v305
        %v489 = vunpack.c.l.b16 %v306
        %v490 = vunpack.c.l.b16 %v307
        %v491 = vunpack.c.l.b16 %v308
        %v492 = vunpack.c.l.b16 %v309
        %v493 = vunpack.c.l.b16 %v310
        %v494 = vunpack.c.l.b16 %v311
        %v495 = vunpack.c.l.b16 %v312
        %v496 = vunpack.c.l.b16 %v313
        %v497 = vunpack.c.l.b16 %v314
        %v498 = vunpack.c.l.b16 %v315
        %v499 = vunpack.c.l.b16 %v316
        %v500 = vunpack.c.l.b16 %v317
        %v501 = vunpack.c.l.b16 %v318
        %v502 = vpack.c.b16 %v487, %v486
        %v503 = vpack.c.b16 %v489, %v488
        %v504 = vpack.c.b16 %v491, %v490
        %v505 = vpack.c.b16 %v493, %v492
        %v506 = vpack.c.b16 %v495, %v494
        %v507 = vpack.c.b16 %v497, %v496
        %v508 = vpack.c.b16 %v499, %v498
        %v509 = vpack.c.b16 %v501, %v500
        %518 = vmatpush.bf16.msra.mxu0 %v509
        %519 = vmatpush.bf16.msra.mxu0 %v508
        %520 = vmatpush.bf16.msra.mxu0 %v507
        %521 = vmatpush.bf16.msra.mxu0 %v506
        %522 = vmatpush.bf16.msra.mxu0 %v505
        %523 = vmatpush.bf16.msra.mxu0 %v504
        %524 = vmatpush.bf16.msra.mxu0 %v503
        %525 = vmatpush.bf16.msra.mxu0 %v502
        %526 = vmatmul.bf16.gmra.mxu0 %v462
        %v527 = vpop.f32.mrf.mxu0
        %v528 = vadd.f32 %v427, %v527
        %v529 = vpop.f32.mrf.mxu0
        %v530 = vadd.f32 %v429, %v529
        %531 = vmatmul.bf16.gmra.mxu0 %v463
        %v532 = vpop.f32.mrf.mxu0
        %v533 = vadd.f32 %v432, %v532
        %v534 = vpop.f32.mrf.mxu0
        %v535 = vadd.f32 %v434, %v534
        %536 = vmatmul.bf16.gmra.mxu0 %v464
        %v537 = vpop.f32.mrf.mxu0
        %v538 = vadd.f32 %v437, %v537
        %v539 = vpop.f32.mrf.mxu0
        %v540 = vadd.f32 %v439, %v539
        %541 = vmatmul.bf16.gmra.mxu0 %v465
        %v542 = vpop.f32.mrf.mxu0
        %v543 = vadd.f32 %v442, %v542
        %v544 = vpop.f32.mrf.mxu0
        %v545 = vadd.f32 %v444, %v544
        %546 = vdwg.mxu0
        %v547 = vld [vmem:[%s293] sm:$0xf]
        %v548 = vld [vmem:[%s293 + $0x4] sm:$0x1]
        %v549 = vld [vmem:[%s293 + $0x8] sm:$0xf]
        %v550 = vld [vmem:[%s293 + $0xc] sm:$0x1]
        %v551 = vld [vmem:[%s293 + $0x10] sm:$0xf]
        %v552 = vld [vmem:[%s293 + $0x14] sm:$0x1]
        %v553 = vld [vmem:[%s293 + $0x18] sm:$0xf]
        %v554 = vld [vmem:[%s293 + $0x1c] sm:$0x1]
        %v555 = vld [vmem:[%s293 + $0x20] sm:$0xf]
        %v556 = vld [vmem:[%s293 + $0x24] sm:$0x1]
        %v557 = vld [vmem:[%s293 + $0x28] sm:$0xf]
        %v558 = vld [vmem:[%s293 + $0x2c] sm:$0x1]
        %v559 = vld [vmem:[%s293 + $0x30] sm:$0xf]
        %v560 = vld [vmem:[%s293 + $0x34] sm:$0x1]
        %v561 = vld [vmem:[%s293 + $0x38] sm:$0xf]
        %v562 = vld [vmem:[%s293 + $0x3c] sm:$0x1]
        %vm563 = vsmask.f32 3328
        %vm564 = vsmask.f32 7440
        %vm565 = vmor %vm563, %vm564
        %v567 = vshrl.u32 %v547, 16
        %v569 = vrot.slane %v567, 4
        %v570 = vshll.u32 %v547, 16
        %v572 = vrot.slane %v570, 5
        %v573 = vor.u32 %v569, %v572
        %v574 = vrot.slane %v573, 4
        %v576 = vshll.u32 %v548, 16
        %v578 = vrot.slane %v576, 5
        %v579 = vsel %vm565, %v574, %v578
        %v581 = vshrl.u32 %v549, 16
        %v583 = vrot.slane %v581, 4
        %v584 = vshll.u32 %v549, 16
        %v586 = vrot.slane %v584, 5
        %v587 = vor.u32 %v583, %v586
        %v588 = vrot.slane %v587, 4
        %v590 = vshll.u32 %v550, 16
        %v592 = vrot.slane %v590, 5
        %v593 = vsel %vm565, %v588, %v592
        %v595 = vshrl.u32 %v551, 16
        %v597 = vrot.slane %v595, 4
        %v598 = vshll.u32 %v551, 16
        %v600 = vrot.slane %v598, 5
        %v601 = vor.u32 %v597, %v600
        %v602 = vrot.slane %v601, 4
        %v604 = vshll.u32 %v552, 16
        %v606 = vrot.slane %v604, 5
        %v607 = vsel %vm565, %v602, %v606
        %v609 = vshrl.u32 %v553, 16
        %v611 = vrot.slane %v609, 4
        %v612 = vshll.u32 %v553, 16
        %v614 = vrot.slane %v612, 5
        %v615 = vor.u32 %v611, %v614
        %v616 = vrot.slane %v615, 4
        %v618 = vshll.u32 %v554, 16
        %v620 = vrot.slane %v618, 5
        %v621 = vsel %vm565, %v616, %v620
        %v623 = vshrl.u32 %v555, 16
        %v625 = vrot.slane %v623, 4
        %v626 = vshll.u32 %v555, 16
        %v628 = vrot.slane %v626, 5
        %v629 = vor.u32 %v625, %v628
        %v630 = vrot.slane %v629, 4
        %v632 = vshll.u32 %v556, 16
        %v634 = vrot.slane %v632, 5
        %v635 = vsel %vm565, %v630, %v634
        %v637 = vshrl.u32 %v557, 16
        %v639 = vrot.slane %v637, 4
        %v640 = vshll.u32 %v557, 16
        %v642 = vrot.slane %v640, 5
        %v643 = vor.u32 %v639, %v642
        %v644 = vrot.slane %v643, 4
        %v646 = vshll.u32 %v558, 16
        %v648 = vrot.slane %v646, 5
        %v649 = vsel %vm565, %v644, %v648
        %v651 = vshrl.u32 %v559, 16
        %v653 = vrot.slane %v651, 4
        %v654 = vshll.u32 %v559, 16
        %v656 = vrot.slane %v654, 5
        %v657 = vor.u32 %v653, %v656
        %v658 = vrot.slane %v657, 4
        %v660 = vshll.u32 %v560, 16
        %v662 = vrot.slane %v660, 5
        %v663 = vsel %vm565, %v658, %v662
        %v665 = vshrl.u32 %v561, 16
        %v667 = vrot.slane %v665, 4
        %v668 = vshll.u32 %v561, 16
        %v670 = vrot.slane %v668, 5
        %v671 = vor.u32 %v667, %v670
        %v672 = vrot.slane %v671, 4
        %v674 = vshll.u32 %v562, 16
        %v676 = vrot.slane %v674, 5
        %v677 = vsel %vm565, %v672, %v676
        %s678 = scalar_lea.vmem %s1, 128
        %v679 = vld [vmem:[%s678] sm:$0xf]
        %v680 = vld [vmem:[%s678 + $0x4] sm:$0xf]
        %v681 = vld [vmem:[%s678 + $0x8] sm:$0xf]
        %v682 = vld [vmem:[%s678 + $0xc] sm:$0xf]
        %v683 = vld [vmem:[%s678 + $0x10] sm:$0xf]
        %v684 = vld [vmem:[%s678 + $0x14] sm:$0xf]
        %v685 = vld [vmem:[%s678 + $0x18] sm:$0xf]
        %v686 = vld [vmem:[%s678 + $0x1c] sm:$0xf]
        %v687 = vld [vmem:[%s678 + $0x20] sm:$0xf]
        %v688 = vld [vmem:[%s678 + $0x24] sm:$0xf]
        %v689 = vld [vmem:[%s678 + $0x28] sm:$0xf]
        %v690 = vld [vmem:[%s678 + $0x2c] sm:$0xf]
        %v691 = vld [vmem:[%s678 + $0x30] sm:$0xf]
        %v692 = vld [vmem:[%s678 + $0x34] sm:$0xf]
        %v693 = vld [vmem:[%s678 + $0x38] sm:$0xf]
        %v694 = vld [vmem:[%s678 + $0x3c] sm:$0xf]
        %v695 = vunpack.c.l.b16 %v579
        %v696 = vunpack.c.l.b16 %v593
        %v697 = vunpack.c.l.b16 %v607
        %v698 = vunpack.c.l.b16 %v621
        %v699 = vunpack.c.l.b16 %v635
        %v700 = vunpack.c.l.b16 %v649
        %v701 = vunpack.c.l.b16 %v663
        %v702 = vunpack.c.l.b16 %v677
        %v703 = vpack.c.b16 %v696, %v695
        %v704 = vpack.c.b16 %v698, %v697
        %v705 = vpack.c.b16 %v700, %v699
        %v706 = vpack.c.b16 %v702, %v701
        %v727 = vunpack.c.l.b16 %v679
        %v728 = vunpack.c.l.b16 %v680
        %v729 = vunpack.c.l.b16 %v681
        %v730 = vunpack.c.l.b16 %v682
        %v731 = vunpack.c.l.b16 %v683
        %v732 = vunpack.c.l.b16 %v684
        %v733 = vunpack.c.l.b16 %v685
        %v734 = vunpack.c.l.b16 %v686
        %v735 = vunpack.c.l.b16 %v687
        %v736 = vunpack.c.l.b16 %v688
        %v737 = vunpack.c.l.b16 %v689
        %v738 = vunpack.c.l.b16 %v690
        %v739 = vunpack.c.l.b16 %v691
        %v740 = vunpack.c.l.b16 %v692
        %v741 = vunpack.c.l.b16 %v693
        %v742 = vunpack.c.l.b16 %v694
        %v743 = vpack.c.b16 %v728, %v727
        %v744 = vpack.c.b16 %v730, %v729
        %v745 = vpack.c.b16 %v732, %v731
        %v746 = vpack.c.b16 %v734, %v733
        %v747 = vpack.c.b16 %v736, %v735
        %v748 = vpack.c.b16 %v738, %v737
        %v749 = vpack.c.b16 %v740, %v739
        %v750 = vpack.c.b16 %v742, %v741
        %759 = vmatpush.bf16.msra.mxu0 %v750
        %760 = vmatpush.bf16.msra.mxu0 %v749
        %761 = vmatpush.bf16.msra.mxu0 %v748
        %762 = vmatpush.bf16.msra.mxu0 %v747
        %763 = vmatpush.bf16.msra.mxu0 %v746
        %764 = vmatpush.bf16.msra.mxu0 %v745
        %765 = vmatpush.bf16.msra.mxu0 %v744
        %766 = vmatpush.bf16.msra.mxu0 %v743
        %767 = vmatmul.bf16.gmra.mxu0 %v703
        %v768 = vpop.f32.mrf.mxu0
        %v769 = vadd.f32 0.0, %v768
        %v770 = vpop.f32.mrf.mxu0
        %v771 = vadd.f32 0.0, %v770
        %772 = vmatmul.bf16.gmra.mxu0 %v704
        %v773 = vpop.f32.mrf.mxu0
        %v774 = vadd.f32 0.0, %v773
        %v775 = vpop.f32.mrf.mxu0
        %v776 = vadd.f32 0.0, %v775
        %777 = vmatmul.bf16.gmra.mxu0 %v705
        %v778 = vpop.f32.mrf.mxu0
        %v779 = vadd.f32 0.0, %v778
        %v780 = vpop.f32.mrf.mxu0
        %v781 = vadd.f32 0.0, %v780
        %782 = vmatmul.bf16.gmra.mxu0 %v706
        %v783 = vpop.f32.mrf.mxu0
        %v784 = vadd.f32 0.0, %v783
        %v785 = vpop.f32.mrf.mxu0
        %v786 = vadd.f32 0.0, %v785
        %787 = vdwg.mxu0
        %v788 = vadd.f32 %v528, %v769
        %v789 = vadd.f32 %v530, %v771
        %v790 = vadd.f32 %v533, %v774
        %v791 = vadd.f32 %v535, %v776
        %v792 = vadd.f32 %v538, %v779
        %v793 = vadd.f32 %v540, %v781
        %v794 = vadd.f32 %v543, %v784
        %v795 = vadd.f32 %v545, %v786
        %s796 = scalar_lea.vmem %s293, 144
        %v797 = vld [vmem:[%s796] sm:$0xf]
        %v798 = vld [vmem:[%s796 + $0x8] sm:$0xf]
        %v799 = vld [vmem:[%s796 + $0x10] sm:$0xf]
        %v800 = vld [vmem:[%s796 + $0x18] sm:$0xf]
        %v801 = vld [vmem:[%s796 + $0x20] sm:$0xf]
        %v802 = vld [vmem:[%s796 + $0x28] sm:$0xf]
        %v803 = vld [vmem:[%s796 + $0x30] sm:$0xf]
        %v804 = vld [vmem:[%s796 + $0x38] sm:$0xf]
        %s805 = scalar_lea.vmem %s1, 192
        %v806 = vld [vmem:[%s805] sm:$0xf]
        %v807 = vld [vmem:[%s805 + $0x4] sm:$0xf]
        %v808 = vld [vmem:[%s805 + $0x8] sm:$0xf]
        %v809 = vld [vmem:[%s805 + $0xc] sm:$0xf]
        %v810 = vld [vmem:[%s805 + $0x10] sm:$0xf]
        %v811 = vld [vmem:[%s805 + $0x14] sm:$0xf]
        %v812 = vld [vmem:[%s805 + $0x18] sm:$0xf]
        %v813 = vld [vmem:[%s805 + $0x1c] sm:$0xf]
        %v814 = vld [vmem:[%s805 + $0x20] sm:$0xf]
        %v815 = vld [vmem:[%s805 + $0x24] sm:$0xf]
        %v816 = vld [vmem:[%s805 + $0x28] sm:$0xf]
        %v817 = vld [vmem:[%s805 + $0x2c] sm:$0xf]
        %v818 = vld [vmem:[%s805 + $0x30] sm:$0xf]
        %v819 = vld [vmem:[%s805 + $0x34] sm:$0xf]
        %v820 = vld [vmem:[%s805 + $0x38] sm:$0xf]
        %v821 = vld [vmem:[%s805 + $0x3c] sm:$0xf]
        %v830 = vunpack.c.l.b16 %v797
        %v831 = vunpack.c.l.b16 %v798
        %v832 = vunpack.c.l.b16 %v799
        %v833 = vunpack.c.l.b16 %v800
        %v834 = vunpack.c.l.b16 %v801
        %v835 = vunpack.c.l.b16 %v802
        %v836 = vunpack.c.l.b16 %v803
        %v837 = vunpack.c.l.b16 %v804
        %v838 = vpack.c.b16 %v831, %v830
        %v839 = vpack.c.b16 %v833, %v832
        %v840 = vpack.c.b16 %v835, %v834
        %v841 = vpack.c.b16 %v837, %v836
        %v862 = vunpack.c.l.b16 %v806
        %v863 = vunpack.c.l.b16 %v807
        %v864 = vunpack.c.l.b16 %v808
        %v865 = vunpack.c.l.b16 %v809
        %v866 = vunpack.c.l.b16 %v810
        %v867 = vunpack.c.l.b16 %v811
        %v868 = vunpack.c.l.b16 %v812
        %v869 = vunpack.c.l.b16 %v813
        %v870 = vunpack.c.l.b16 %v814
        %v871 = vunpack.c.l.b16 %v815
        %v872 = vunpack.c.l.b16 %v816
        %v873 = vunpack.c.l.b16 %v817
        %v874 = vunpack.c.l.b16 %v818
        %v875 = vunpack.c.l.b16 %v819
        %v876 = vunpack.c.l.b16 %v820
        %v877 = vunpack.c.l.b16 %v821
        %v878 = vpack.c.b16 %v863, %v862
        %v879 = vpack.c.b16 %v865, %v864
        %v880 = vpack.c.b16 %v867, %v866
        %v881 = vpack.c.b16 %v869, %v868
        %v882 = vpack.c.b16 %v871, %v870
        %v883 = vpack.c.b16 %v873, %v872
        %v884 = vpack.c.b16 %v875, %v874
        %v885 = vpack.c.b16 %v877, %v876
        %894 = vmatpush.bf16.msra.mxu0 %v885
        %895 = vmatpush.bf16.msra.mxu0 %v884
        %896 = vmatpush.bf16.msra.mxu0 %v883
        %897 = vmatpush.bf16.msra.mxu0 %v882
        %898 = vmatpush.bf16.msra.mxu0 %v881
        %899 = vmatpush.bf16.msra.mxu0 %v880
        %900 = vmatpush.bf16.msra.mxu0 %v879
        %901 = vmatpush.bf16.msra.mxu0 %v878
        %902 = vmatmul.bf16.gmra.mxu0 %v838
        %v903 = vpop.f32.mrf.mxu0
        %v904 = vadd.f32 0.0, %v903
        %v905 = vpop.f32.mrf.mxu0
        %v906 = vadd.f32 0.0, %v905
        %907 = vmatmul.bf16.gmra.mxu0 %v839
        %v908 = vpop.f32.mrf.mxu0
        %v909 = vadd.f32 0.0, %v908
        %v910 = vpop.f32.mrf.mxu0
        %v911 = vadd.f32 0.0, %v910
        %912 = vmatmul.bf16.gmra.mxu0 %v840
        %v913 = vpop.f32.mrf.mxu0
        %v914 = vadd.f32 0.0, %v913
        %v915 = vpop.f32.mrf.mxu0
        %v916 = vadd.f32 0.0, %v915
        %917 = vmatmul.bf16.gmra.mxu0 %v841
        %v918 = vpop.f32.mrf.mxu0
        %v919 = vadd.f32 0.0, %v918
        %v920 = vpop.f32.mrf.mxu0
        %v921 = vadd.f32 0.0, %v920
        %922 = vdwg.mxu0
        %v923 = vadd.f32 %v788, %v904
        %v924 = vadd.f32 %v789, %v906
        %v925 = vadd.f32 %v790, %v909
        %v926 = vadd.f32 %v791, %v911
        %v927 = vadd.f32 %v792, %v914
        %v928 = vadd.f32 %v793, %v916
        %v929 = vadd.f32 %v794, %v919
        %v930 = vadd.f32 %v795, %v921
        %s931 = scalar_lea.vmem %s293, 216
        %v932 = vld [vmem:[%s931] sm:$0xf]
        %v933 = vld [vmem:[%s931 + $0x8] sm:$0xf]
        %v934 = vld [vmem:[%s931 + $0x10] sm:$0xf]
        %v935 = vld [vmem:[%s931 + $0x18] sm:$0xf]
        %v936 = vld [vmem:[%s931 + $0x20] sm:$0xf]
        %v937 = vld [vmem:[%s931 + $0x28] sm:$0xf]
        %v938 = vld [vmem:[%s931 + $0x30] sm:$0xf]
        %v939 = vld [vmem:[%s931 + $0x38] sm:$0xf]
        %s940 = scalar_lea.vmem %s1, 256
        %v941 = vld [vmem:[%s940] sm:$0xf]
        %v942 = vld [vmem:[%s940 + $0x4] sm:$0xf]
        %v943 = vld [vmem:[%s940 + $0x8] sm:$0xf]
        %v944 = vld [vmem:[%s940 + $0xc] sm:$0xf]
        %v945 = vld [vmem:[%s940 + $0x10] sm:$0xf]
        %v946 = vld [vmem:[%s940 + $0x14] sm:$0xf]
        %v947 = vld [vmem:[%s940 + $0x18] sm:$0xf]
        %v948 = vld [vmem:[%s940 + $0x1c] sm:$0xf]
        %v949 = vld [vmem:[%s940 + $0x20] sm:$0xf]
        %v950 = vld [vmem:[%s940 + $0x24] sm:$0xf]
        %v951 = vld [vmem:[%s940 + $0x28] sm:$0xf]
        %v952 = vld [vmem:[%s940 + $0x2c] sm:$0xf]
        %v953 = vld [vmem:[%s940 + $0x30] sm:$0xf]
        %v954 = vld [vmem:[%s940 + $0x34] sm:$0xf]
        %v955 = vld [vmem:[%s940 + $0x38] sm:$0xf]
        %v956 = vld [vmem:[%s940 + $0x3c] sm:$0xf]
        %v965 = vunpack.c.l.b16 %v932
        %v966 = vunpack.c.l.b16 %v933
        %v967 = vunpack.c.l.b16 %v934
        %v968 = vunpack.c.l.b16 %v935
        %v969 = vunpack.c.l.b16 %v936
        %v970 = vunpack.c.l.b16 %v937
        %v971 = vunpack.c.l.b16 %v938
        %v972 = vunpack.c.l.b16 %v939
        %v973 = vpack.c.b16 %v966, %v965
        %v974 = vpack.c.b16 %v968, %v967
        %v975 = vpack.c.b16 %v970, %v969
        %v976 = vpack.c.b16 %v972, %v971
        %v997 = vunpack.c.l.b16 %v941
        %v998 = vunpack.c.l.b16 %v942
        %v999 = vunpack.c.l.b16 %v943
        %v1000 = vunpack.c.l.b16 %v944
        %v1001 = vunpack.c.l.b16 %v945
        %v1002 = vunpack.c.l.b16 %v946
        %v1003 = vunpack.c.l.b16 %v947
        %v1004 = vunpack.c.l.b16 %v948
        %v1005 = vunpack.c.l.b16 %v949
        %v1006 = vunpack.c.l.b16 %v950
        %v1007 = vunpack.c.l.b16 %v951
        %v1008 = vunpack.c.l.b16 %v952
        %v1009 = vunpack.c.l.b16 %v953
        %v1010 = vunpack.c.l.b16 %v954
        %v1011 = vunpack.c.l.b16 %v955
        %v1012 = vunpack.c.l.b16 %v956
        %v1013 = vpack.c.b16 %v998, %v997
        %v1014 = vpack.c.b16 %v1000, %v999
        %v1015 = vpack.c.b16 %v1002, %v1001
        %v1016 = vpack.c.b16 %v1004, %v1003
        %v1017 = vpack.c.b16 %v1006, %v1005
        %v1018 = vpack.c.b16 %v1008, %v1007
        %v1019 = vpack.c.b16 %v1010, %v1009
        %v1020 = vpack.c.b16 %v1012, %v1011
        %1029 = vmatpush.bf16.msra.mxu0 %v1020
        %1030 = vmatpush.bf16.msra.mxu0 %v1019
        %1031 = vmatpush.bf16.msra.mxu0 %v1018
        %1032 = vmatpush.bf16.msra.mxu0 %v1017
        %1033 = vmatpush.bf16.msra.mxu0 %v1016
        %1034 = vmatpush.bf16.msra.mxu0 %v1015
        %1035 = vmatpush.bf16.msra.mxu0 %v1014
        %1036 = vmatpush.bf16.msra.mxu0 %v1013
        %1037 = vmatmul.bf16.gmra.mxu0 %v973
        %v1038 = vpop.f32.mrf.mxu0
        %v1039 = vadd.f32 0.0, %v1038
        %v1040 = vpop.f32.mrf.mxu0
        %v1041 = vadd.f32 0.0, %v1040
        %1042 = vmatmul.bf16.gmra.mxu0 %v974
        %v1043 = vpop.f32.mrf.mxu0
        %v1044 = vadd.f32 0.0, %v1043
        %v1045 = vpop.f32.mrf.mxu0
        %v1046 = vadd.f32 0.0, %v1045
        %1047 = vmatmul.bf16.gmra.mxu0 %v975
        %v1048 = vpop.f32.mrf.mxu0
        %v1049 = vadd.f32 0.0, %v1048
        %v1050 = vpop.f32.mrf.mxu0
        %v1051 = vadd.f32 0.0, %v1050
        %1052 = vmatmul.bf16.gmra.mxu0 %v976
        %v1053 = vpop.f32.mrf.mxu0
        %v1054 = vadd.f32 0.0, %v1053
        %v1055 = vpop.f32.mrf.mxu0
        %v1056 = vadd.f32 0.0, %v1055
        %1057 = vdwg.mxu0
        %v1058 = vadd.f32 %v923, %v1039
        %v1059 = vadd.f32 %v924, %v1041
        %v1060 = vadd.f32 %v925, %v1044
        %v1061 = vadd.f32 %v926, %v1046
        %v1062 = vadd.f32 %v927, %v1049
        %v1063 = vadd.f32 %v928, %v1051
        %v1064 = vadd.f32 %v929, %v1054
        %v1065 = vadd.f32 %v930, %v1056
        %v1066 = vld [vmem:[%s796] sm:$0xf]
        %v1067 = vld [vmem:[%s796 + $0x4] sm:$0x1]
        %v1068 = vld [vmem:[%s796 + $0x8] sm:$0xf]
        %v1069 = vld [vmem:[%s796 + $0xc] sm:$0x1]
        %v1070 = vld [vmem:[%s796 + $0x10] sm:$0xf]
        %v1071 = vld [vmem:[%s796 + $0x14] sm:$0x1]
        %v1072 = vld [vmem:[%s796 + $0x18] sm:$0xf]
        %v1073 = vld [vmem:[%s796 + $0x1c] sm:$0x1]
        %v1074 = vld [vmem:[%s796 + $0x20] sm:$0xf]
        %v1075 = vld [vmem:[%s796 + $0x24] sm:$0x1]
        %v1076 = vld [vmem:[%s796 + $0x28] sm:$0xf]
        %v1077 = vld [vmem:[%s796 + $0x2c] sm:$0x1]
        %v1078 = vld [vmem:[%s796 + $0x30] sm:$0xf]
        %v1079 = vld [vmem:[%s796 + $0x34] sm:$0x1]
        %v1080 = vld [vmem:[%s796 + $0x38] sm:$0xf]
        %v1081 = vld [vmem:[%s796 + $0x3c] sm:$0x1]
        %v1083 = vshrl.u32 %v1066, 16
        %v1085 = vrot.slane %v1083, 4
        %v1086 = vshll.u32 %v1066, 16
        %v1088 = vrot.slane %v1086, 5
        %v1089 = vor.u32 %v1085, %v1088
        %v1090 = vrot.slane %v1089, 4
        %v1092 = vshll.u32 %v1067, 16
        %v1094 = vrot.slane %v1092, 5
        %v1095 = vsel %vm565, %v1090, %v1094
        %v1097 = vshrl.u32 %v1068, 16
        %v1099 = vrot.slane %v1097, 4
        %v1100 = vshll.u32 %v1068, 16
        %v1102 = vrot.slane %v1100, 5
        %v1103 = vor.u32 %v1099, %v1102
        %v1104 = vrot.slane %v1103, 4
        %v1106 = vshll.u32 %v1069, 16
        %v1108 = vrot.slane %v1106, 5
        %v1109 = vsel %vm565, %v1104, %v1108
        %v1111 = vshrl.u32 %v1070, 16
        %v1113 = vrot.slane %v1111, 4
        %v1114 = vshll.u32 %v1070, 16
        %v1116 = vrot.slane %v1114, 5
        %v1117 = vor.u32 %v1113, %v1116
        %v1118 = vrot.slane %v1117, 4
        %v1120 = vshll.u32 %v1071, 16
        %v1122 = vrot.slane %v1120, 5
        %v1123 = vsel %vm565, %v1118, %v1122
        %v1125 = vshrl.u32 %v1072, 16
        %v1127 = vrot.slane %v1125, 4
        %v1128 = vshll.u32 %v1072, 16
        %v1130 = vrot.slane %v1128, 5
        %v1131 = vor.u32 %v1127, %v1130
        %v1132 = vrot.slane %v1131, 4
        %v1134 = vshll.u32 %v1073, 16
        %v1136 = vrot.slane %v1134, 5
        %v1137 = vsel %vm565, %v1132, %v1136
        %v1139 = vshrl.u32 %v1074, 16
        %v1141 = vrot.slane %v1139, 4
        %v1142 = vshll.u32 %v1074, 16
        %v1144 = vrot.slane %v1142, 5
        %v1145 = vor.u32 %v1141, %v1144
        %v1146 = vrot.slane %v1145, 4
        %v1148 = vshll.u32 %v1075, 16
        %v1150 = vrot.slane %v1148, 5
        %v1151 = vsel %vm565, %v1146, %v1150
        %v1153 = vshrl.u32 %v1076, 16
        %v1155 = vrot.slane %v1153, 4
        %v1156 = vshll.u32 %v1076, 16
        %v1158 = vrot.slane %v1156, 5
        %v1159 = vor.u32 %v1155, %v1158
        %v1160 = vrot.slane %v1159, 4
        %v1162 = vshll.u32 %v1077, 16
        %v1164 = vrot.slane %v1162, 5
        %v1165 = vsel %vm565, %v1160, %v1164
        %v1167 = vshrl.u32 %v1078, 16
        %v1169 = vrot.slane %v1167, 4
        %v1170 = vshll.u32 %v1078, 16
        %v1172 = vrot.slane %v1170, 5
        %v1173 = vor.u32 %v1169, %v1172
        %v1174 = vrot.slane %v1173, 4
        %v1176 = vshll.u32 %v1079, 16
        %v1178 = vrot.slane %v1176, 5
        %v1179 = vsel %vm565, %v1174, %v1178
        %v1181 = vshrl.u32 %v1080, 16
        %v1183 = vrot.slane %v1181, 4
        %v1184 = vshll.u32 %v1080, 16
        %v1186 = vrot.slane %v1184, 5
        %v1187 = vor.u32 %v1183, %v1186
        %v1188 = vrot.slane %v1187, 4
        %v1190 = vshll.u32 %v1081, 16
        %v1192 = vrot.slane %v1190, 5
        %v1193 = vsel %vm565, %v1188, %v1192
        %s1194 = scalar_lea.vmem %s1, 320
        %v1195 = vld [vmem:[%s1194] sm:$0xf]
        %v1196 = vld [vmem:[%s1194 + $0x4] sm:$0xf]
        %v1197 = vld [vmem:[%s1194 + $0x8] sm:$0xf]
        %v1198 = vld [vmem:[%s1194 + $0xc] sm:$0xf]
        %v1199 = vld [vmem:[%s1194 + $0x10] sm:$0xf]
        %v1200 = vld [vmem:[%s1194 + $0x14] sm:$0xf]
        %v1201 = vld [vmem:[%s1194 + $0x18] sm:$0xf]
        %v1202 = vld [vmem:[%s1194 + $0x1c] sm:$0xf]
        %v1203 = vld [vmem:[%s1194 + $0x20] sm:$0xf]
        %v1204 = vld [vmem:[%s1194 + $0x24] sm:$0xf]
        %v1205 = vld [vmem:[%s1194 + $0x28] sm:$0xf]
        %v1206 = vld [vmem:[%s1194 + $0x2c] sm:$0xf]
        %v1207 = vld [vmem:[%s1194 + $0x30] sm:$0xf]
        %v1208 = vld [vmem:[%s1194 + $0x34] sm:$0xf]
        %v1209 = vld [vmem:[%s1194 + $0x38] sm:$0xf]
        %v1210 = vld [vmem:[%s1194 + $0x3c] sm:$0xf]
        %v1211 = vunpack.c.l.b16 %v1095
        %v1212 = vunpack.c.l.b16 %v1109
        %v1213 = vunpack.c.l.b16 %v1123
        %v1214 = vunpack.c.l.b16 %v1137
        %v1215 = vunpack.c.l.b16 %v1151
        %v1216 = vunpack.c.l.b16 %v1165
        %v1217 = vunpack.c.l.b16 %v1179
        %v1218 = vunpack.c.l.b16 %v1193
        %v1219 = vpack.c.b16 %v1212, %v1211
        %v1220 = vpack.c.b16 %v1214, %v1213
        %v1221 = vpack.c.b16 %v1216, %v1215
        %v1222 = vpack.c.b16 %v1218, %v1217
        %v1243 = vunpack.c.l.b16 %v1195
        %v1244 = vunpack.c.l.b16 %v1196
        %v1245 = vunpack.c.l.b16 %v1197
        %v1246 = vunpack.c.l.b16 %v1198
        %v1247 = vunpack.c.l.b16 %v1199
        %v1248 = vunpack.c.l.b16 %v1200
        %v1249 = vunpack.c.l.b16 %v1201
        %v1250 = vunpack.c.l.b16 %v1202
        %v1251 = vunpack.c.l.b16 %v1203
        %v1252 = vunpack.c.l.b16 %v1204
        %v1253 = vunpack.c.l.b16 %v1205
        %v1254 = vunpack.c.l.b16 %v1206
        %v1255 = vunpack.c.l.b16 %v1207
        %v1256 = vunpack.c.l.b16 %v1208
        %v1257 = vunpack.c.l.b16 %v1209
        %v1258 = vunpack.c.l.b16 %v1210
        %v1259 = vpack.c.b16 %v1244, %v1243
        %v1260 = vpack.c.b16 %v1246, %v1245
        %v1261 = vpack.c.b16 %v1248, %v1247
        %v1262 = vpack.c.b16 %v1250, %v1249
        %v1263 = vpack.c.b16 %v1252, %v1251
        %v1264 = vpack.c.b16 %v1254, %v1253
        %v1265 = vpack.c.b16 %v1256, %v1255
        %v1266 = vpack.c.b16 %v1258, %v1257
        %1275 = vmatpush.bf16.msra.mxu0 %v1266
        %1276 = vmatpush.bf16.msra.mxu0 %v1265
        %1277 = vmatpush.bf16.msra.mxu0 %v1264
        %1278 = vmatpush.bf16.msra.mxu0 %v1263
        %1279 = vmatpush.bf16.msra.mxu0 %v1262
        %1280 = vmatpush.bf16.msra.mxu0 %v1261
        %1281 = vmatpush.bf16.msra.mxu0 %v1260
        %1282 = vmatpush.bf16.msra.mxu0 %v1259
        %1283 = vmatmul.bf16.gmra.mxu0 %v1219
        %v1284 = vpop.f32.mrf.mxu0
        %v1285 = vadd.f32 0.0, %v1284
        %v1286 = vpop.f32.mrf.mxu0
        %v1287 = vadd.f32 0.0, %v1286
        %1288 = vmatmul.bf16.gmra.mxu0 %v1220
        %v1289 = vpop.f32.mrf.mxu0
        %v1290 = vadd.f32 0.0, %v1289
        %v1291 = vpop.f32.mrf.mxu0
        %v1292 = vadd.f32 0.0, %v1291
        %1293 = vmatmul.bf16.gmra.mxu0 %v1221
        %v1294 = vpop.f32.mrf.mxu0
        %v1295 = vadd.f32 0.0, %v1294
        %v1296 = vpop.f32.mrf.mxu0
        %v1297 = vadd.f32 0.0, %v1296
        %1298 = vmatmul.bf16.gmra.mxu0 %v1222
        %v1299 = vpop.f32.mrf.mxu0
        %v1300 = vadd.f32 0.0, %v1299
        %v1301 = vpop.f32.mrf.mxu0
        %v1302 = vadd.f32 0.0, %v1301
        %1303 = vdwg.mxu0
        %v1304 = vadd.f32 %v1058, %v1285
        %v1305 = vadd.f32 %v1059, %v1287
        %v1306 = vadd.f32 %v1060, %v1290
        %v1307 = vadd.f32 %v1061, %v1292
        %v1308 = vadd.f32 %v1062, %v1295
        %v1309 = vadd.f32 %v1063, %v1297
        %v1310 = vadd.f32 %v1064, %v1300
        %v1311 = vadd.f32 %v1065, %v1302
        %s1312 = scalar_lea.vmem %s293, 8
        %v1313 = vld [vmem:[%s1312] sm:$0xf]
        %v1314 = vld [vmem:[%s1312 + $0x8] sm:$0xf]
        %v1315 = vld [vmem:[%s1312 + $0x10] sm:$0xf]
        %v1316 = vld [vmem:[%s1312 + $0x18] sm:$0xf]
        %v1317 = vld [vmem:[%s1312 + $0x20] sm:$0xf]
        %v1318 = vld [vmem:[%s1312 + $0x28] sm:$0xf]
        %v1319 = vld [vmem:[%s1312 + $0x30] sm:$0xf]
        %v1320 = vld [vmem:[%s1312 + $0x38] sm:$0xf]
        %s1321 = scalar_lea.vmem %s1, 384
        %v1322 = vld [vmem:[%s1321] sm:$0xf]
        %v1323 = vld [vmem:[%s1321 + $0x4] sm:$0xf]
        %v1324 = vld [vmem:[%s1321 + $0x8] sm:$0xf]
        %v1325 = vld [vmem:[%s1321 + $0xc] sm:$0xf]
        %v1326 = vld [vmem:[%s1321 + $0x10] sm:$0xf]
        %v1327 = vld [vmem:[%s1321 + $0x14] sm:$0xf]
        %v1328 = vld [vmem:[%s1321 + $0x18] sm:$0xf]
        %v1329 = vld [vmem:[%s1321 + $0x1c] sm:$0xf]
        %v1330 = vld [vmem:[%s1321 + $0x20] sm:$0xf]
        %v1331 = vld [vmem:[%s1321 + $0x24] sm:$0xf]
        %v1332 = vld [vmem:[%s1321 + $0x28] sm:$0xf]
        %v1333 = vld [vmem:[%s1321 + $0x2c] sm:$0xf]
        %v1334 = vld [vmem:[%s1321 + $0x30] sm:$0xf]
        %v1335 = vld [vmem:[%s1321 + $0x34] sm:$0xf]
        %v1336 = vld [vmem:[%s1321 + $0x38] sm:$0xf]
        %v1337 = vld [vmem:[%s1321 + $0x3c] sm:$0xf]
        %v1346 = vunpack.c.l.b16 %v1313
        %v1347 = vunpack.c.l.b16 %v1314
        %v1348 = vunpack.c.l.b16 %v1315
        %v1349 = vunpack.c.l.b16 %v1316
        %v1350 = vunpack.c.l.b16 %v1317
        %v1351 = vunpack.c.l.b16 %v1318
        %v1352 = vunpack.c.l.b16 %v1319
        %v1353 = vunpack.c.l.b16 %v1320
        %v1354 = vpack.c.b16 %v1347, %v1346
        %v1355 = vpack.c.b16 %v1349, %v1348
        %v1356 = vpack.c.b16 %v1351, %v1350
        %v1357 = vpack.c.b16 %v1353, %v1352
        %v1378 = vunpack.c.l.b16 %v1322
        %v1379 = vunpack.c.l.b16 %v1323
        %v1380 = vunpack.c.l.b16 %v1324
        %v1381 = vunpack.c.l.b16 %v1325
        %v1382 = vunpack.c.l.b16 %v1326
        %v1383 = vunpack.c.l.b16 %v1327
        %v1384 = vunpack.c.l.b16 %v1328
        %v1385 = vunpack.c.l.b16 %v1329
        %v1386 = vunpack.c.l.b16 %v1330
        %v1387 = vunpack.c.l.b16 %v1331
        %v1388 = vunpack.c.l.b16 %v1332
        %v1389 = vunpack.c.l.b16 %v1333
        %v1390 = vunpack.c.l.b16 %v1334
        %v1391 = vunpack.c.l.b16 %v1335
        %v1392 = vunpack.c.l.b16 %v1336
        %v1393 = vunpack.c.l.b16 %v1337
        %v1394 = vpack.c.b16 %v1379, %v1378
        %v1395 = vpack.c.b16 %v1381, %v1380
        %v1396 = vpack.c.b16 %v1383, %v1382
        %v1397 = vpack.c.b16 %v1385, %v1384
        %v1398 = vpack.c.b16 %v1387, %v1386
        %v1399 = vpack.c.b16 %v1389, %v1388
        %v1400 = vpack.c.b16 %v1391, %v1390
        %v1401 = vpack.c.b16 %v1393, %v1392
        %1410 = vmatpush.bf16.msra.mxu0 %v1401
        %1411 = vmatpush.bf16.msra.mxu0 %v1400
        %1412 = vmatpush.bf16.msra.mxu0 %v1399
        %1413 = vmatpush.bf16.msra.mxu0 %v1398
        %1414 = vmatpush.bf16.msra.mxu0 %v1397
        %1415 = vmatpush.bf16.msra.mxu0 %v1396
        %1416 = vmatpush.bf16.msra.mxu0 %v1395
        %1417 = vmatpush.bf16.msra.mxu0 %v1394
        %1418 = vmatmul.bf16.gmra.mxu0 %v1354
        %v1419 = vpop.f32.mrf.mxu0
        %v1420 = vadd.f32 0.0, %v1419
        %v1421 = vpop.f32.mrf.mxu0
        %v1422 = vadd.f32 0.0, %v1421
        %1423 = vmatmul.bf16.gmra.mxu0 %v1355
        %v1424 = vpop.f32.mrf.mxu0
        %v1425 = vadd.f32 0.0, %v1424
        %v1426 = vpop.f32.mrf.mxu0
        %v1427 = vadd.f32 0.0, %v1426
        %1428 = vmatmul.bf16.gmra.mxu0 %v1356
        %v1429 = vpop.f32.mrf.mxu0
        %v1430 = vadd.f32 0.0, %v1429
        %v1431 = vpop.f32.mrf.mxu0
        %v1432 = vadd.f32 0.0, %v1431
        %1433 = vmatmul.bf16.gmra.mxu0 %v1357
        %v1434 = vpop.f32.mrf.mxu0
        %v1435 = vadd.f32 0.0, %v1434
        %v1436 = vpop.f32.mrf.mxu0
        %v1437 = vadd.f32 0.0, %v1436
        %1438 = vdwg.mxu0
        %v1439 = vadd.f32 %v1304, %v1420
        %v1440 = vadd.f32 %v1305, %v1422
        %v1441 = vadd.f32 %v1306, %v1425
        %v1442 = vadd.f32 %v1307, %v1427
        %v1443 = vadd.f32 %v1308, %v1430
        %v1444 = vadd.f32 %v1309, %v1432
        %v1445 = vadd.f32 %v1310, %v1435
        %v1446 = vadd.f32 %v1311, %v1437
        %s1447 = scalar_lea.vmem %s293, 80
        %v1448 = vld [vmem:[%s1447] sm:$0xf]
        %v1449 = vld [vmem:[%s1447 + $0x8] sm:$0xf]
        %v1450 = vld [vmem:[%s1447 + $0x10] sm:$0xf]
        %v1451 = vld [vmem:[%s1447 + $0x18] sm:$0xf]
        %v1452 = vld [vmem:[%s1447 + $0x20] sm:$0xf]
        %v1453 = vld [vmem:[%s1447 + $0x28] sm:$0xf]
        %v1454 = vld [vmem:[%s1447 + $0x30] sm:$0xf]
        %v1455 = vld [vmem:[%s1447 + $0x38] sm:$0xf]
        %s1456 = scalar_lea.vmem %s1, 448
        %v1457 = vld [vmem:[%s1456] sm:$0xf]
        %v1458 = vld [vmem:[%s1456 + $0x4] sm:$0xf]
        %v1459 = vld [vmem:[%s1456 + $0x8] sm:$0xf]
        %v1460 = vld [vmem:[%s1456 + $0xc] sm:$0xf]
        %v1461 = vld [vmem:[%s1456 + $0x10] sm:$0xf]
        %v1462 = vld [vmem:[%s1456 + $0x14] sm:$0xf]
        %v1463 = vld [vmem:[%s1456 + $0x18] sm:$0xf]
        %v1464 = vld [vmem:[%s1456 + $0x1c] sm:$0xf]
        %v1465 = vld [vmem:[%s1456 + $0x20] sm:$0xf]
        %v1466 = vld [vmem:[%s1456 + $0x24] sm:$0xf]
        %v1467 = vld [vmem:[%s1456 + $0x28] sm:$0xf]
        %v1468 = vld [vmem:[%s1456 + $0x2c] sm:$0xf]
        %v1469 = vld [vmem:[%s1456 + $0x30] sm:$0xf]
        %v1470 = vld [vmem:[%s1456 + $0x34] sm:$0xf]
        %v1471 = vld [vmem:[%s1456 + $0x38] sm:$0xf]
        %v1472 = vld [vmem:[%s1456 + $0x3c] sm:$0xf]
        %v1481 = vunpack.c.l.b16 %v1448
        %v1482 = vunpack.c.l.b16 %v1449
        %v1483 = vunpack.c.l.b16 %v1450
        %v1484 = vunpack.c.l.b16 %v1451
        %v1485 = vunpack.c.l.b16 %v1452
        %v1486 = vunpack.c.l.b16 %v1453
        %v1487 = vunpack.c.l.b16 %v1454
        %v1488 = vunpack.c.l.b16 %v1455
        %v1489 = vpack.c.b16 %v1482, %v1481
        %v1490 = vpack.c.b16 %v1484, %v1483
        %v1491 = vpack.c.b16 %v1486, %v1485
        %v1492 = vpack.c.b16 %v1488, %v1487
        %v1513 = vunpack.c.l.b16 %v1457
        %v1514 = vunpack.c.l.b16 %v1458
        %v1515 = vunpack.c.l.b16 %v1459
        %v1516 = vunpack.c.l.b16 %v1460
        %v1517 = vunpack.c.l.b16 %v1461
        %v1518 = vunpack.c.l.b16 %v1462
        %v1519 = vunpack.c.l.b16 %v1463
        %v1520 = vunpack.c.l.b16 %v1464
        %v1521 = vunpack.c.l.b16 %v1465
        %v1522 = vunpack.c.l.b16 %v1466
        %v1523 = vunpack.c.l.b16 %v1467
        %v1524 = vunpack.c.l.b16 %v1468
        %v1525 = vunpack.c.l.b16 %v1469
        %v1526 = vunpack.c.l.b16 %v1470
        %v1527 = vunpack.c.l.b16 %v1471
        %v1528 = vunpack.c.l.b16 %v1472
        %v1529 = vpack.c.b16 %v1514, %v1513
        %v1530 = vpack.c.b16 %v1516, %v1515
        %v1531 = vpack.c.b16 %v1518, %v1517
        %v1532 = vpack.c.b16 %v1520, %v1519
        %v1533 = vpack.c.b16 %v1522, %v1521
        %v1534 = vpack.c.b16 %v1524, %v1523
        %v1535 = vpack.c.b16 %v1526, %v1525
        %v1536 = vpack.c.b16 %v1528, %v1527
        %1545 = vmatpush.bf16.msra.mxu0 %v1536
        %1546 = vmatpush.bf16.msra.mxu0 %v1535
        %1547 = vmatpush.bf16.msra.mxu0 %v1534
        %1548 = vmatpush.bf16.msra.mxu0 %v1533
        %1549 = vmatpush.bf16.msra.mxu0 %v1532
        %1550 = vmatpush.bf16.msra.mxu0 %v1531
        %1551 = vmatpush.bf16.msra.mxu0 %v1530
        %1552 = vmatpush.bf16.msra.mxu0 %v1529
        %1553 = vmatmul.bf16.gmra.mxu0 %v1489
        %v1554 = vpop.f32.mrf.mxu0
        %v1555 = vadd.f32 0.0, %v1554
        %v1556 = vpop.f32.mrf.mxu0
        %v1557 = vadd.f32 0.0, %v1556
        %1558 = vmatmul.bf16.gmra.mxu0 %v1490
        %v1559 = vpop.f32.mrf.mxu0
        %v1560 = vadd.f32 0.0, %v1559
        %v1561 = vpop.f32.mrf.mxu0
        %v1562 = vadd.f32 0.0, %v1561
        %1563 = vmatmul.bf16.gmra.mxu0 %v1491
        %v1564 = vpop.f32.mrf.mxu0
        %v1565 = vadd.f32 0.0, %v1564
        %v1566 = vpop.f32.mrf.mxu0
        %v1567 = vadd.f32 0.0, %v1566
        %1568 = vmatmul.bf16.gmra.mxu0 %v1492
        %v1569 = vpop.f32.mrf.mxu0
        %v1570 = vadd.f32 0.0, %v1569
        %v1571 = vpop.f32.mrf.mxu0
        %v1572 = vadd.f32 0.0, %v1571
        %1573 = vdwg.mxu0
        %v1574 = vadd.f32 %v1439, %v1555
        %v1575 = vadd.f32 %v1440, %v1557
        %v1576 = vadd.f32 %v1441, %v1560
        %v1577 = vadd.f32 %v1442, %v1562
        %v1578 = vadd.f32 %v1443, %v1565
        %v1579 = vadd.f32 %v1444, %v1567
        %v1580 = vadd.f32 %v1445, %v1570
        %v1581 = vadd.f32 %v1446, %v1572
        %v1582 = vld [vmem:[%s1312] sm:$0xf]
        %v1583 = vld [vmem:[%s1312 + $0x4] sm:$0x1]
        %v1584 = vld [vmem:[%s1312 + $0x8] sm:$0xf]
        %v1585 = vld [vmem:[%s1312 + $0xc] sm:$0x1]
        %v1586 = vld [vmem:[%s1312 + $0x10] sm:$0xf]
        %v1587 = vld [vmem:[%s1312 + $0x14] sm:$0x1]
        %v1588 = vld [vmem:[%s1312 + $0x18] sm:$0xf]
        %v1589 = vld [vmem:[%s1312 + $0x1c] sm:$0x1]
        %v1590 = vld [vmem:[%s1312 + $0x20] sm:$0xf]
        %v1591 = vld [vmem:[%s1312 + $0x24] sm:$0x1]
        %v1592 = vld [vmem:[%s1312 + $0x28] sm:$0xf]
        %v1593 = vld [vmem:[%s1312 + $0x2c] sm:$0x1]
        %v1594 = vld [vmem:[%s1312 + $0x30] sm:$0xf]
        %v1595 = vld [vmem:[%s1312 + $0x34] sm:$0x1]
        %v1596 = vld [vmem:[%s1312 + $0x38] sm:$0xf]
        %v1597 = vld [vmem:[%s1312 + $0x3c] sm:$0x1]
        %v1599 = vshrl.u32 %v1582, 16
        %v1601 = vrot.slane %v1599, 4
        %v1602 = vshll.u32 %v1582, 16
        %v1604 = vrot.slane %v1602, 5
        %v1605 = vor.u32 %v1601, %v1604
        %v1606 = vrot.slane %v1605, 4
        %v1608 = vshll.u32 %v1583, 16
        %v1610 = vrot.slane %v1608, 5
        %v1611 = vsel %vm565, %v1606, %v1610
        %v1613 = vshrl.u32 %v1584, 16
        %v1615 = vrot.slane %v1613, 4
        %v1616 = vshll.u32 %v1584, 16
        %v1618 = vrot.slane %v1616, 5
        %v1619 = vor.u32 %v1615, %v1618
        %v1620 = vrot.slane %v1619, 4
        %v1622 = vshll.u32 %v1585, 16
        %v1624 = vrot.slane %v1622, 5
        %v1625 = vsel %vm565, %v1620, %v1624
        %v1627 = vshrl.u32 %v1586, 16
        %v1629 = vrot.slane %v1627, 4
        %v1630 = vshll.u32 %v1586, 16
        %v1632 = vrot.slane %v1630, 5
        %v1633 = vor.u32 %v1629, %v1632
        %v1634 = vrot.slane %v1633, 4
        %v1636 = vshll.u32 %v1587, 16
        %v1638 = vrot.slane %v1636, 5
        %v1639 = vsel %vm565, %v1634, %v1638
        %v1641 = vshrl.u32 %v1588, 16
        %v1643 = vrot.slane %v1641, 4
        %v1644 = vshll.u32 %v1588, 16
        %v1646 = vrot.slane %v1644, 5
        %v1647 = vor.u32 %v1643, %v1646
        %v1648 = vrot.slane %v1647, 4
        %v1650 = vshll.u32 %v1589, 16
        %v1652 = vrot.slane %v1650, 5
        %v1653 = vsel %vm565, %v1648, %v1652
        %v1655 = vshrl.u32 %v1590, 16
        %v1657 = vrot.slane %v1655, 4
        %v1658 = vshll.u32 %v1590, 16
        %v1660 = vrot.slane %v1658, 5
        %v1661 = vor.u32 %v1657, %v1660
        %v1662 = vrot.slane %v1661, 4
        %v1664 = vshll.u32 %v1591, 16
        %v1666 = vrot.slane %v1664, 5
        %v1667 = vsel %vm565, %v1662, %v1666
        %v1669 = vshrl.u32 %v1592, 16
        %v1671 = vrot.slane %v1669, 4
        %v1672 = vshll.u32 %v1592, 16
        %v1674 = vrot.slane %v1672, 5
        %v1675 = vor.u32 %v1671, %v1674
        %v1676 = vrot.slane %v1675, 4
        %v1678 = vshll.u32 %v1593, 16
        %v1680 = vrot.slane %v1678, 5
        %v1681 = vsel %vm565, %v1676, %v1680
        %v1683 = vshrl.u32 %v1594, 16
        %v1685 = vrot.slane %v1683, 4
        %v1686 = vshll.u32 %v1594, 16
        %v1688 = vrot.slane %v1686, 5
        %v1689 = vor.u32 %v1685, %v1688
        %v1690 = vrot.slane %v1689, 4
        %v1692 = vshll.u32 %v1595, 16
        %v1694 = vrot.slane %v1692, 5
        %v1695 = vsel %vm565, %v1690, %v1694
        %v1697 = vshrl.u32 %v1596, 16
        %v1699 = vrot.slane %v1697, 4
        %v1700 = vshll.u32 %v1596, 16
        %v1702 = vrot.slane %v1700, 5
        %v1703 = vor.u32 %v1699, %v1702
        %v1704 = vrot.slane %v1703, 4
        %v1706 = vshll.u32 %v1597, 16
        %v1708 = vrot.slane %v1706, 5
        %v1709 = vsel %vm565, %v1704, %v1708
        %s1710 = scalar_lea.vmem %s1, 512
        %v1711 = vld [vmem:[%s1710] sm:$0xf]
        %v1712 = vld [vmem:[%s1710 + $0x4] sm:$0xf]
        %v1713 = vld [vmem:[%s1710 + $0x8] sm:$0xf]
        %v1714 = vld [vmem:[%s1710 + $0xc] sm:$0xf]
        %v1715 = vld [vmem:[%s1710 + $0x10] sm:$0xf]
        %v1716 = vld [vmem:[%s1710 + $0x14] sm:$0xf]
        %v1717 = vld [vmem:[%s1710 + $0x18] sm:$0xf]
        %v1718 = vld [vmem:[%s1710 + $0x1c] sm:$0xf]
        %v1719 = vld [vmem:[%s1710 + $0x20] sm:$0xf]
        %v1720 = vld [vmem:[%s1710 + $0x24] sm:$0xf]
        %v1721 = vld [vmem:[%s1710 + $0x28] sm:$0xf]
        %v1722 = vld [vmem:[%s1710 + $0x2c] sm:$0xf]
        %v1723 = vld [vmem:[%s1710 + $0x30] sm:$0xf]
        %v1724 = vld [vmem:[%s1710 + $0x34] sm:$0xf]
        %v1725 = vld [vmem:[%s1710 + $0x38] sm:$0xf]
        %v1726 = vld [vmem:[%s1710 + $0x3c] sm:$0xf]
        %v1727 = vunpack.c.l.b16 %v1611
        %v1728 = vunpack.c.l.b16 %v1625
        %v1729 = vunpack.c.l.b16 %v1639
        %v1730 = vunpack.c.l.b16 %v1653
        %v1731 = vunpack.c.l.b16 %v1667
        %v1732 = vunpack.c.l.b16 %v1681
        %v1733 = vunpack.c.l.b16 %v1695
        %v1734 = vunpack.c.l.b16 %v1709
        %v1735 = vpack.c.b16 %v1728, %v1727
        %v1736 = vpack.c.b16 %v1730, %v1729
        %v1737 = vpack.c.b16 %v1732, %v1731
        %v1738 = vpack.c.b16 %v1734, %v1733
        %v1759 = vunpack.c.l.b16 %v1711
        %v1760 = vunpack.c.l.b16 %v1712
        %v1761 = vunpack.c.l.b16 %v1713
        %v1762 = vunpack.c.l.b16 %v1714
        %v1763 = vunpack.c.l.b16 %v1715
        %v1764 = vunpack.c.l.b16 %v1716
        %v1765 = vunpack.c.l.b16 %v1717
        %v1766 = vunpack.c.l.b16 %v1718
        %v1767 = vunpack.c.l.b16 %v1719
        %v1768 = vunpack.c.l.b16 %v1720
        %v1769 = vunpack.c.l.b16 %v1721
        %v1770 = vunpack.c.l.b16 %v1722
        %v1771 = vunpack.c.l.b16 %v1723
        %v1772 = vunpack.c.l.b16 %v1724
        %v1773 = vunpack.c.l.b16 %v1725
        %v1774 = vunpack.c.l.b16 %v1726
        %v1775 = vpack.c.b16 %v1760, %v1759
        %v1776 = vpack.c.b16 %v1762, %v1761
        %v1777 = vpack.c.b16 %v1764, %v1763
        %v1778 = vpack.c.b16 %v1766, %v1765
        %v1779 = vpack.c.b16 %v1768, %v1767
        %v1780 = vpack.c.b16 %v1770, %v1769
        %v1781 = vpack.c.b16 %v1772, %v1771
        %v1782 = vpack.c.b16 %v1774, %v1773
        %1791 = vmatpush.bf16.msra.mxu0 %v1782
        %1792 = vmatpush.bf16.msra.mxu0 %v1781
        %1793 = vmatpush.bf16.msra.mxu0 %v1780
        %1794 = vmatpush.bf16.msra.mxu0 %v1779
        %1795 = vmatpush.bf16.msra.mxu0 %v1778
        %1796 = vmatpush.bf16.msra.mxu0 %v1777
        %1797 = vmatpush.bf16.msra.mxu0 %v1776
        %1798 = vmatpush.bf16.msra.mxu0 %v1775
        %1799 = vmatmul.bf16.gmra.mxu0 %v1735
        %v1800 = vpop.f32.mrf.mxu0
        %v1801 = vadd.f32 0.0, %v1800
        %v1802 = vpop.f32.mrf.mxu0
        %v1803 = vadd.f32 0.0, %v1802
        %1804 = vmatmul.bf16.gmra.mxu0 %v1736
        %v1805 = vpop.f32.mrf.mxu0
        %v1806 = vadd.f32 0.0, %v1805
        %v1807 = vpop.f32.mrf.mxu0
        %v1808 = vadd.f32 0.0, %v1807
        %1809 = vmatmul.bf16.gmra.mxu0 %v1737
        %v1810 = vpop.f32.mrf.mxu0
        %v1811 = vadd.f32 0.0, %v1810
        %v1812 = vpop.f32.mrf.mxu0
        %v1813 = vadd.f32 0.0, %v1812
        %1814 = vmatmul.bf16.gmra.mxu0 %v1738
        %v1815 = vpop.f32.mrf.mxu0
        %v1816 = vadd.f32 0.0, %v1815
        %v1817 = vpop.f32.mrf.mxu0
        %v1818 = vadd.f32 0.0, %v1817
        %1819 = vdwg.mxu0
        %v1820 = vadd.f32 %v1574, %v1801
        %v1821 = vadd.f32 %v1575, %v1803
        %v1822 = vadd.f32 %v1576, %v1806
        %v1823 = vadd.f32 %v1577, %v1808
        %v1824 = vadd.f32 %v1578, %v1811
        %v1825 = vadd.f32 %v1579, %v1813
        %v1826 = vadd.f32 %v1580, %v1816
        %v1827 = vadd.f32 %v1581, %v1818
        %v1828 = vld [vmem:[%s2] sm:$0x1]
        %v1830 = vperm.slane %v1828, 0
        %v1832 = vadd.f32 %v1820, %v1830
        %v1833 = vadd.f32 %v1821, %v1830
        %v1834 = vadd.f32 %v1822, %v1830
        %v1835 = vadd.f32 %v1823, %v1830
        %v1836 = vadd.f32 %v1824, %v1830
        %v1837 = vadd.f32 %v1825, %v1830
        %v1838 = vadd.f32 %v1826, %v1830
        %v1839 = vadd.f32 %v1827, %v1830
        %v1840 = vmax.f32 %v1832, 0.0
        %v1841 = vmax.f32 %v1833, 0.0
        %v1842 = vmax.f32 %v1834, 0.0
        %v1843 = vmax.f32 %v1835, 0.0
        %v1844 = vmax.f32 %v1836, 0.0
        %v1845 = vmax.f32 %v1837, 0.0
        %v1846 = vmax.f32 %v1838, 0.0
        %v1847 = vmax.f32 %v1839, 0.0
        %1848 = vst [vmem:[#allocation2] sm:$0xf] 0
        %1849 = vst [vmem:[#allocation2 + $0x4] sm:$0x1] 0
        %s1850 = scalar_lea.vmem [#allocation2], 72
        %1851 = vst [vmem:[%s1850] sm:$0xf] 0
        %1852 = vst [vmem:[%s1850 + $0x4] sm:$0x1] 0
        %s1853 = scalar_lea.vmem [#allocation2], 8
        %vm1854 = vcmask 1040384
        %vm1855 = vsmask.f32 256
        %vm1856 = vmand %vm1854, %vm1855
        %v1857 = vld [vmem:[%s1853] sm:$0x1]
        %v1858 = vsel %vm1856, 0, %v1857
        %1859 = vst [vmem:[%s1853] sm:$0x1] %v1858
        %v1860 = vld [vmem:[%s1853 + $0x8] sm:$0x1]
        %v1861 = vsel %vm1856, 0, %v1860
        %1862 = vst [vmem:[%s1853 + $0x8] sm:$0x1] %v1861
        %v1863 = vld [vmem:[%s1853 + $0x10] sm:$0x1]
        %v1864 = vsel %vm1856, 0, %v1863
        %1865 = vst [vmem:[%s1853 + $0x10] sm:$0x1] %v1864
        %v1866 = vld [vmem:[%s1853 + $0x18] sm:$0x1]
        %v1867 = vsel %vm1856, 0, %v1866
        %1868 = vst [vmem:[%s1853 + $0x18] sm:$0x1] %v1867
        %v1869 = vld [vmem:[%s1853 + $0x20] sm:$0x1]
        %v1870 = vsel %vm1856, 0, %v1869
        %1871 = vst [vmem:[%s1853 + $0x20] sm:$0x1] %v1870
        %v1872 = vld [vmem:[%s1853 + $0x28] sm:$0x1]
        %v1873 = vsel %vm1856, 0, %v1872
        %1874 = vst [vmem:[%s1853 + $0x28] sm:$0x1] %v1873
        %v1875 = vld [vmem:[%s1853 + $0x30] sm:$0x1]
        %v1876 = vsel %vm1856, 0, %v1875
        %1877 = vst [vmem:[%s1853 + $0x30] sm:$0x1] %v1876
        %v1878 = vld [vmem:[%s1853 + $0x38] sm:$0x1]
        %v1879 = vsel %vm1856, 0, %v1878
        %1880 = vst [vmem:[%s1853 + $0x38] sm:$0x1] %v1879
        %vm1881 = vsmask.f32 7938
        %vm1882 = vmand %vm1854, %vm1881
        %v1883 = vld [vmem:[%s1853 + $0x4] sm:$0x1]
        %v1884 = vsel %vm1882, 0, %v1883
        %1885 = vst [vmem:[%s1853 + $0x4] sm:$0x1] %v1884
        %v1886 = vld [vmem:[%s1853 + $0xc] sm:$0x1]
        %v1887 = vsel %vm1882, 0, %v1886
        %1888 = vst [vmem:[%s1853 + $0xc] sm:$0x1] %v1887
        %v1889 = vld [vmem:[%s1853 + $0x14] sm:$0x1]
        %v1890 = vsel %vm1882, 0, %v1889
        %1891 = vst [vmem:[%s1853 + $0x14] sm:$0x1] %v1890
        %v1892 = vld [vmem:[%s1853 + $0x1c] sm:$0x1]
        %v1893 = vsel %vm1882, 0, %v1892
        %1894 = vst [vmem:[%s1853 + $0x1c] sm:$0x1] %v1893
        %v1895 = vld [vmem:[%s1853 + $0x24] sm:$0x1]
        %v1896 = vsel %vm1882, 0, %v1895
        %1897 = vst [vmem:[%s1853 + $0x24] sm:$0x1] %v1896
        %v1898 = vld [vmem:[%s1853 + $0x2c] sm:$0x1]
        %v1899 = vsel %vm1882, 0, %v1898
        %1900 = vst [vmem:[%s1853 + $0x2c] sm:$0x1] %v1899
        %v1901 = vld [vmem:[%s1853 + $0x34] sm:$0x1]
        %v1902 = vsel %vm1882, 0, %v1901
        %1903 = vst [vmem:[%s1853 + $0x34] sm:$0x1] %v1902
        %v1904 = vld [vmem:[%s1853 + $0x3c] sm:$0x1]
        %v1905 = vsel %vm1882, 0, %v1904
        %1906 = vst [vmem:[%s1853 + $0x3c] sm:$0x1] %v1905
        %v1907 = vpack.c.bf16 %v1840, %v1840
        %v1908 = vpack.c.bf16 %v1841, %v1841
        %v1909 = vpack.c.bf16 %v1842, %v1842
        %v1910 = vpack.c.bf16 %v1843, %v1843
        %v1911 = vpack.c.bf16 %v1844, %v1844
        %v1912 = vpack.c.bf16 %v1845, %v1845
        %v1913 = vpack.c.bf16 %v1846, %v1846
        %v1914 = vpack.c.bf16 %v1847, %v1847
        %v1916 = vshrl.u32 %v1907, 16
        %v1918 = vrot.slane %v1916, 7
        %v1919 = vshll.u32 %v1907, 16
        %v1921 = vor.u32 %v1918, %v1919
        %v1922 = vrot.slane %v1918, 4
        %v1924 = vshrl.u32 %v1908, 16
        %v1926 = vrot.slane %v1924, 7
        %v1927 = vshll.u32 %v1908, 16
        %v1929 = vor.u32 %v1926, %v1927
        %v1930 = vrot.slane %v1926, 4
        %v1932 = vshrl.u32 %v1909, 16
        %v1934 = vrot.slane %v1932, 7
        %v1935 = vshll.u32 %v1909, 16
        %v1937 = vor.u32 %v1934, %v1935
        %v1938 = vrot.slane %v1934, 4
        %v1940 = vshrl.u32 %v1910, 16
        %v1942 = vrot.slane %v1940, 7
        %v1943 = vshll.u32 %v1910, 16
        %v1945 = vor.u32 %v1942, %v1943
        %v1946 = vrot.slane %v1942, 4
        %v1948 = vshrl.u32 %v1911, 16
        %v1950 = vrot.slane %v1948, 7
        %v1951 = vshll.u32 %v1911, 16
        %v1953 = vor.u32 %v1950, %v1951
        %v1954 = vrot.slane %v1950, 4
        %v1956 = vshrl.u32 %v1912, 16
        %v1958 = vrot.slane %v1956, 7
        %v1959 = vshll.u32 %v1912, 16
        %v1961 = vor.u32 %v1958, %v1959
        %v1962 = vrot.slane %v1958, 4
        %v1964 = vshrl.u32 %v1913, 16
        %v1966 = vrot.slane %v1964, 7
        %v1967 = vshll.u32 %v1913, 16
        %v1969 = vor.u32 %v1966, %v1967
        %v1970 = vrot.slane %v1966, 4
        %v1972 = vshrl.u32 %v1914, 16
        %v1974 = vrot.slane %v1972, 7
        %v1975 = vshll.u32 %v1914, 16
        %v1977 = vor.u32 %v1974, %v1975
        %v1978 = vrot.slane %v1974, 4
        %vm1995 = vcmask 1043456
        %vm1996 = vmand %vm1995, %vm1881
        %v1997 = vld [vmem:[%s1853] sm:$0xf]
        %v1998 = vsel %vm1996, %v1921, %v1997
        %1999 = vst [vmem:[%s1853] sm:$0xf] %v1998
        %v2000 = vld [vmem:[%s1853 + $0x4] sm:$0x1]
        %v2001 = vsel %vm1856, %v1922, %v2000
        %2002 = vst [vmem:[%s1853 + $0x4] sm:$0x1] %v2001
        %v2003 = vld [vmem:[%s1853 + $0x8] sm:$0xf]
        %v2004 = vsel %vm1996, %v1929, %v2003
        %2005 = vst [vmem:[%s1853 + $0x8] sm:$0xf] %v2004
        %v2006 = vld [vmem:[%s1853 + $0xc] sm:$0x1]
        %v2007 = vsel %vm1856, %v1930, %v2006
        %2008 = vst [vmem:[%s1853 + $0xc] sm:$0x1] %v2007
        %v2009 = vld [vmem:[%s1853 + $0x10] sm:$0xf]
        %v2010 = vsel %vm1996, %v1937, %v2009
        %2011 = vst [vmem:[%s1853 + $0x10] sm:$0xf] %v2010
        %v2012 = vld [vmem:[%s1853 + $0x14] sm:$0x1]
        %v2013 = vsel %vm1856, %v1938, %v2012
        %2014 = vst [vmem:[%s1853 + $0x14] sm:$0x1] %v2013
        %v2015 = vld [vmem:[%s1853 + $0x18] sm:$0xf]
        %v2016 = vsel %vm1996, %v1945, %v2015
        %2017 = vst [vmem:[%s1853 + $0x18] sm:$0xf] %v2016
        %v2018 = vld [vmem:[%s1853 + $0x1c] sm:$0x1]
        %v2019 = vsel %vm1856, %v1946, %v2018
        %2020 = vst [vmem:[%s1853 + $0x1c] sm:$0x1] %v2019
        %v2021 = vld [vmem:[%s1853 + $0x20] sm:$0xf]
        %v2022 = vsel %vm1996, %v1953, %v2021
        %2023 = vst [vmem:[%s1853 + $0x20] sm:$0xf] %v2022
        %v2024 = vld [vmem:[%s1853 + $0x24] sm:$0x1]
        %v2025 = vsel %vm1856, %v1954, %v2024
        %2026 = vst [vmem:[%s1853 + $0x24] sm:$0x1] %v2025
        %v2027 = vld [vmem:[%s1853 + $0x28] sm:$0xf]
        %v2028 = vsel %vm1996, %v1961, %v2027
        %2029 = vst [vmem:[%s1853 + $0x28] sm:$0xf] %v2028
        %v2030 = vld [vmem:[%s1853 + $0x2c] sm:$0x1]
        %v2031 = vsel %vm1856, %v1962, %v2030
        %2032 = vst [vmem:[%s1853 + $0x2c] sm:$0x1] %v2031
        %v2033 = vld [vmem:[%s1853 + $0x30] sm:$0xf]
        %v2034 = vsel %vm1996, %v1969, %v2033
        %2035 = vst [vmem:[%s1853 + $0x30] sm:$0xf] %v2034
        %v2036 = vld [vmem:[%s1853 + $0x34] sm:$0x1]
        %v2037 = vsel %vm1856, %v1970, %v2036
        %2038 = vst [vmem:[%s1853 + $0x34] sm:$0x1] %v2037
        %v2039 = vld [vmem:[%s1853 + $0x38] sm:$0xf]
        %v2040 = vsel %vm1996, %v1977, %v2039
        %2041 = vst [vmem:[%s1853 + $0x38] sm:$0xf] %v2040
        %v2042 = vld [vmem:[%s1853 + $0x3c] sm:$0x1]
        %v2043 = vsel %vm1856, %v1978, %v2042
        %2044 = vst [vmem:[%s1853 + $0x3c] sm:$0x1] %v2043
        %v2045 = vld [vmem:[%s931] sm:$0xf]
        %v2046 = vld [vmem:[%s931 + $0x8] sm:$0xf]
        %v2047 = vld [vmem:[%s931 + $0x10] sm:$0xf]
        %v2048 = vld [vmem:[%s931 + $0x18] sm:$0xf]
        %v2049 = vld [vmem:[%s931 + $0x20] sm:$0xf]
        %v2050 = vld [vmem:[%s931 + $0x28] sm:$0xf]
        %v2051 = vld [vmem:[%s931 + $0x30] sm:$0xf]
        %v2052 = vld [vmem:[%s931 + $0x38] sm:$0xf]
        %v2053 = vld [vmem:[%s5] sm:$0xf]
        %v2054 = vld [vmem:[%s5 + $0x4] sm:$0xf]
        %v2055 = vld [vmem:[%s5 + $0x8] sm:$0xf]
        %v2056 = vld [vmem:[%s5 + $0xc] sm:$0xf]
        %v2057 = vld [vmem:[%s5 + $0x10] sm:$0xf]
        %v2058 = vld [vmem:[%s5 + $0x14] sm:$0xf]
        %v2059 = vld [vmem:[%s5 + $0x18] sm:$0xf]
        %v2060 = vld [vmem:[%s5 + $0x1c] sm:$0xf]
        %v2061 = vld [vmem:[%s5 + $0x20] sm:$0xf]
        %v2062 = vld [vmem:[%s5 + $0x24] sm:$0xf]
        %v2063 = vld [vmem:[%s5 + $0x28] sm:$0xf]
        %v2064 = vld [vmem:[%s5 + $0x2c] sm:$0xf]
        %v2065 = vld [vmem:[%s5 + $0x30] sm:$0xf]
        %v2066 = vld [vmem:[%s5 + $0x34] sm:$0xf]
        %v2067 = vld [vmem:[%s5 + $0x38] sm:$0xf]
        %v2068 = vld [vmem:[%s5 + $0x3c] sm:$0xf]
        %v2069 = vld [vmem:[%s6] sm:$0x1]
        %v2071 = vperm.slane %v2069, 0
        %v2081 = vunpack.c.l.b16 %v2045
        %v2082 = vunpack.c.l.b16 %v2046
        %v2083 = vunpack.c.l.b16 %v2047
        %v2084 = vunpack.c.l.b16 %v2048
        %v2085 = vunpack.c.l.b16 %v2049
        %v2086 = vunpack.c.l.b16 %v2050
        %v2087 = vunpack.c.l.b16 %v2051
        %v2088 = vunpack.c.l.b16 %v2052
        %v2089 = vpack.c.b16 %v2082, %v2081
        %v2090 = vpack.c.b16 %v2084, %v2083
        %v2091 = vpack.c.b16 %v2086, %v2085
        %v2092 = vpack.c.b16 %v2088, %v2087
        %v2113 = vunpack.c.l.b16 %v2053
        %v2114 = vunpack.c.l.b16 %v2054
        %v2115 = vunpack.c.l.b16 %v2055
        %v2116 = vunpack.c.l.b16 %v2056
        %v2117 = vunpack.c.l.b16 %v2057
        %v2118 = vunpack.c.l.b16 %v2058
        %v2119 = vunpack.c.l.b16 %v2059
        %v2120 = vunpack.c.l.b16 %v2060
        %v2121 = vunpack.c.l.b16 %v2061
        %v2122 = vunpack.c.l.b16 %v2062
        %v2123 = vunpack.c.l.b16 %v2063
        %v2124 = vunpack.c.l.b16 %v2064
        %v2125 = vunpack.c.l.b16 %v2065
        %v2126 = vunpack.c.l.b16 %v2066
        %v2127 = vunpack.c.l.b16 %v2067
        %v2128 = vunpack.c.l.b16 %v2068
        %v2129 = vpack.c.b16 %v2114, %v2113
        %v2130 = vpack.c.b16 %v2116, %v2115
        %v2131 = vpack.c.b16 %v2118, %v2117
        %v2132 = vpack.c.b16 %v2120, %v2119
        %v2133 = vpack.c.b16 %v2122, %v2121
        %v2134 = vpack.c.b16 %v2124, %v2123
        %v2135 = vpack.c.b16 %v2126, %v2125
        %v2136 = vpack.c.b16 %v2128, %v2127
        %2145 = vmatpush.bf16.msra.mxu0 %v2136
        %2146 = vmatpush.bf16.msra.mxu0 %v2135
        %2147 = vmatpush.bf16.msra.mxu0 %v2134
        %2148 = vmatpush.bf16.msra.mxu0 %v2133
        %2149 = vmatpush.bf16.msra.mxu0 %v2132
        %2150 = vmatpush.bf16.msra.mxu0 %v2131
        %2151 = vmatpush.bf16.msra.mxu0 %v2130
        %2152 = vmatpush.bf16.msra.mxu0 %v2129
        %2153 = vmatmul.bf16.gmra.mxu0 %v2089
        %v2154 = vpop.f32.mrf.mxu0
        %v2155 = vadd.f32 %v2071, %v2154
        %v2156 = vpop.f32.mrf.mxu0
        %v2157 = vadd.f32 %v2071, %v2156
        %2158 = vmatmul.bf16.gmra.mxu0 %v2090
        %v2159 = vpop.f32.mrf.mxu0
        %v2160 = vadd.f32 %v2071, %v2159
        %v2161 = vpop.f32.mrf.mxu0
        %v2162 = vadd.f32 %v2071, %v2161
        %2163 = vmatmul.bf16.gmra.mxu0 %v2091
        %v2164 = vpop.f32.mrf.mxu0
        %v2165 = vadd.f32 %v2071, %v2164
        %v2166 = vpop.f32.mrf.mxu0
        %v2167 = vadd.f32 %v2071, %v2166
        %2168 = vmatmul.bf16.gmra.mxu0 %v2092
        %v2169 = vpop.f32.mrf.mxu0
        %v2170 = vadd.f32 %v2071, %v2169
        %v2171 = vpop.f32.mrf.mxu0
        %v2172 = vadd.f32 %v2071, %v2171
        %2173 = vdwg.mxu0
        %v2174 = vld [vmem:[#allocation2] sm:$0xf]
        %v2175 = vld [vmem:[#allocation2 + $0x8] sm:$0xf]
        %v2176 = vld [vmem:[#allocation2 + $0x10] sm:$0xf]
        %v2177 = vld [vmem:[#allocation2 + $0x18] sm:$0xf]
        %v2178 = vld [vmem:[#allocation2 + $0x20] sm:$0xf]
        %v2179 = vld [vmem:[#allocation2 + $0x28] sm:$0xf]
        %v2180 = vld [vmem:[#allocation2 + $0x30] sm:$0xf]
        %v2181 = vld [vmem:[#allocation2 + $0x38] sm:$0xf]
        %v2182 = vld [vmem:[#allocation3] sm:$0xf]
        %v2183 = vld [vmem:[#allocation3 + $0x4] sm:$0xf]
        %v2184 = vld [vmem:[#allocation3 + $0x8] sm:$0xf]
        %v2185 = vld [vmem:[#allocation3 + $0xc] sm:$0xf]
        %v2186 = vld [vmem:[#allocation3 + $0x10] sm:$0xf]
        %v2187 = vld [vmem:[#allocation3 + $0x14] sm:$0xf]
        %v2188 = vld [vmem:[#allocation3 + $0x18] sm:$0xf]
        %v2189 = vld [vmem:[#allocation3 + $0x1c] sm:$0xf]
        %v2190 = vld [vmem:[#allocation3 + $0x20] sm:$0xf]
        %v2191 = vld [vmem:[#allocation3 + $0x24] sm:$0xf]
        %v2192 = vld [vmem:[#allocation3 + $0x28] sm:$0xf]
        %v2193 = vld [vmem:[#allocation3 + $0x2c] sm:$0xf]
        %v2194 = vld [vmem:[#allocation3 + $0x30] sm:$0xf]
        %v2195 = vld [vmem:[#allocation3 + $0x34] sm:$0xf]
        %v2196 = vld [vmem:[#allocation3 + $0x38] sm:$0xf]
        %v2197 = vld [vmem:[#allocation3 + $0x3c] sm:$0xf]
        %v2198 = vld [vmem:[#allocation2 + $0x4] sm:$0x1]
        %v2199 = vld [vmem:[#allocation2 + $0xc] sm:$0x1]
        %v2200 = vld [vmem:[#allocation2 + $0x14] sm:$0x1]
        %v2201 = vld [vmem:[#allocation2 + $0x1c] sm:$0x1]
        %v2202 = vld [vmem:[#allocation2 + $0x24] sm:$0x1]
        %v2203 = vld [vmem:[#allocation2 + $0x2c] sm:$0x1]
        %v2204 = vld [vmem:[#allocation2 + $0x34] sm:$0x1]
        %v2205 = vld [vmem:[#allocation2 + $0x3c] sm:$0x1]
        %v2207 = vshrl.u32 %v2174, 16
        %v2209 = vrot.slane %v2207, 4
        %v2210 = vshll.u32 %v2174, 16
        %v2212 = vrot.slane %v2210, 5
        %v2213 = vor.u32 %v2209, %v2212
        %v2214 = vrot.slane %v2213, 4
        %v2216 = vshll.u32 %v2198, 16
        %v2218 = vrot.slane %v2216, 5
        %v2219 = vsel %vm565, %v2214, %v2218
        %v2221 = vshrl.u32 %v2175, 16
        %v2223 = vrot.slane %v2221, 4
        %v2224 = vshll.u32 %v2175, 16
        %v2226 = vrot.slane %v2224, 5
        %v2227 = vor.u32 %v2223, %v2226
        %v2228 = vrot.slane %v2227, 4
        %v2230 = vshll.u32 %v2199, 16
        %v2232 = vrot.slane %v2230, 5
        %v2233 = vsel %vm565, %v2228, %v2232
        %v2235 = vshrl.u32 %v2176, 16
        %v2237 = vrot.slane %v2235, 4
        %v2238 = vshll.u32 %v2176, 16
        %v2240 = vrot.slane %v2238, 5
        %v2241 = vor.u32 %v2237, %v2240
        %v2242 = vrot.slane %v2241, 4
        %v2244 = vshll.u32 %v2200, 16
        %v2246 = vrot.slane %v2244, 5
        %v2247 = vsel %vm565, %v2242, %v2246
        %v2249 = vshrl.u32 %v2177, 16
        %v2251 = vrot.slane %v2249, 4
        %v2252 = vshll.u32 %v2177, 16
        %v2254 = vrot.slane %v2252, 5
        %v2255 = vor.u32 %v2251, %v2254
        %v2256 = vrot.slane %v2255, 4
        %v2258 = vshll.u32 %v2201, 16
        %v2260 = vrot.slane %v2258, 5
        %v2261 = vsel %vm565, %v2256, %v2260
        %v2263 = vshrl.u32 %v2178, 16
        %v2265 = vrot.slane %v2263, 4
        %v2266 = vshll.u32 %v2178, 16
        %v2268 = vrot.slane %v2266, 5
        %v2269 = vor.u32 %v2265, %v2268
        %v2270 = vrot.slane %v2269, 4
        %v2272 = vshll.u32 %v2202, 16
        %v2274 = vrot.slane %v2272, 5
        %v2275 = vsel %vm565, %v2270, %v2274
        %v2277 = vshrl.u32 %v2179, 16
        %v2279 = vrot.slane %v2277, 4
        %v2280 = vshll.u32 %v2179, 16
        %v2282 = vrot.slane %v2280, 5
        %v2283 = vor.u32 %v2279, %v2282
        %v2284 = vrot.slane %v2283, 4
        %v2286 = vshll.u32 %v2203, 16
        %v2288 = vrot.slane %v2286, 5
        %v2289 = vsel %vm565, %v2284, %v2288
        %v2291 = vshrl.u32 %v2180, 16
        %v2293 = vrot.slane %v2291, 4
        %v2294 = vshll.u32 %v2180, 16
        %v2296 = vrot.slane %v2294, 5
        %v2297 = vor.u32 %v2293, %v2296
        %v2298 = vrot.slane %v2297, 4
        %v2300 = vshll.u32 %v2204, 16
        %v2302 = vrot.slane %v2300, 5
        %v2303 = vsel %vm565, %v2298, %v2302
        %v2305 = vshrl.u32 %v2181, 16
        %v2307 = vrot.slane %v2305, 4
        %v2308 = vshll.u32 %v2181, 16
        %v2310 = vrot.slane %v2308, 5
        %v2311 = vor.u32 %v2307, %v2310
        %v2312 = vrot.slane %v2311, 4
        %v2314 = vshll.u32 %v2205, 16
        %v2316 = vrot.slane %v2314, 5
        %v2317 = vsel %vm565, %v2312, %v2316
        %s2318 = scalar_lea.vmem [#allocation3], 64
        %v2319 = vld [vmem:[%s2318] sm:$0xf]
        %v2320 = vld [vmem:[%s2318 + $0x4] sm:$0xf]
        %v2321 = vld [vmem:[%s2318 + $0x8] sm:$0xf]
        %v2322 = vld [vmem:[%s2318 + $0xc] sm:$0xf]
        %v2323 = vld [vmem:[%s2318 + $0x10] sm:$0xf]
        %v2324 = vld [vmem:[%s2318 + $0x14] sm:$0xf]
        %v2325 = vld [vmem:[%s2318 + $0x18] sm:$0xf]
        %v2326 = vld [vmem:[%s2318 + $0x1c] sm:$0xf]
        %v2327 = vld [vmem:[%s2318 + $0x20] sm:$0xf]
        %v2328 = vld [vmem:[%s2318 + $0x24] sm:$0xf]
        %v2329 = vld [vmem:[%s2318 + $0x28] sm:$0xf]
        %v2330 = vld [vmem:[%s2318 + $0x2c] sm:$0xf]
        %v2331 = vld [vmem:[%s2318 + $0x30] sm:$0xf]
        %v2332 = vld [vmem:[%s2318 + $0x34] sm:$0xf]
        %v2333 = vld [vmem:[%s2318 + $0x38] sm:$0xf]
        %v2334 = vld [vmem:[%s2318 + $0x3c] sm:$0xf]
        %v2335 = vunpack.c.l.b16 %v2219
        %v2336 = vunpack.c.l.b16 %v2233
        %v2337 = vunpack.c.l.b16 %v2247
        %v2338 = vunpack.c.l.b16 %v2261
        %v2339 = vunpack.c.l.b16 %v2275
        %v2340 = vunpack.c.l.b16 %v2289
        %v2341 = vunpack.c.l.b16 %v2303
        %v2342 = vunpack.c.l.b16 %v2317
        %v2343 = vpack.c.b16 %v2336, %v2335
        %v2344 = vpack.c.b16 %v2338, %v2337
        %v2345 = vpack.c.b16 %v2340, %v2339
        %v2346 = vpack.c.b16 %v2342, %v2341
        %v2367 = vunpack.c.l.b16 %v2319
        %v2368 = vunpack.c.l.b16 %v2320
        %v2369 = vunpack.c.l.b16 %v2321
        %v2370 = vunpack.c.l.b16 %v2322
        %v2371 = vunpack.c.l.b16 %v2323
        %v2372 = vunpack.c.l.b16 %v2324
        %v2373 = vunpack.c.l.b16 %v2325
        %v2374 = vunpack.c.l.b16 %v2326
        %v2375 = vunpack.c.l.b16 %v2327
        %v2376 = vunpack.c.l.b16 %v2328
        %v2377 = vunpack.c.l.b16 %v2329
        %v2378 = vunpack.c.l.b16 %v2330
        %v2379 = vunpack.c.l.b16 %v2331
        %v2380 = vunpack.c.l.b16 %v2332
        %v2381 = vunpack.c.l.b16 %v2333
        %v2382 = vunpack.c.l.b16 %v2334
        %v2383 = vpack.c.b16 %v2368, %v2367
        %v2384 = vpack.c.b16 %v2370, %v2369
        %v2385 = vpack.c.b16 %v2372, %v2371
        %v2386 = vpack.c.b16 %v2374, %v2373
        %v2387 = vpack.c.b16 %v2376, %v2375
        %v2388 = vpack.c.b16 %v2378, %v2377
        %v2389 = vpack.c.b16 %v2380, %v2379
        %v2390 = vpack.c.b16 %v2382, %v2381
        %2399 = vmatpush.bf16.msra.mxu0 %v2390
        %2400 = vmatpush.bf16.msra.mxu0 %v2389
        %2401 = vmatpush.bf16.msra.mxu0 %v2388
        %2402 = vmatpush.bf16.msra.mxu0 %v2387
        %2403 = vmatpush.bf16.msra.mxu0 %v2386
        %2404 = vmatpush.bf16.msra.mxu0 %v2385
        %2405 = vmatpush.bf16.msra.mxu0 %v2384
        %2406 = vmatpush.bf16.msra.mxu0 %v2383
        %2407 = vmatmul.bf16.gmra.mxu0 %v2343
        %v2408 = vpop.f32.mrf.mxu0
        %v2409 = vadd.f32 0.0, %v2408
        %v2410 = vpop.f32.mrf.mxu0
        %v2411 = vadd.f32 0.0, %v2410
        %2412 = vmatmul.bf16.gmra.mxu0 %v2344
        %v2413 = vpop.f32.mrf.mxu0
        %v2414 = vadd.f32 0.0, %v2413
        %v2415 = vpop.f32.mrf.mxu0
        %v2416 = vadd.f32 0.0, %v2415
        %2417 = vmatmul.bf16.gmra.mxu0 %v2345
        %v2418 = vpop.f32.mrf.mxu0
        %v2419 = vadd.f32 0.0, %v2418
        %v2420 = vpop.f32.mrf.mxu0
        %v2421 = vadd.f32 0.0, %v2420
        %2422 = vmatmul.bf16.gmra.mxu0 %v2346
        %v2423 = vpop.f32.mrf.mxu0
        %v2424 = vadd.f32 0.0, %v2423
        %v2425 = vpop.f32.mrf.mxu0
        %v2426 = vadd.f32 0.0, %v2425
        %2427 = vdwg.mxu0
        %v2436 = vunpack.c.l.b16 %v2174
        %v2437 = vunpack.c.l.b16 %v2175
        %v2438 = vunpack.c.l.b16 %v2176
        %v2439 = vunpack.c.l.b16 %v2177
        %v2440 = vunpack.c.l.b16 %v2178
        %v2441 = vunpack.c.l.b16 %v2179
        %v2442 = vunpack.c.l.b16 %v2180
        %v2443 = vunpack.c.l.b16 %v2181
        %v2444 = vpack.c.b16 %v2437, %v2436
        %v2445 = vpack.c.b16 %v2439, %v2438
        %v2446 = vpack.c.b16 %v2441, %v2440
        %v2447 = vpack.c.b16 %v2443, %v2442
        %v2468 = vunpack.c.l.b16 %v2182
        %v2469 = vunpack.c.l.b16 %v2183
        %v2470 = vunpack.c.l.b16 %v2184
        %v2471 = vunpack.c.l.b16 %v2185
        %v2472 = vunpack.c.l.b16 %v2186
        %v2473 = vunpack.c.l.b16 %v2187
        %v2474 = vunpack.c.l.b16 %v2188
        %v2475 = vunpack.c.l.b16 %v2189
        %v2476 = vunpack.c.l.b16 %v2190
        %v2477 = vunpack.c.l.b16 %v2191
        %v2478 = vunpack.c.l.b16 %v2192
        %v2479 = vunpack.c.l.b16 %v2193
        %v2480 = vunpack.c.l.b16 %v2194
        %v2481 = vunpack.c.l.b16 %v2195
        %v2482 = vunpack.c.l.b16 %v2196
        %v2483 = vunpack.c.l.b16 %v2197
        %v2484 = vpack.c.b16 %v2469, %v2468
        %v2485 = vpack.c.b16 %v2471, %v2470
        %v2486 = vpack.c.b16 %v2473, %v2472
        %v2487 = vpack.c.b16 %v2475, %v2474
        %v2488 = vpack.c.b16 %v2477, %v2476
        %v2489 = vpack.c.b16 %v2479, %v2478
        %v2490 = vpack.c.b16 %v2481, %v2480
        %v2491 = vpack.c.b16 %v2483, %v2482
        %2500 = vmatpush.bf16.msra.mxu0 %v2491
        %2501 = vmatpush.bf16.msra.mxu0 %v2490
        %2502 = vmatpush.bf16.msra.mxu0 %v2489
        %2503 = vmatpush.bf16.msra.mxu0 %v2488
        %2504 = vmatpush.bf16.msra.mxu0 %v2487
        %2505 = vmatpush.bf16.msra.mxu0 %v2486
        %2506 = vmatpush.bf16.msra.mxu0 %v2485
        %2507 = vmatpush.bf16.msra.mxu0 %v2484
        %2508 = vmatmul.bf16.gmra.mxu0 %v2444
        %v2509 = vpop.f32.mrf.mxu0
        %v2510 = vadd.f32 %v2409, %v2509
        %v2511 = vpop.f32.mrf.mxu0
        %v2512 = vadd.f32 %v2411, %v2511
        %2513 = vmatmul.bf16.gmra.mxu0 %v2445
        %v2514 = vpop.f32.mrf.mxu0
        %v2515 = vadd.f32 %v2414, %v2514
        %v2516 = vpop.f32.mrf.mxu0
        %v2517 = vadd.f32 %v2416, %v2516
        %2518 = vmatmul.bf16.gmra.mxu0 %v2446
        %v2519 = vpop.f32.mrf.mxu0
        %v2520 = vadd.f32 %v2419, %v2519
        %v2521 = vpop.f32.mrf.mxu0
        %v2522 = vadd.f32 %v2421, %v2521
        %2523 = vmatmul.bf16.gmra.mxu0 %v2447
        %v2524 = vpop.f32.mrf.mxu0
        %v2525 = vadd.f32 %v2424, %v2524
        %v2526 = vpop.f32.mrf.mxu0
        %v2527 = vadd.f32 %v2426, %v2526
        %2528 = vdwg.mxu0
        %v2529 = vld [vmem:[#allocation2] sm:$0xe]
        %v2530 = vld [vmem:[#allocation2 + $0x8] sm:$0xe]
        %v2531 = vld [vmem:[#allocation2 + $0x10] sm:$0xe]
        %v2532 = vld [vmem:[#allocation2 + $0x18] sm:$0xe]
        %v2533 = vld [vmem:[#allocation2 + $0x20] sm:$0xe]
        %v2534 = vld [vmem:[#allocation2 + $0x28] sm:$0xe]
        %v2535 = vld [vmem:[#allocation2 + $0x30] sm:$0xe]
        %v2536 = vld [vmem:[#allocation2 + $0x38] sm:$0xe]
        %vm2553 = vcmask 1042432
        %vm2554 = vcmask 1046532
        %vm2555 = vmor %vm2553, %vm2554
        %v2556 = vrot.slane %v2529, 5
        %v2557 = vrot.slane %v2556, 4
        %v2558 = vrot.slane %v2198, 5
        %v2559 = vsel %vm2555, %v2557, %v2558
        %v2560 = vrot.slane %v2530, 5
        %v2561 = vrot.slane %v2560, 4
        %v2562 = vrot.slane %v2199, 5
        %v2563 = vsel %vm2555, %v2561, %v2562
        %v2564 = vrot.slane %v2531, 5
        %v2565 = vrot.slane %v2564, 4
        %v2566 = vrot.slane %v2200, 5
        %v2567 = vsel %vm2555, %v2565, %v2566
        %v2568 = vrot.slane %v2532, 5
        %v2569 = vrot.slane %v2568, 4
        %v2570 = vrot.slane %v2201, 5
        %v2571 = vsel %vm2555, %v2569, %v2570
        %v2572 = vrot.slane %v2533, 5
        %v2573 = vrot.slane %v2572, 4
        %v2574 = vrot.slane %v2202, 5
        %v2575 = vsel %vm2555, %v2573, %v2574
        %v2576 = vrot.slane %v2534, 5
        %v2577 = vrot.slane %v2576, 4
        %v2578 = vrot.slane %v2203, 5
        %v2579 = vsel %vm2555, %v2577, %v2578
        %v2580 = vrot.slane %v2535, 5
        %v2581 = vrot.slane %v2580, 4
        %v2582 = vrot.slane %v2204, 5
        %v2583 = vsel %vm2555, %v2581, %v2582
        %v2584 = vrot.slane %v2536, 5
        %v2585 = vrot.slane %v2584, 4
        %v2586 = vrot.slane %v2205, 5
        %v2587 = vsel %vm2555, %v2585, %v2586
        %s2588 = scalar_lea.vmem [#allocation3], 128
        %v2589 = vld [vmem:[%s2588] sm:$0xf]
        %v2590 = vld [vmem:[%s2588 + $0x4] sm:$0xf]
        %v2591 = vld [vmem:[%s2588 + $0x8] sm:$0xf]
        %v2592 = vld [vmem:[%s2588 + $0xc] sm:$0xf]
        %v2593 = vld [vmem:[%s2588 + $0x10] sm:$0xf]
        %v2594 = vld [vmem:[%s2588 + $0x14] sm:$0xf]
        %v2595 = vld [vmem:[%s2588 + $0x18] sm:$0xf]
        %v2596 = vld [vmem:[%s2588 + $0x1c] sm:$0xf]
        %v2597 = vld [vmem:[%s2588 + $0x20] sm:$0xf]
        %v2598 = vld [vmem:[%s2588 + $0x24] sm:$0xf]
        %v2599 = vld [vmem:[%s2588 + $0x28] sm:$0xf]
        %v2600 = vld [vmem:[%s2588 + $0x2c] sm:$0xf]
        %v2601 = vld [vmem:[%s2588 + $0x30] sm:$0xf]
        %v2602 = vld [vmem:[%s2588 + $0x34] sm:$0xf]
        %v2603 = vld [vmem:[%s2588 + $0x38] sm:$0xf]
        %v2604 = vld [vmem:[%s2588 + $0x3c] sm:$0xf]
        %v2605 = vunpack.c.l.b16 %v2559
        %v2606 = vunpack.c.l.b16 %v2563
        %v2607 = vunpack.c.l.b16 %v2567
        %v2608 = vunpack.c.l.b16 %v2571
        %v2609 = vunpack.c.l.b16 %v2575
        %v2610 = vunpack.c.l.b16 %v2579
        %v2611 = vunpack.c.l.b16 %v2583
        %v2612 = vunpack.c.l.b16 %v2587
        %v2613 = vpack.c.b16 %v2606, %v2605
        %v2614 = vpack.c.b16 %v2608, %v2607
        %v2615 = vpack.c.b16 %v2610, %v2609
        %v2616 = vpack.c.b16 %v2612, %v2611
        %v2637 = vunpack.c.l.b16 %v2589
        %v2638 = vunpack.c.l.b16 %v2590
        %v2639 = vunpack.c.l.b16 %v2591
        %v2640 = vunpack.c.l.b16 %v2592
        %v2641 = vunpack.c.l.b16 %v2593
        %v2642 = vunpack.c.l.b16 %v2594
        %v2643 = vunpack.c.l.b16 %v2595
        %v2644 = vunpack.c.l.b16 %v2596
        %v2645 = vunpack.c.l.b16 %v2597
        %v2646 = vunpack.c.l.b16 %v2598
        %v2647 = vunpack.c.l.b16 %v2599
        %v2648 = vunpack.c.l.b16 %v2600
        %v2649 = vunpack.c.l.b16 %v2601
        %v2650 = vunpack.c.l.b16 %v2602
        %v2651 = vunpack.c.l.b16 %v2603
        %v2652 = vunpack.c.l.b16 %v2604
        %v2653 = vpack.c.b16 %v2638, %v2637
        %v2654 = vpack.c.b16 %v2640, %v2639
        %v2655 = vpack.c.b16 %v2642, %v2641
        %v2656 = vpack.c.b16 %v2644, %v2643
        %v2657 = vpack.c.b16 %v2646, %v2645
        %v2658 = vpack.c.b16 %v2648, %v2647
        %v2659 = vpack.c.b16 %v2650, %v2649
        %v2660 = vpack.c.b16 %v2652, %v2651
        %2669 = vmatpush.bf16.msra.mxu0 %v2660
        %2670 = vmatpush.bf16.msra.mxu0 %v2659
        %2671 = vmatpush.bf16.msra.mxu0 %v2658
        %2672 = vmatpush.bf16.msra.mxu0 %v2657
        %2673 = vmatpush.bf16.msra.mxu0 %v2656
        %2674 = vmatpush.bf16.msra.mxu0 %v2655
        %2675 = vmatpush.bf16.msra.mxu0 %v2654
        %2676 = vmatpush.bf16.msra.mxu0 %v2653
        %2677 = vmatmul.bf16.gmra.mxu0 %v2613
        %v2678 = vpop.f32.mrf.mxu0
        %v2679 = vadd.f32 0.0, %v2678
        %v2680 = vpop.f32.mrf.mxu0
        %v2681 = vadd.f32 0.0, %v2680
        %2682 = vmatmul.bf16.gmra.mxu0 %v2614
        %v2683 = vpop.f32.mrf.mxu0
        %v2684 = vadd.f32 0.0, %v2683
        %v2685 = vpop.f32.mrf.mxu0
        %v2686 = vadd.f32 0.0, %v2685
        %2687 = vmatmul.bf16.gmra.mxu0 %v2615
        %v2688 = vpop.f32.mrf.mxu0
        %v2689 = vadd.f32 0.0, %v2688
        %v2690 = vpop.f32.mrf.mxu0
        %v2691 = vadd.f32 0.0, %v2690
        %2692 = vmatmul.bf16.gmra.mxu0 %v2616
        %v2693 = vpop.f32.mrf.mxu0
        %v2694 = vadd.f32 0.0, %v2693
        %v2695 = vpop.f32.mrf.mxu0
        %v2696 = vadd.f32 0.0, %v2695
        %2697 = vdwg.mxu0
        %v2698 = vadd.f32 %v2510, %v2679
        %v2699 = vadd.f32 %v2512, %v2681
        %v2700 = vadd.f32 %v2515, %v2684
        %v2701 = vadd.f32 %v2517, %v2686
        %v2702 = vadd.f32 %v2520, %v2689
        %v2703 = vadd.f32 %v2522, %v2691
        %v2704 = vadd.f32 %v2525, %v2694
        %v2705 = vadd.f32 %v2527, %v2696
        %v2706 = vld [vmem:[%s1853] sm:$0xf]
        %v2707 = vld [vmem:[%s1853 + $0x8] sm:$0xf]
        %v2708 = vld [vmem:[%s1853 + $0x10] sm:$0xf]
        %v2709 = vld [vmem:[%s1853 + $0x18] sm:$0xf]
        %v2710 = vld [vmem:[%s1853 + $0x20] sm:$0xf]
        %v2711 = vld [vmem:[%s1853 + $0x28] sm:$0xf]
        %v2712 = vld [vmem:[%s1853 + $0x30] sm:$0xf]
        %v2713 = vld [vmem:[%s1853 + $0x38] sm:$0xf]
        %s2714 = scalar_lea.vmem [#allocation3], 192
        %v2715 = vld [vmem:[%s2714] sm:$0xf]
        %v2716 = vld [vmem:[%s2714 + $0x4] sm:$0xf]
        %v2717 = vld [vmem:[%s2714 + $0x8] sm:$0xf]
        %v2718 = vld [vmem:[%s2714 + $0xc] sm:$0xf]
        %v2719 = vld [vmem:[%s2714 + $0x10] sm:$0xf]
        %v2720 = vld [vmem:[%s2714 + $0x14] sm:$0xf]
        %v2721 = vld [vmem:[%s2714 + $0x18] sm:$0xf]
        %v2722 = vld [vmem:[%s2714 + $0x1c] sm:$0xf]
        %v2723 = vld [vmem:[%s2714 + $0x20] sm:$0xf]
        %v2724 = vld [vmem:[%s2714 + $0x24] sm:$0xf]
        %v2725 = vld [vmem:[%s2714 + $0x28] sm:$0xf]
        %v2726 = vld [vmem:[%s2714 + $0x2c] sm:$0xf]
        %v2727 = vld [vmem:[%s2714 + $0x30] sm:$0xf]
        %v2728 = vld [vmem:[%s2714 + $0x34] sm:$0xf]
        %v2729 = vld [vmem:[%s2714 + $0x38] sm:$0xf]
        %v2730 = vld [vmem:[%s2714 + $0x3c] sm:$0xf]
        %v2739 = vunpack.c.l.b16 %v2706
        %v2740 = vunpack.c.l.b16 %v2707
        %v2741 = vunpack.c.l.b16 %v2708
        %v2742 = vunpack.c.l.b16 %v2709
        %v2743 = vunpack.c.l.b16 %v2710
        %v2744 = vunpack.c.l.b16 %v2711
        %v2745 = vunpack.c.l.b16 %v2712
        %v2746 = vunpack.c.l.b16 %v2713
        %v2747 = vpack.c.b16 %v2740, %v2739
        %v2748 = vpack.c.b16 %v2742, %v2741
        %v2749 = vpack.c.b16 %v2744, %v2743
        %v2750 = vpack.c.b16 %v2746, %v2745
        %v2771 = vunpack.c.l.b16 %v2715
        %v2772 = vunpack.c.l.b16 %v2716
        %v2773 = vunpack.c.l.b16 %v2717
        %v2774 = vunpack.c.l.b16 %v2718
        %v2775 = vunpack.c.l.b16 %v2719
        %v2776 = vunpack.c.l.b16 %v2720
        %v2777 = vunpack.c.l.b16 %v2721
        %v2778 = vunpack.c.l.b16 %v2722
        %v2779 = vunpack.c.l.b16 %v2723
        %v2780 = vunpack.c.l.b16 %v2724
        %v2781 = vunpack.c.l.b16 %v2725
        %v2782 = vunpack.c.l.b16 %v2726
        %v2783 = vunpack.c.l.b16 %v2727
        %v2784 = vunpack.c.l.b16 %v2728
        %v2785 = vunpack.c.l.b16 %v2729
        %v2786 = vunpack.c.l.b16 %v2730
        %v2787 = vpack.c.b16 %v2772, %v2771
        %v2788 = vpack.c.b16 %v2774, %v2773
        %v2789 = vpack.c.b16 %v2776, %v2775
        %v2790 = vpack.c.b16 %v2778, %v2777
        %v2791 = vpack.c.b16 %v2780, %v2779
        %v2792 = vpack.c.b16 %v2782, %v2781
        %v2793 = vpack.c.b16 %v2784, %v2783
        %v2794 = vpack.c.b16 %v2786, %v2785
        %2803 = vmatpush.bf16.msra.mxu0 %v2794
        %2804 = vmatpush.bf16.msra.mxu0 %v2793
        %2805 = vmatpush.bf16.msra.mxu0 %v2792
        %2806 = vmatpush.bf16.msra.mxu0 %v2791
        %2807 = vmatpush.bf16.msra.mxu0 %v2790
        %2808 = vmatpush.bf16.msra.mxu0 %v2789
        %2809 = vmatpush.bf16.msra.mxu0 %v2788
        %2810 = vmatpush.bf16.msra.mxu0 %v2787
        %2811 = vmatmul.bf16.gmra.mxu0 %v2747
        %v2812 = vpop.f32.mrf.mxu0
        %v2813 = vadd.f32 0.0, %v2812
        %v2814 = vpop.f32.mrf.mxu0
        %v2815 = vadd.f32 0.0, %v2814
        %2816 = vmatmul.bf16.gmra.mxu0 %v2748
        %v2817 = vpop.f32.mrf.mxu0
        %v2818 = vadd.f32 0.0, %v2817
        %v2819 = vpop.f32.mrf.mxu0
        %v2820 = vadd.f32 0.0, %v2819
        %2821 = vmatmul.bf16.gmra.mxu0 %v2749
        %v2822 = vpop.f32.mrf.mxu0
        %v2823 = vadd.f32 0.0, %v2822
        %v2824 = vpop.f32.mrf.mxu0
        %v2825 = vadd.f32 0.0, %v2824
        %2826 = vmatmul.bf16.gmra.mxu0 %v2750
        %v2827 = vpop.f32.mrf.mxu0
        %v2828 = vadd.f32 0.0, %v2827
        %v2829 = vpop.f32.mrf.mxu0
        %v2830 = vadd.f32 0.0, %v2829
        %2831 = vdwg.mxu0
        %v2832 = vadd.f32 %v2698, %v2813
        %v2833 = vadd.f32 %v2699, %v2815
        %v2834 = vadd.f32 %v2700, %v2818
        %v2835 = vadd.f32 %v2701, %v2820
        %v2836 = vadd.f32 %v2702, %v2823
        %v2837 = vadd.f32 %v2703, %v2825
        %v2838 = vadd.f32 %v2704, %v2828
        %v2839 = vadd.f32 %v2705, %v2830
        %v2840 = vld [vmem:[%s1853] sm:$0xf]
        %v2841 = vld [vmem:[%s1853 + $0x4] sm:$0x1]
        %v2842 = vld [vmem:[%s1853 + $0x8] sm:$0xf]
        %v2843 = vld [vmem:[%s1853 + $0xc] sm:$0x1]
        %v2844 = vld [vmem:[%s1853 + $0x10] sm:$0xf]
        %v2845 = vld [vmem:[%s1853 + $0x14] sm:$0x1]
        %v2846 = vld [vmem:[%s1853 + $0x18] sm:$0xf]
        %v2847 = vld [vmem:[%s1853 + $0x1c] sm:$0x1]
        %v2848 = vld [vmem:[%s1853 + $0x20] sm:$0xf]
        %v2849 = vld [vmem:[%s1853 + $0x24] sm:$0x1]
        %v2850 = vld [vmem:[%s1853 + $0x28] sm:$0xf]
        %v2851 = vld [vmem:[%s1853 + $0x2c] sm:$0x1]
        %v2852 = vld [vmem:[%s1853 + $0x30] sm:$0xf]
        %v2853 = vld [vmem:[%s1853 + $0x34] sm:$0x1]
        %v2854 = vld [vmem:[%s1853 + $0x38] sm:$0xf]
        %v2855 = vld [vmem:[%s1853 + $0x3c] sm:$0x1]
        %v2857 = vshrl.u32 %v2840, 16
        %v2859 = vrot.slane %v2857, 4
        %v2860 = vshll.u32 %v2840, 16
        %v2862 = vrot.slane %v2860, 5
        %v2863 = vor.u32 %v2859, %v2862
        %v2864 = vrot.slane %v2863, 4
        %v2866 = vshll.u32 %v2841, 16
        %v2868 = vrot.slane %v2866, 5
        %v2869 = vsel %vm565, %v2864, %v2868
        %v2871 = vshrl.u32 %v2842, 16
        %v2873 = vrot.slane %v2871, 4
        %v2874 = vshll.u32 %v2842, 16
        %v2876 = vrot.slane %v2874, 5
        %v2877 = vor.u32 %v2873, %v2876
        %v2878 = vrot.slane %v2877, 4
        %v2880 = vshll.u32 %v2843, 16
        %v2882 = vrot.slane %v2880, 5
        %v2883 = vsel %vm565, %v2878, %v2882
        %v2885 = vshrl.u32 %v2844, 16
        %v2887 = vrot.slane %v2885, 4
        %v2888 = vshll.u32 %v2844, 16
        %v2890 = vrot.slane %v2888, 5
        %v2891 = vor.u32 %v2887, %v2890
        %v2892 = vrot.slane %v2891, 4
        %v2894 = vshll.u32 %v2845, 16
        %v2896 = vrot.slane %v2894, 5
        %v2897 = vsel %vm565, %v2892, %v2896
        %v2899 = vshrl.u32 %v2846, 16
        %v2901 = vrot.slane %v2899, 4
        %v2902 = vshll.u32 %v2846, 16
        %v2904 = vrot.slane %v2902, 5
        %v2905 = vor.u32 %v2901, %v2904
        %v2906 = vrot.slane %v2905, 4
        %v2908 = vshll.u32 %v2847, 16
        %v2910 = vrot.slane %v2908, 5
        %v2911 = vsel %vm565, %v2906, %v2910
        %v2913 = vshrl.u32 %v2848, 16
        %v2915 = vrot.slane %v2913, 4
        %v2916 = vshll.u32 %v2848, 16
        %v2918 = vrot.slane %v2916, 5
        %v2919 = vor.u32 %v2915, %v2918
        %v2920 = vrot.slane %v2919, 4
        %v2922 = vshll.u32 %v2849, 16
        %v2924 = vrot.slane %v2922, 5
        %v2925 = vsel %vm565, %v2920, %v2924
        %v2927 = vshrl.u32 %v2850, 16
        %v2929 = vrot.slane %v2927, 4
        %v2930 = vshll.u32 %v2850, 16
        %v2932 = vrot.slane %v2930, 5
        %v2933 = vor.u32 %v2929, %v2932
        %v2934 = vrot.slane %v2933, 4
        %v2936 = vshll.u32 %v2851, 16
        %v2938 = vrot.slane %v2936, 5
        %v2939 = vsel %vm565, %v2934, %v2938
        %v2941 = vshrl.u32 %v2852, 16
        %v2943 = vrot.slane %v2941, 4
        %v2944 = vshll.u32 %v2852, 16
        %v2946 = vrot.slane %v2944, 5
        %v2947 = vor.u32 %v2943, %v2946
        %v2948 = vrot.slane %v2947, 4
        %v2950 = vshll.u32 %v2853, 16
        %v2952 = vrot.slane %v2950, 5
        %v2953 = vsel %vm565, %v2948, %v2952
        %v2955 = vshrl.u32 %v2854, 16
        %v2957 = vrot.slane %v2955, 4
        %v2958 = vshll.u32 %v2854, 16
        %v2960 = vrot.slane %v2958, 5
        %v2961 = vor.u32 %v2957, %v2960
        %v2962 = vrot.slane %v2961, 4
        %v2964 = vshll.u32 %v2855, 16
        %v2966 = vrot.slane %v2964, 5
        %v2967 = vsel %vm565, %v2962, %v2966
        %s2968 = scalar_lea.vmem [#allocation3], 256
        %v2969 = vld [vmem:[%s2968] sm:$0xf]
        %v2970 = vld [vmem:[%s2968 + $0x4] sm:$0xf]
        %v2971 = vld [vmem:[%s2968 + $0x8] sm:$0xf]
        %v2972 = vld [vmem:[%s2968 + $0xc] sm:$0xf]
        %v2973 = vld [vmem:[%s2968 + $0x10] sm:$0xf]
        %v2974 = vld [vmem:[%s2968 + $0x14] sm:$0xf]
        %v2975 = vld [vmem:[%s2968 + $0x18] sm:$0xf]
        %v2976 = vld [vmem:[%s2968 + $0x1c] sm:$0xf]
        %v2977 = vld [vmem:[%s2968 + $0x20] sm:$0xf]
        %v2978 = vld [vmem:[%s2968 + $0x24] sm:$0xf]
        %v2979 = vld [vmem:[%s2968 + $0x28] sm:$0xf]
        %v2980 = vld [vmem:[%s2968 + $0x2c] sm:$0xf]
        %v2981 = vld [vmem:[%s2968 + $0x30] sm:$0xf]
        %v2982 = vld [vmem:[%s2968 + $0x34] sm:$0xf]
        %v2983 = vld [vmem:[%s2968 + $0x38] sm:$0xf]
        %v2984 = vld [vmem:[%s2968 + $0x3c] sm:$0xf]
        %v2985 = vunpack.c.l.b16 %v2869
        %v2986 = vunpack.c.l.b16 %v2883
        %v2987 = vunpack.c.l.b16 %v2897
        %v2988 = vunpack.c.l.b16 %v2911
        %v2989 = vunpack.c.l.b16 %v2925
        %v2990 = vunpack.c.l.b16 %v2939
        %v2991 = vunpack.c.l.b16 %v2953
        %v2992 = vunpack.c.l.b16 %v2967
        %v2993 = vpack.c.b16 %v2986, %v2985
        %v2994 = vpack.c.b16 %v2988, %v2987
        %v2995 = vpack.c.b16 %v2990, %v2989
        %v2996 = vpack.c.b16 %v2992, %v2991
        %v3017 = vunpack.c.l.b16 %v2969
        %v3018 = vunpack.c.l.b16 %v2970
        %v3019 = vunpack.c.l.b16 %v2971
        %v3020 = vunpack.c.l.b16 %v2972
        %v3021 = vunpack.c.l.b16 %v2973
        %v3022 = vunpack.c.l.b16 %v2974
        %v3023 = vunpack.c.l.b16 %v2975
        %v3024 = vunpack.c.l.b16 %v2976
        %v3025 = vunpack.c.l.b16 %v2977
        %v3026 = vunpack.c.l.b16 %v2978
        %v3027 = vunpack.c.l.b16 %v2979
        %v3028 = vunpack.c.l.b16 %v2980
        %v3029 = vunpack.c.l.b16 %v2981
        %v3030 = vunpack.c.l.b16 %v2982
        %v3031 = vunpack.c.l.b16 %v2983
        %v3032 = vunpack.c.l.b16 %v2984
        %v3033 = vpack.c.b16 %v3018, %v3017
        %v3034 = vpack.c.b16 %v3020, %v3019
        %v3035 = vpack.c.b16 %v3022, %v3021
        %v3036 = vpack.c.b16 %v3024, %v3023
        %v3037 = vpack.c.b16 %v3026, %v3025
        %v3038 = vpack.c.b16 %v3028, %v3027
        %v3039 = vpack.c.b16 %v3030, %v3029
        %v3040 = vpack.c.b16 %v3032, %v3031
        %3049 = vmatpush.bf16.msra.mxu0 %v3040
        %3050 = vmatpush.bf16.msra.mxu0 %v3039
        %3051 = vmatpush.bf16.msra.mxu0 %v3038
        %3052 = vmatpush.bf16.msra.mxu0 %v3037
        %3053 = vmatpush.bf16.msra.mxu0 %v3036
        %3054 = vmatpush.bf16.msra.mxu0 %v3035
        %3055 = vmatpush.bf16.msra.mxu0 %v3034
        %3056 = vmatpush.bf16.msra.mxu0 %v3033
        %3057 = vmatmul.bf16.gmra.mxu0 %v2993
        %v3058 = vpop.f32.mrf.mxu0
        %v3059 = vadd.f32 0.0, %v3058
        %v3060 = vpop.f32.mrf.mxu0
        %v3061 = vadd.f32 0.0, %v3060
        %3062 = vmatmul.bf16.gmra.mxu0 %v2994
        %v3063 = vpop.f32.mrf.mxu0
        %v3064 = vadd.f32 0.0, %v3063
        %v3065 = vpop.f32.mrf.mxu0
        %v3066 = vadd.f32 0.0, %v3065
        %3067 = vmatmul.bf16.gmra.mxu0 %v2995
        %v3068 = vpop.f32.mrf.mxu0
        %v3069 = vadd.f32 0.0, %v3068
        %v3070 = vpop.f32.mrf.mxu0
        %v3071 = vadd.f32 0.0, %v3070
        %3072 = vmatmul.bf16.gmra.mxu0 %v2996
        %v3073 = vpop.f32.mrf.mxu0
        %v3074 = vadd.f32 0.0, %v3073
        %v3075 = vpop.f32.mrf.mxu0
        %v3076 = vadd.f32 0.0, %v3075
        %3077 = vdwg.mxu0
        %v3078 = vadd.f32 %v2832, %v3059
        %v3079 = vadd.f32 %v2833, %v3061
        %v3080 = vadd.f32 %v2834, %v3064
        %v3081 = vadd.f32 %v2835, %v3066
        %v3082 = vadd.f32 %v2836, %v3069
        %v3083 = vadd.f32 %v2837, %v3071
        %v3084 = vadd.f32 %v2838, %v3074
        %v3085 = vadd.f32 %v2839, %v3076
        %v3086 = vld [vmem:[%s1853] sm:$0xe]
        %v3087 = vld [vmem:[%s1853 + $0x8] sm:$0xe]
        %v3088 = vld [vmem:[%s1853 + $0x10] sm:$0xe]
        %v3089 = vld [vmem:[%s1853 + $0x18] sm:$0xe]
        %v3090 = vld [vmem:[%s1853 + $0x20] sm:$0xe]
        %v3091 = vld [vmem:[%s1853 + $0x28] sm:$0xe]
        %v3092 = vld [vmem:[%s1853 + $0x30] sm:$0xe]
        %v3093 = vld [vmem:[%s1853 + $0x38] sm:$0xe]
        %v3110 = vrot.slane %v3086, 5
        %v3111 = vrot.slane %v3110, 4
        %v3112 = vrot.slane %v2841, 5
        %v3113 = vsel %vm2555, %v3111, %v3112
        %v3114 = vrot.slane %v3087, 5
        %v3115 = vrot.slane %v3114, 4
        %v3116 = vrot.slane %v2843, 5
        %v3117 = vsel %vm2555, %v3115, %v3116
        %v3118 = vrot.slane %v3088, 5
        %v3119 = vrot.slane %v3118, 4
        %v3120 = vrot.slane %v2845, 5
        %v3121 = vsel %vm2555, %v3119, %v3120
        %v3122 = vrot.slane %v3089, 5
        %v3123 = vrot.slane %v3122, 4
        %v3124 = vrot.slane %v2847, 5
        %v3125 = vsel %vm2555, %v3123, %v3124
        %v3126 = vrot.slane %v3090, 5
        %v3127 = vrot.slane %v3126, 4
        %v3128 = vrot.slane %v2849, 5
        %v3129 = vsel %vm2555, %v3127, %v3128
        %v3130 = vrot.slane %v3091, 5
        %v3131 = vrot.slane %v3130, 4
        %v3132 = vrot.slane %v2851, 5
        %v3133 = vsel %vm2555, %v3131, %v3132
        %v3134 = vrot.slane %v3092, 5
        %v3135 = vrot.slane %v3134, 4
        %v3136 = vrot.slane %v2853, 5
        %v3137 = vsel %vm2555, %v3135, %v3136
        %v3138 = vrot.slane %v3093, 5
        %v3139 = vrot.slane %v3138, 4
        %v3140 = vrot.slane %v2855, 5
        %v3141 = vsel %vm2555, %v3139, %v3140
        %s3142 = scalar_lea.vmem [#allocation3], 320
        %v3143 = vld [vmem:[%s3142] sm:$0xf]
        %v3144 = vld [vmem:[%s3142 + $0x4] sm:$0xf]
        %v3145 = vld [vmem:[%s3142 + $0x8] sm:$0xf]
        %v3146 = vld [vmem:[%s3142 + $0xc] sm:$0xf]
        %v3147 = vld [vmem:[%s3142 + $0x10] sm:$0xf]
        %v3148 = vld [vmem:[%s3142 + $0x14] sm:$0xf]
        %v3149 = vld [vmem:[%s3142 + $0x18] sm:$0xf]
        %v3150 = vld [vmem:[%s3142 + $0x1c] sm:$0xf]
        %v3151 = vld [vmem:[%s3142 + $0x20] sm:$0xf]
        %v3152 = vld [vmem:[%s3142 + $0x24] sm:$0xf]
        %v3153 = vld [vmem:[%s3142 + $0x28] sm:$0xf]
        %v3154 = vld [vmem:[%s3142 + $0x2c] sm:$0xf]
        %v3155 = vld [vmem:[%s3142 + $0x30] sm:$0xf]
        %v3156 = vld [vmem:[%s3142 + $0x34] sm:$0xf]
        %v3157 = vld [vmem:[%s3142 + $0x38] sm:$0xf]
        %v3158 = vld [vmem:[%s3142 + $0x3c] sm:$0xf]
        %v3159 = vunpack.c.l.b16 %v3113
        %v3160 = vunpack.c.l.b16 %v3117
        %v3161 = vunpack.c.l.b16 %v3121
        %v3162 = vunpack.c.l.b16 %v3125
        %v3163 = vunpack.c.l.b16 %v3129
        %v3164 = vunpack.c.l.b16 %v3133
        %v3165 = vunpack.c.l.b16 %v3137
        %v3166 = vunpack.c.l.b16 %v3141
        %v3167 = vpack.c.b16 %v3160, %v3159
        %v3168 = vpack.c.b16 %v3162, %v3161
        %v3169 = vpack.c.b16 %v3164, %v3163
        %v3170 = vpack.c.b16 %v3166, %v3165
        %v3191 = vunpack.c.l.b16 %v3143
        %v3192 = vunpack.c.l.b16 %v3144
        %v3193 = vunpack.c.l.b16 %v3145
        %v3194 = vunpack.c.l.b16 %v3146
        %v3195 = vunpack.c.l.b16 %v3147
        %v3196 = vunpack.c.l.b16 %v3148
        %v3197 = vunpack.c.l.b16 %v3149
        %v3198 = vunpack.c.l.b16 %v3150
        %v3199 = vunpack.c.l.b16 %v3151
        %v3200 = vunpack.c.l.b16 %v3152
        %v3201 = vunpack.c.l.b16 %v3153
        %v3202 = vunpack.c.l.b16 %v3154
        %v3203 = vunpack.c.l.b16 %v3155
        %v3204 = vunpack.c.l.b16 %v3156
        %v3205 = vunpack.c.l.b16 %v3157
        %v3206 = vunpack.c.l.b16 %v3158
        %v3207 = vpack.c.b16 %v3192, %v3191
        %v3208 = vpack.c.b16 %v3194, %v3193
        %v3209 = vpack.c.b16 %v3196, %v3195
        %v3210 = vpack.c.b16 %v3198, %v3197
        %v3211 = vpack.c.b16 %v3200, %v3199
        %v3212 = vpack.c.b16 %v3202, %v3201
        %v3213 = vpack.c.b16 %v3204, %v3203
        %v3214 = vpack.c.b16 %v3206, %v3205
        %3223 = vmatpush.bf16.msra.mxu0 %v3214
        %3224 = vmatpush.bf16.msra.mxu0 %v3213
        %3225 = vmatpush.bf16.msra.mxu0 %v3212
        %3226 = vmatpush.bf16.msra.mxu0 %v3211
        %3227 = vmatpush.bf16.msra.mxu0 %v3210
        %3228 = vmatpush.bf16.msra.mxu0 %v3209
        %3229 = vmatpush.bf16.msra.mxu0 %v3208
        %3230 = vmatpush.bf16.msra.mxu0 %v3207
        %3231 = vmatmul.bf16.gmra.mxu0 %v3167
        %v3232 = vpop.f32.mrf.mxu0
        %v3233 = vadd.f32 0.0, %v3232
        %v3234 = vpop.f32.mrf.mxu0
        %v3235 = vadd.f32 0.0, %v3234
        %3236 = vmatmul.bf16.gmra.mxu0 %v3168
        %v3237 = vpop.f32.mrf.mxu0
        %v3238 = vadd.f32 0.0, %v3237
        %v3239 = vpop.f32.mrf.mxu0
        %v3240 = vadd.f32 0.0, %v3239
        %3241 = vmatmul.bf16.gmra.mxu0 %v3169
        %v3242 = vpop.f32.mrf.mxu0
        %v3243 = vadd.f32 0.0, %v3242
        %v3244 = vpop.f32.mrf.mxu0
        %v3245 = vadd.f32 0.0, %v3244
        %3246 = vmatmul.bf16.gmra.mxu0 %v3170
        %v3247 = vpop.f32.mrf.mxu0
        %v3248 = vadd.f32 0.0, %v3247
        %v3249 = vpop.f32.mrf.mxu0
        %v3250 = vadd.f32 0.0, %v3249
        %3251 = vdwg.mxu0
        %v3252 = vadd.f32 %v3078, %v3233
        %v3253 = vadd.f32 %v3079, %v3235
        %v3254 = vadd.f32 %v3080, %v3238
        %v3255 = vadd.f32 %v3081, %v3240
        %v3256 = vadd.f32 %v3082, %v3243
        %v3257 = vadd.f32 %v3083, %v3245
        %v3258 = vadd.f32 %v3084, %v3248
        %v3259 = vadd.f32 %v3085, %v3250
        %s3260 = scalar_lea.vmem [#allocation2], 16
        %v3261 = vld [vmem:[%s3260] sm:$0xf]
        %v3262 = vld [vmem:[%s3260 + $0x8] sm:$0xf]
        %v3263 = vld [vmem:[%s3260 + $0x10] sm:$0xf]
        %v3264 = vld [vmem:[%s3260 + $0x18] sm:$0xf]
        %v3265 = vld [vmem:[%s3260 + $0x20] sm:$0xf]
        %v3266 = vld [vmem:[%s3260 + $0x28] sm:$0xf]
        %v3267 = vld [vmem:[%s3260 + $0x30] sm:$0xf]
        %v3268 = vld [vmem:[%s3260 + $0x38] sm:$0xf]
        %s3269 = scalar_lea.vmem [#allocation3], 384
        %v3270 = vld [vmem:[%s3269] sm:$0xf]
        %v3271 = vld [vmem:[%s3269 + $0x4] sm:$0xf]
        %v3272 = vld [vmem:[%s3269 + $0x8] sm:$0xf]
        %v3273 = vld [vmem:[%s3269 + $0xc] sm:$0xf]
        %v3274 = vld [vmem:[%s3269 + $0x10] sm:$0xf]
        %v3275 = vld [vmem:[%s3269 + $0x14] sm:$0xf]
        %v3276 = vld [vmem:[%s3269 + $0x18] sm:$0xf]
        %v3277 = vld [vmem:[%s3269 + $0x1c] sm:$0xf]
        %v3278 = vld [vmem:[%s3269 + $0x20] sm:$0xf]
        %v3279 = vld [vmem:[%s3269 + $0x24] sm:$0xf]
        %v3280 = vld [vmem:[%s3269 + $0x28] sm:$0xf]
        %v3281 = vld [vmem:[%s3269 + $0x2c] sm:$0xf]
        %v3282 = vld [vmem:[%s3269 + $0x30] sm:$0xf]
        %v3283 = vld [vmem:[%s3269 + $0x34] sm:$0xf]
        %v3284 = vld [vmem:[%s3269 + $0x38] sm:$0xf]
        %v3285 = vld [vmem:[%s3269 + $0x3c] sm:$0xf]
        %v3294 = vunpack.c.l.b16 %v3261
        %v3295 = vunpack.c.l.b16 %v3262
        %v3296 = vunpack.c.l.b16 %v3263
        %v3297 = vunpack.c.l.b16 %v3264
        %v3298 = vunpack.c.l.b16 %v3265
        %v3299 = vunpack.c.l.b16 %v3266
        %v3300 = vunpack.c.l.b16 %v3267
        %v3301 = vunpack.c.l.b16 %v3268
        %v3302 = vpack.c.b16 %v3295, %v3294
        %v3303 = vpack.c.b16 %v3297, %v3296
        %v3304 = vpack.c.b16 %v3299, %v3298
        %v3305 = vpack.c.b16 %v3301, %v3300
        %v3326 = vunpack.c.l.b16 %v3270
        %v3327 = vunpack.c.l.b16 %v3271
        %v3328 = vunpack.c.l.b16 %v3272
        %v3329 = vunpack.c.l.b16 %v3273
        %v3330 = vunpack.c.l.b16 %v3274
        %v3331 = vunpack.c.l.b16 %v3275
        %v3332 = vunpack.c.l.b16 %v3276
        %v3333 = vunpack.c.l.b16 %v3277
        %v3334 = vunpack.c.l.b16 %v3278
        %v3335 = vunpack.c.l.b16 %v3279
        %v3336 = vunpack.c.l.b16 %v3280
        %v3337 = vunpack.c.l.b16 %v3281
        %v3338 = vunpack.c.l.b16 %v3282
        %v3339 = vunpack.c.l.b16 %v3283
        %v3340 = vunpack.c.l.b16 %v3284
        %v3341 = vunpack.c.l.b16 %v3285
        %v3342 = vpack.c.b16 %v3327, %v3326
        %v3343 = vpack.c.b16 %v3329, %v3328
        %v3344 = vpack.c.b16 %v3331, %v3330
        %v3345 = vpack.c.b16 %v3333, %v3332
        %v3346 = vpack.c.b16 %v3335, %v3334
        %v3347 = vpack.c.b16 %v3337, %v3336
        %v3348 = vpack.c.b16 %v3339, %v3338
        %v3349 = vpack.c.b16 %v3341, %v3340
        %3358 = vmatpush.bf16.msra.mxu0 %v3349
        %3359 = vmatpush.bf16.msra.mxu0 %v3348
        %3360 = vmatpush.bf16.msra.mxu0 %v3347
        %3361 = vmatpush.bf16.msra.mxu0 %v3346
        %3362 = vmatpush.bf16.msra.mxu0 %v3345
        %3363 = vmatpush.bf16.msra.mxu0 %v3344
        %3364 = vmatpush.bf16.msra.mxu0 %v3343
        %3365 = vmatpush.bf16.msra.mxu0 %v3342
        %3366 = vmatmul.bf16.gmra.mxu0 %v3302
        %v3367 = vpop.f32.mrf.mxu0
        %v3368 = vadd.f32 0.0, %v3367
        %v3369 = vpop.f32.mrf.mxu0
        %v3370 = vadd.f32 0.0, %v3369
        %3371 = vmatmul.bf16.gmra.mxu0 %v3303
        %v3372 = vpop.f32.mrf.mxu0
        %v3373 = vadd.f32 0.0, %v3372
        %v3374 = vpop.f32.mrf.mxu0
        %v3375 = vadd.f32 0.0, %v3374
        %3376 = vmatmul.bf16.gmra.mxu0 %v3304
        %v3377 = vpop.f32.mrf.mxu0
        %v3378 = vadd.f32 0.0, %v3377
        %v3379 = vpop.f32.mrf.mxu0
        %v3380 = vadd.f32 0.0, %v3379
        %3381 = vmatmul.bf16.gmra.mxu0 %v3305
        %v3382 = vpop.f32.mrf.mxu0
        %v3383 = vadd.f32 0.0, %v3382
        %v3384 = vpop.f32.mrf.mxu0
        %v3385 = vadd.f32 0.0, %v3384
        %3386 = vdwg.mxu0
        %v3387 = vadd.f32 %v3252, %v3368
        %v3388 = vadd.f32 %v3253, %v3370
        %v3389 = vadd.f32 %v3254, %v3373
        %v3390 = vadd.f32 %v3255, %v3375
        %v3391 = vadd.f32 %v3256, %v3378
        %v3392 = vadd.f32 %v3257, %v3380
        %v3393 = vadd.f32 %v3258, %v3383
        %v3394 = vadd.f32 %v3259, %v3385
        %v3395 = vld [vmem:[%s3260] sm:$0xf]
        %v3396 = vld [vmem:[%s3260 + $0x4] sm:$0x1]
        %v3397 = vld [vmem:[%s3260 + $0x8] sm:$0xf]
        %v3398 = vld [vmem:[%s3260 + $0xc] sm:$0x1]
        %v3399 = vld [vmem:[%s3260 + $0x10] sm:$0xf]
        %v3400 = vld [vmem:[%s3260 + $0x14] sm:$0x1]
        %v3401 = vld [vmem:[%s3260 + $0x18] sm:$0xf]
        %v3402 = vld [vmem:[%s3260 + $0x1c] sm:$0x1]
        %v3403 = vld [vmem:[%s3260 + $0x20] sm:$0xf]
        %v3404 = vld [vmem:[%s3260 + $0x24] sm:$0x1]
        %v3405 = vld [vmem:[%s3260 + $0x28] sm:$0xf]
        %v3406 = vld [vmem:[%s3260 + $0x2c] sm:$0x1]
        %v3407 = vld [vmem:[%s3260 + $0x30] sm:$0xf]
        %v3408 = vld [vmem:[%s3260 + $0x34] sm:$0x1]
        %v3409 = vld [vmem:[%s3260 + $0x38] sm:$0xf]
        %v3410 = vld [vmem:[%s3260 + $0x3c] sm:$0x1]
        %v3412 = vshrl.u32 %v3395, 16
        %v3414 = vrot.slane %v3412, 4
        %v3415 = vshll.u32 %v3395, 16
        %v3417 = vrot.slane %v3415, 5
        %v3418 = vor.u32 %v3414, %v3417
        %v3419 = vrot.slane %v3418, 4
        %v3421 = vshll.u32 %v3396, 16
        %v3423 = vrot.slane %v3421, 5
        %v3424 = vsel %vm565, %v3419, %v3423
        %v3426 = vshrl.u32 %v3397, 16
        %v3428 = vrot.slane %v3426, 4
        %v3429 = vshll.u32 %v3397, 16
        %v3431 = vrot.slane %v3429, 5
        %v3432 = vor.u32 %v3428, %v3431
        %v3433 = vrot.slane %v3432, 4
        %v3435 = vshll.u32 %v3398, 16
        %v3437 = vrot.slane %v3435, 5
        %v3438 = vsel %vm565, %v3433, %v3437
        %v3440 = vshrl.u32 %v3399, 16
        %v3442 = vrot.slane %v3440, 4
        %v3443 = vshll.u32 %v3399, 16
        %v3445 = vrot.slane %v3443, 5
        %v3446 = vor.u32 %v3442, %v3445
        %v3447 = vrot.slane %v3446, 4
        %v3449 = vshll.u32 %v3400, 16
        %v3451 = vrot.slane %v3449, 5
        %v3452 = vsel %vm565, %v3447, %v3451
        %v3454 = vshrl.u32 %v3401, 16
        %v3456 = vrot.slane %v3454, 4
        %v3457 = vshll.u32 %v3401, 16
        %v3459 = vrot.slane %v3457, 5
        %v3460 = vor.u32 %v3456, %v3459
        %v3461 = vrot.slane %v3460, 4
        %v3463 = vshll.u32 %v3402, 16
        %v3465 = vrot.slane %v3463, 5
        %v3466 = vsel %vm565, %v3461, %v3465
        %v3468 = vshrl.u32 %v3403, 16
        %v3470 = vrot.slane %v3468, 4
        %v3471 = vshll.u32 %v3403, 16
        %v3473 = vrot.slane %v3471, 5
        %v3474 = vor.u32 %v3470, %v3473
        %v3475 = vrot.slane %v3474, 4
        %v3477 = vshll.u32 %v3404, 16
        %v3479 = vrot.slane %v3477, 5
        %v3480 = vsel %vm565, %v3475, %v3479
        %v3482 = vshrl.u32 %v3405, 16
        %v3484 = vrot.slane %v3482, 4
        %v3485 = vshll.u32 %v3405, 16
        %v3487 = vrot.slane %v3485, 5
        %v3488 = vor.u32 %v3484, %v3487
        %v3489 = vrot.slane %v3488, 4
        %v3491 = vshll.u32 %v3406, 16
        %v3493 = vrot.slane %v3491, 5
        %v3494 = vsel %vm565, %v3489, %v3493
        %v3496 = vshrl.u32 %v3407, 16
        %v3498 = vrot.slane %v3496, 4
        %v3499 = vshll.u32 %v3407, 16
        %v3501 = vrot.slane %v3499, 5
        %v3502 = vor.u32 %v3498, %v3501
        %v3503 = vrot.slane %v3502, 4
        %v3505 = vshll.u32 %v3408, 16
        %v3507 = vrot.slane %v3505, 5
        %v3508 = vsel %vm565, %v3503, %v3507
        %v3510 = vshrl.u32 %v3409, 16
        %v3512 = vrot.slane %v3510, 4
        %v3513 = vshll.u32 %v3409, 16
        %v3515 = vrot.slane %v3513, 5
        %v3516 = vor.u32 %v3512, %v3515
        %v3517 = vrot.slane %v3516, 4
        %v3519 = vshll.u32 %v3410, 16
        %v3521 = vrot.slane %v3519, 5
        %v3522 = vsel %vm565, %v3517, %v3521
        %s3523 = scalar_lea.vmem [#allocation3], 448
        %v3524 = vld [vmem:[%s3523] sm:$0xf]
        %v3525 = vld [vmem:[%s3523 + $0x4] sm:$0xf]
        %v3526 = vld [vmem:[%s3523 + $0x8] sm:$0xf]
        %v3527 = vld [vmem:[%s3523 + $0xc] sm:$0xf]
        %v3528 = vld [vmem:[%s3523 + $0x10] sm:$0xf]
        %v3529 = vld [vmem:[%s3523 + $0x14] sm:$0xf]
        %v3530 = vld [vmem:[%s3523 + $0x18] sm:$0xf]
        %v3531 = vld [vmem:[%s3523 + $0x1c] sm:$0xf]
        %v3532 = vld [vmem:[%s3523 + $0x20] sm:$0xf]
        %v3533 = vld [vmem:[%s3523 + $0x24] sm:$0xf]
        %v3534 = vld [vmem:[%s3523 + $0x28] sm:$0xf]
        %v3535 = vld [vmem:[%s3523 + $0x2c] sm:$0xf]
        %v3536 = vld [vmem:[%s3523 + $0x30] sm:$0xf]
        %v3537 = vld [vmem:[%s3523 + $0x34] sm:$0xf]
        %v3538 = vld [vmem:[%s3523 + $0x38] sm:$0xf]
        %v3539 = vld [vmem:[%s3523 + $0x3c] sm:$0xf]
        %v3540 = vunpack.c.l.b16 %v3424
        %v3541 = vunpack.c.l.b16 %v3438
        %v3542 = vunpack.c.l.b16 %v3452
        %v3543 = vunpack.c.l.b16 %v3466
        %v3544 = vunpack.c.l.b16 %v3480
        %v3545 = vunpack.c.l.b16 %v3494
        %v3546 = vunpack.c.l.b16 %v3508
        %v3547 = vunpack.c.l.b16 %v3522
        %v3548 = vpack.c.b16 %v3541, %v3540
        %v3549 = vpack.c.b16 %v3543, %v3542
        %v3550 = vpack.c.b16 %v3545, %v3544
        %v3551 = vpack.c.b16 %v3547, %v3546
        %v3572 = vunpack.c.l.b16 %v3524
        %v3573 = vunpack.c.l.b16 %v3525
        %v3574 = vunpack.c.l.b16 %v3526
        %v3575 = vunpack.c.l.b16 %v3527
        %v3576 = vunpack.c.l.b16 %v3528
        %v3577 = vunpack.c.l.b16 %v3529
        %v3578 = vunpack.c.l.b16 %v3530
        %v3579 = vunpack.c.l.b16 %v3531
        %v3580 = vunpack.c.l.b16 %v3532
        %v3581 = vunpack.c.l.b16 %v3533
        %v3582 = vunpack.c.l.b16 %v3534
        %v3583 = vunpack.c.l.b16 %v3535
        %v3584 = vunpack.c.l.b16 %v3536
        %v3585 = vunpack.c.l.b16 %v3537
        %v3586 = vunpack.c.l.b16 %v3538
        %v3587 = vunpack.c.l.b16 %v3539
        %v3588 = vpack.c.b16 %v3573, %v3572
        %v3589 = vpack.c.b16 %v3575, %v3574
        %v3590 = vpack.c.b16 %v3577, %v3576
        %v3591 = vpack.c.b16 %v3579, %v3578
        %v3592 = vpack.c.b16 %v3581, %v3580
        %v3593 = vpack.c.b16 %v3583, %v3582
        %v3594 = vpack.c.b16 %v3585, %v3584
        %v3595 = vpack.c.b16 %v3587, %v3586
        %3604 = vmatpush.bf16.msra.mxu0 %v3595
        %3605 = vmatpush.bf16.msra.mxu0 %v3594
        %3606 = vmatpush.bf16.msra.mxu0 %v3593
        %3607 = vmatpush.bf16.msra.mxu0 %v3592
        %3608 = vmatpush.bf16.msra.mxu0 %v3591
        %3609 = vmatpush.bf16.msra.mxu0 %v3590
        %3610 = vmatpush.bf16.msra.mxu0 %v3589
        %3611 = vmatpush.bf16.msra.mxu0 %v3588
        %3612 = vmatmul.bf16.gmra.mxu0 %v3548
        %v3613 = vpop.f32.mrf.mxu0
        %v3614 = vadd.f32 0.0, %v3613
        %v3615 = vpop.f32.mrf.mxu0
        %v3616 = vadd.f32 0.0, %v3615
        %3617 = vmatmul.bf16.gmra.mxu0 %v3549
        %v3618 = vpop.f32.mrf.mxu0
        %v3619 = vadd.f32 0.0, %v3618
        %v3620 = vpop.f32.mrf.mxu0
        %v3621 = vadd.f32 0.0, %v3620
        %3622 = vmatmul.bf16.gmra.mxu0 %v3550
        %v3623 = vpop.f32.mrf.mxu0
        %v3624 = vadd.f32 0.0, %v3623
        %v3625 = vpop.f32.mrf.mxu0
        %v3626 = vadd.f32 0.0, %v3625
        %3627 = vmatmul.bf16.gmra.mxu0 %v3551
        %v3628 = vpop.f32.mrf.mxu0
        %v3629 = vadd.f32 0.0, %v3628
        %v3630 = vpop.f32.mrf.mxu0
        %v3631 = vadd.f32 0.0, %v3630
        %3632 = vdwg.mxu0
        %v3633 = vadd.f32 %v3387, %v3614
        %v3634 = vadd.f32 %v3388, %v3616
        %v3635 = vadd.f32 %v3389, %v3619
        %v3636 = vadd.f32 %v3390, %v3621
        %v3637 = vadd.f32 %v3391, %v3624
        %v3638 = vadd.f32 %v3392, %v3626
        %v3639 = vadd.f32 %v3393, %v3629
        %v3640 = vadd.f32 %v3394, %v3631
        %v3641 = vld [vmem:[%s3260] sm:$0xe]
        %v3642 = vld [vmem:[%s3260 + $0x8] sm:$0xe]
        %v3643 = vld [vmem:[%s3260 + $0x10] sm:$0xe]
        %v3644 = vld [vmem:[%s3260 + $0x18] sm:$0xe]
        %v3645 = vld [vmem:[%s3260 + $0x20] sm:$0xe]
        %v3646 = vld [vmem:[%s3260 + $0x28] sm:$0xe]
        %v3647 = vld [vmem:[%s3260 + $0x30] sm:$0xe]
        %v3648 = vld [vmem:[%s3260 + $0x38] sm:$0xe]
        %v3665 = vrot.slane %v3641, 5
        %v3666 = vrot.slane %v3665, 4
        %v3667 = vrot.slane %v3396, 5
        %v3668 = vsel %vm2555, %v3666, %v3667
        %v3669 = vrot.slane %v3642, 5
        %v3670 = vrot.slane %v3669, 4
        %v3671 = vrot.slane %v3398, 5
        %v3672 = vsel %vm2555, %v3670, %v3671
        %v3673 = vrot.slane %v3643, 5
        %v3674 = vrot.slane %v3673, 4
        %v3675 = vrot.slane %v3400, 5
        %v3676 = vsel %vm2555, %v3674, %v3675
        %v3677 = vrot.slane %v3644, 5
        %v3678 = vrot.slane %v3677, 4
        %v3679 = vrot.slane %v3402, 5
        %v3680 = vsel %vm2555, %v3678, %v3679
        %v3681 = vrot.slane %v3645, 5
        %v3682 = vrot.slane %v3681, 4
        %v3683 = vrot.slane %v3404, 5
        %v3684 = vsel %vm2555, %v3682, %v3683
        %v3685 = vrot.slane %v3646, 5
        %v3686 = vrot.slane %v3685, 4
        %v3687 = vrot.slane %v3406, 5
        %v3688 = vsel %vm2555, %v3686, %v3687
        %v3689 = vrot.slane %v3647, 5
        %v3690 = vrot.slane %v3689, 4
        %v3691 = vrot.slane %v3408, 5
        %v3692 = vsel %vm2555, %v3690, %v3691
        %v3693 = vrot.slane %v3648, 5
        %v3694 = vrot.slane %v3693, 4
        %v3695 = vrot.slane %v3410, 5
        %v3696 = vsel %vm2555, %v3694, %v3695
        %s3697 = scalar_lea.vmem [#allocation3], 512
        %v3698 = vld [vmem:[%s3697] sm:$0xf]
        %v3699 = vld [vmem:[%s3697 + $0x4] sm:$0xf]
        %v3700 = vld [vmem:[%s3697 + $0x8] sm:$0xf]
        %v3701 = vld [vmem:[%s3697 + $0xc] sm:$0xf]
        %v3702 = vld [vmem:[%s3697 + $0x10] sm:$0xf]
        %v3703 = vld [vmem:[%s3697 + $0x14] sm:$0xf]
        %v3704 = vld [vmem:[%s3697 + $0x18] sm:$0xf]
        %v3705 = vld [vmem:[%s3697 + $0x1c] sm:$0xf]
        %v3706 = vld [vmem:[%s3697 + $0x20] sm:$0xf]
        %v3707 = vld [vmem:[%s3697 + $0x24] sm:$0xf]
        %v3708 = vld [vmem:[%s3697 + $0x28] sm:$0xf]
        %v3709 = vld [vmem:[%s3697 + $0x2c] sm:$0xf]
        %v3710 = vld [vmem:[%s3697 + $0x30] sm:$0xf]
        %v3711 = vld [vmem:[%s3697 + $0x34] sm:$0xf]
        %v3712 = vld [vmem:[%s3697 + $0x38] sm:$0xf]
        %v3713 = vld [vmem:[%s3697 + $0x3c] sm:$0xf]
        %v3714 = vunpack.c.l.b16 %v3668
        %v3715 = vunpack.c.l.b16 %v3672
        %v3716 = vunpack.c.l.b16 %v3676
        %v3717 = vunpack.c.l.b16 %v3680
        %v3718 = vunpack.c.l.b16 %v3684
        %v3719 = vunpack.c.l.b16 %v3688
        %v3720 = vunpack.c.l.b16 %v3692
        %v3721 = vunpack.c.l.b16 %v3696
        %v3722 = vpack.c.b16 %v3715, %v3714
        %v3723 = vpack.c.b16 %v3717, %v3716
        %v3724 = vpack.c.b16 %v3719, %v3718
        %v3725 = vpack.c.b16 %v3721, %v3720
        %v3746 = vunpack.c.l.b16 %v3698
        %v3747 = vunpack.c.l.b16 %v3699
        %v3748 = vunpack.c.l.b16 %v3700
        %v3749 = vunpack.c.l.b16 %v3701
        %v3750 = vunpack.c.l.b16 %v3702
        %v3751 = vunpack.c.l.b16 %v3703
        %v3752 = vunpack.c.l.b16 %v3704
        %v3753 = vunpack.c.l.b16 %v3705
        %v3754 = vunpack.c.l.b16 %v3706
        %v3755 = vunpack.c.l.b16 %v3707
        %v3756 = vunpack.c.l.b16 %v3708
        %v3757 = vunpack.c.l.b16 %v3709
        %v3758 = vunpack.c.l.b16 %v3710
        %v3759 = vunpack.c.l.b16 %v3711
        %v3760 = vunpack.c.l.b16 %v3712
        %v3761 = vunpack.c.l.b16 %v3713
        %v3762 = vpack.c.b16 %v3747, %v3746
        %v3763 = vpack.c.b16 %v3749, %v3748
        %v3764 = vpack.c.b16 %v3751, %v3750
        %v3765 = vpack.c.b16 %v3753, %v3752
        %v3766 = vpack.c.b16 %v3755, %v3754
        %v3767 = vpack.c.b16 %v3757, %v3756
        %v3768 = vpack.c.b16 %v3759, %v3758
        %v3769 = vpack.c.b16 %v3761, %v3760
        %3778 = vmatpush.bf16.msra.mxu0 %v3769
        %3779 = vmatpush.bf16.msra.mxu0 %v3768
        %3780 = vmatpush.bf16.msra.mxu0 %v3767
        %3781 = vmatpush.bf16.msra.mxu0 %v3766
        %3782 = vmatpush.bf16.msra.mxu0 %v3765
        %3783 = vmatpush.bf16.msra.mxu0 %v3764
        %3784 = vmatpush.bf16.msra.mxu0 %v3763
        %3785 = vmatpush.bf16.msra.mxu0 %v3762
        %3786 = vmatmul.bf16.gmra.mxu0 %v3722
        %v3787 = vpop.f32.mrf.mxu0
        %v3788 = vadd.f32 0.0, %v3787
        %v3789 = vpop.f32.mrf.mxu0
        %v3790 = vadd.f32 0.0, %v3789
        %3791 = vmatmul.bf16.gmra.mxu0 %v3723
        %v3792 = vpop.f32.mrf.mxu0
        %v3793 = vadd.f32 0.0, %v3792
        %v3794 = vpop.f32.mrf.mxu0
        %v3795 = vadd.f32 0.0, %v3794
        %3796 = vmatmul.bf16.gmra.mxu0 %v3724
        %v3797 = vpop.f32.mrf.mxu0
        %v3798 = vadd.f32 0.0, %v3797
        %v3799 = vpop.f32.mrf.mxu0
        %v3800 = vadd.f32 0.0, %v3799
        %3801 = vmatmul.bf16.gmra.mxu0 %v3725
        %v3802 = vpop.f32.mrf.mxu0
        %v3803 = vadd.f32 0.0, %v3802
        %v3804 = vpop.f32.mrf.mxu0
        %v3805 = vadd.f32 0.0, %v3804
        %3806 = vdwg.mxu0
        %v3807 = vadd.f32 %v3633, %v3788
        %v3808 = vadd.f32 %v3634, %v3790
        %v3809 = vadd.f32 %v3635, %v3793
        %v3810 = vadd.f32 %v3636, %v3795
        %v3811 = vadd.f32 %v3637, %v3798
        %v3812 = vadd.f32 %v3638, %v3800
        %v3813 = vadd.f32 %v3639, %v3803
        %v3814 = vadd.f32 %v3640, %v3805
        %v3815 = vld [vmem:[%s4] sm:$0x1]
        %v3817 = vperm.slane %v3815, 0
        %v3819 = vadd.f32 %v3807, %v3817
        %v3820 = vadd.f32 %v3808, %v3817
        %v3821 = vadd.f32 %v3809, %v3817
        %v3822 = vadd.f32 %v3810, %v3817
        %v3823 = vadd.f32 %v3811, %v3817
        %v3824 = vadd.f32 %v3812, %v3817
        %v3825 = vadd.f32 %v3813, %v3817
        %v3826 = vadd.f32 %v3814, %v3817
        %v3827 = vadd.f32 %v3819, %v2155
        %v3828 = vadd.f32 %v3820, %v2157
        %v3829 = vadd.f32 %v3821, %v2160
        %v3830 = vadd.f32 %v3822, %v2162
        %v3831 = vadd.f32 %v3823, %v2165
        %v3832 = vadd.f32 %v3824, %v2167
        %v3833 = vadd.f32 %v3825, %v2170
        %v3834 = vadd.f32 %v3826, %v2172
        %v3835 = vmax.f32 %v3827, 0.0
        %v3836 = vmax.f32 %v3828, 0.0
        %v3837 = vmax.f32 %v3829, 0.0
        %v3838 = vmax.f32 %v3830, 0.0
        %v3839 = vmax.f32 %v3831, 0.0
        %v3840 = vmax.f32 %v3832, 0.0
        %v3841 = vmax.f32 %v3833, 0.0
        %v3842 = vmax.f32 %v3834, 0.0
        %v3843 = vpack.c.bf16 %v3835, %v3835
        %v3844 = vpack.c.bf16 %v3836, %v3836
        %v3845 = vpack.c.bf16 %v3837, %v3837
        %v3846 = vpack.c.bf16 %v3838, %v3838
        %v3847 = vpack.c.bf16 %v3839, %v3839
        %v3848 = vpack.c.bf16 %v3840, %v3840
        %v3849 = vpack.c.bf16 %v3841, %v3841
        %v3850 = vpack.c.bf16 %v3842, %v3842
        %3851 = vst [vmem:[%s288] sm:$0xf] %v3843
        %3852 = vst [vmem:[%s288 + $0x4] sm:$0xf] %v3844
        %3853 = vst [vmem:[%s288 + $0x8] sm:$0xf] %v3845
        %3854 = vst [vmem:[%s288 + $0xc] sm:$0xf] %v3846
        %3855 = vst [vmem:[%s288 + $0x10] sm:$0xf] %v3847
        %3856 = vst [vmem:[%s288 + $0x14] sm:$0xf] %v3848
        %3857 = vst [vmem:[%s288 + $0x18] sm:$0xf] %v3849
        %3858 = vst [vmem:[%s288 + $0x1c] sm:$0xf] %v3850
        %s3859 = sand.u32 %s182, 1
        %s3860 = scalar_lea.sflag [#allocation5], %s3859
        %s3861 = sand.u32 %s182, 1
        %s3862 = smul.addr %s3861, 32
        %s3863 = scalar_lea.vmem [#allocation6], %s3862
        // Predicated region
        $region53: #{tpu_custom_call.1} parent=47 // pred_check
          %p3864 = pneg %p192
        $region54: #{tpu_custom_call.1} parent=47 // pred_check_branch
          %3866 = sbr.rel (%p3864) target = $region56
        $region55: #{tpu_custom_call.1} parent=47 // pred_region
          %3868 = vsyncadd %s3860, 0
          %s3869 = smul.addr %s22, 8
          %s3870 = smul.addr %s3869, 4
          %s3871 = scalar_lea.hbm %s7, %s3870
          %s3872 = sshll.u32 %s3863, 4
          %s3873 = int_to_ptr.vmem [resolvable:$true] %s3872
          %s3874 = sshll.u32 %s3871, 4
          %s3875 = int_to_ptr.hbm [resolvable:$true] %s3874
          %3880 = dma.vmem_to_hbm [thread:$0]  %s3873, 512, %s3875, %s3860, 64, 64, 4
        $region56: #{tpu_custom_call.1} parent=47 // pred_fallthru
          _
      $region48: #{tpu_custom_call.1} parent=5 // pred_fallthru
        _
      %p3881 = scmp.le.s32.totalorder 2, %s17
      // Predicated region
      $region57: #{tpu_custom_call.1} parent=5 // pred_check
        %p3882 = pneg %p3881
      $region58: #{tpu_custom_call.1} parent=5 // pred_check_branch
        %3884 = sbr.rel (%p3882) target = $region60
      $region59: #{tpu_custom_call.1} parent=5 // pred_region
        %s3885 = ssub.s32 %s17, 2
        // Predicated region
        $region61: #{tpu_custom_call.1} parent=59 // pred_check
          %p3886 = pneg %p198
        $region62: #{tpu_custom_call.1} parent=59 // pred_check_branch
          %3888 = sbr.rel (%p3886) target = $region64
        $region63: #{tpu_custom_call.1} parent=59 // pred_region
          %s3889 = sand.u32 %s183, 1
          %s3890 = scalar_lea.sflag [#allocation5], %s3889
          %s3891 = sand.u32 %s183, 1
          %s3892 = smul.addr %s3891, 32
          %s3893 = scalar_lea.vmem [#allocation6], %s3892
          %3895 = dma.done %s3890, 512
        $region64: #{tpu_custom_call.1} parent=59 // pred_fallthru
          _
      $region60: #{tpu_custom_call.1} parent=5 // pred_fallthru
        _
    $region6: #{tpu_custom_call.1} parent=1 // loop_footer
      %s21 = sadd.s32 1, %s17
    $region7: #{tpu_custom_call.1} parent=1 // loop_footer_branch
      %16 = sbr.rel target = $region3
    $region8: #{tpu_custom_call.1} parent=1 // loop_exit
      _
    %3896 = vsyncpa [#allocation4], 1
    %s3897 = scalar_lea.sflag [#allocation4], 1
    %3898 = vsyncpa %s3897, 1
    %3899 = vsyncpa [#allocation5], 1
    %s3900 = scalar_lea.sflag [#allocation5], 1
    %3901 = vsyncpa %s3900, 1

</llo_original>
